<compile_context>
chip_gen: v7x
topology: tpu7x:2x2x1
jax: 0.10.0
libtpu: 0.0.40
codegen_flags: <defaults>
</compile_context>

<pallas_src>
import functools

import numpy as np
import jax
import jax.numpy as jnp
from jax.experimental import pallas as pl
from jax.experimental.pallas import tpu as pltpu


# -----------------------------------------------------------------------------
# In-kernel 3x3 "same" conv on a channels-first, spatially-flattened tile.
#   x      : (Cin, P) f32, P = H*W on the lane axis
#   w_taps : (9, Cout, Cin), tap index = (dy+1)*3 + (dx+1)  (== ky*3 + kx)
#   b      : (Cout, 1)
#   masks  : (top, bot, left, right) bool (1, P) -- "source pixel one row up /
#            down / one col left / right exists" (zero padding of Conv2d(pad=1))
# The +-W (row) rolls are computed once and shared by the three dx taps, which
# only need cheap +-1 lane rotates.  No im2col buffer is materialized: 9 partial
# MXU dots are accumulated in f32.
# -----------------------------------------------------------------------------
def _conv3x3(x, w_taps, b, masks, img_w, relu):
    top, bot, left, right = masks
    cin = x.shape[0]
    rows = (
        jnp.where(top, jnp.roll(x, img_w, axis=1), 0.0),    # source row y-1
        x,                                                  # source row y
        jnp.where(bot, jnp.roll(x, -img_w, axis=1), 0.0),   # source row y+1
    )
    acc = None
    for ry, row in enumerate(rows):
        taps = (
            jnp.where(left, jnp.roll(row, 1, axis=1), 0.0),   # source col x-1
            row,                                              # source col x
            jnp.where(right, jnp.roll(row, -1, axis=1), 0.0), # source col x+1
        )
        for rx, t in enumerate(taps):
            wk = w_taps[ry * 3 + rx]                          # (Cout, Cin)
            if cin == 1:
                part = wk * t                                 # VPU outer product
            else:
                part = jnp.dot(wk, t, preferred_element_type=jnp.float32)
            acc = part if acc is None else acc + part
    acc = acc + b
    if relu:
        acc = jnp.maximum(acc, 0.0)
    return acc


# -----------------------------------------------------------------------------
# Fully fused trunk kernel.  grid = (batch, num_blocks); the activation and the
# global residual live in VMEM scratch across the block axis.
#   j == 0        : conv_first, stash global residual
#   every j       : residual block j (4F intermediate stays a VMEM value)
#   j == NB - 1   : global skip, upsample conv, shuffle-fused conv_last, store
# -----------------------------------------------------------------------------
def _make_trunk_kernel(H, W):
    P = H * W

    def kernel(cols_ref, x_ref, wf_ref, bf_ref, w1_ref, b1_ref, w2_ref, b2_ref,
               wu_ref, bu_ref, wl_ref, bl_ref, o_ref, act_ref, glob_ref):
        j = pl.program_id(1)
        last = pl.num_programs(1) - 1

        # Boundary masks, computed once per grid step, shared by every conv.
        cols = cols_ref[...]
        pos = jax.lax.broadcasted_iota(jnp.int32, (1, P), 1)
        masks = (pos >= W,                 # row above exists
                 pos < (H - 1) * W,        # row below exists
                 cols >= 1,                # col left exists
                 cols <= W - 2)            # col right exists

        @pl.when(j == 0)
        def _():
            a = _conv3x3(x_ref[0], wf_ref[...], bf_ref[...], masks, W, relu=False)
            act_ref[...] = a
            glob_ref[...] = a              # global residual

        # Residual block j: x + conv2(relu(conv1(x)))
        xa = act_ref[...]
        h = _conv3x3(xa, w1_ref[0], b1_ref[0], masks, W, relu=True)
        y = _conv3x3(h, w2_ref[0], b2_ref[0], masks, W, relu=False) + xa
        act_ref[...] = y

        @pl.when(j == last)
        def _():
            a = y + glob_ref[...]                                       # global skip
            up = _conv3x3(a, wu_ref[...], bu_ref[...], masks, W, relu=False)
            out = _conv3x3(up, wl_ref[...], bl_ref[...], masks, W, relu=False)
            o_ref[0] = out.astype(o_ref.dtype)                          # (r^2, P)

    return kernel


@functools.lru_cache(maxsize=None)
def _vmem_limit_bytes():
    """~3/4 of physical VMEM: ~96 MiB on v5e/v6e (128 MiB), ~48 MiB on v7x (64 MiB)."""
    try:
        cap = int(pltpu.get_tpu_info().vmem_capacity_bytes)
    except Exception:
        cap = 64 * 1024 * 1024
    return max(32 * 1024 * 1024, min(cap * 3 // 4, 112 * 1024 * 1024))


# -----------------------------------------------------------------------------
# Parameter initialization (PyTorch layout) and one-time preparation.
# -----------------------------------------------------------------------------
def init_wdsr_params(key, num_residual_blocks, num_features, scale_factor):
    def conv_params(key, cin, cout):
        kw, kb = jax.random.split(key)
        w = 0.05 * jax.random.normal(kw, (cout, cin, 3, 3), jnp.float32)
        b = 0.05 * jax.random.normal(kb, (cout,), jnp.float32)
        return w, b

    keys = jax.random.split(key, 3 + 2 * num_residual_blocks)
    F = num_features
    params = {
        "first": conv_params(keys[0], 1, F),
        "blocks": [],
        "up": conv_params(keys[1], F, F * scale_factor ** 2),
        "last": conv_params(keys[2], F, 1),
    }
    for i in range(num_residual_blocks):
        w1, b1 = conv_params(keys[3 + 2 * i], F, 4 * F)
        w2, b2 = conv_params(keys[4 + 2 * i], 4 * F, F)
        params["blocks"].append((w1, b1, w2, b2))
    return params


def _flatten_conv(w, b):
    # torch (Cout, Cin, 3, 3) -> per-tap (9, Cout, Cin), tap = ky*3 + kx
    cout, cin = w.shape[0], w.shape[1]
    w_taps = jnp.transpose(w, (2, 3, 0, 1)).reshape(9, cout, cin)
    return jnp.asarray(w_taps, jnp.float32), jnp.asarray(b, jnp.float32).reshape(cout, 1)


def _fuse_shuffle_conv_last(w_last, b_last, r):
    """Repack conv_last so it runs BEFORE PixelShuffle (sub-pixel conv identity).

    conv_last(PixelShuffle_r(u)) == PixelShuffle_r(conv'(u)) where conv' is a 3x3
    zero-padded conv over the pre-shuffle channels (c = f*r^2 + ii*r + jj) with
    r^2 output phases.  Returns weights (9, r^2, F*r^2) and bias (r^2, 1).
    """
    F_ = w_last.shape[1]
    wl = np.asarray(w_last, np.float32)                     # (1, F, 3, 3)
    w = np.zeros((9, r * r, F_ * r * r), np.float32)
    f_base = np.arange(F_) * r * r
    for i in range(r):
        for j in range(r):
            for dy in (-1, 0, 1):
                for dx in (-1, 0, 1):
                    for ii in range(r):
                        for jj in range(r):
                            ky = dy * r + ii - i + 1
                            kx = dx * r + jj - j + 1
                            if 0 <= ky <= 2 and 0 <= kx <= 2:
                                tap = (dy + 1) * 3 + (dx + 1)
                                w[tap, i * r + j, f_base + ii * r + jj] = wl[0, :, ky, kx]
    b = np.full((r * r, 1), float(np.asarray(b_last).reshape(-1)[0]), np.float32)
    return jnp.asarray(w), jnp.asarray(b)


def prepare_wdsr_params(params, scale_factor):
    """One-time weight preparation (flatten / stack / sub-pixel repack)."""
    F = params["first"][0].shape[0]
    blocks = params["blocks"]
    if not blocks:
        # Zero-weight block is an exact identity: x + conv2(relu(conv1(x))) == x.
        blocks = [(jnp.zeros((4 * F, F, 3, 3), jnp.float32),
                   jnp.zeros((4 * F,), jnp.float32),
                   jnp.zeros((F, 4 * F, 3, 3), jnp.float32),
                   jnp.zeros((F,), jnp.float32))]
    w1s, b1s, w2s, b2s = [], [], [], []
    for (w1, b1, w2, b2) in blocks:
        wt, bt = _flatten_conv(w1, b1); w1s.append(wt); b1s.append(bt)
        wt, bt = _flatten_conv(w2, b2); w2s.append(wt); b2s.append(bt)
    wf, bf = _flatten_conv(*params["first"])
    wu, bu = _flatten_conv(*params["up"])
    wl, bl = _fuse_shuffle_conv_last(*params["last"], scale_factor)
    return {"wf": wf, "bf": bf,
            "w1": jnp.stack(w1s), "b1": jnp.stack(b1s),
            "w2": jnp.stack(w2s), "b2": jnp.stack(b2s),
            "wu": wu, "bu": bu, "wl": wl, "bl": bl}


# -----------------------------------------------------------------------------
# Full WDSR forward (NCHW in, NCHW out -- matches the PyTorch module).
# -----------------------------------------------------------------------------
def wdsr_forward(x_nchw, p, scale_factor):
    N, cin, H, W = x_nchw.shape
    assert cin == 1
    r = scale_factor
    r2 = r * r
    F = p["wf"].shape[1]
    C_up = F * r2
    NB = p["w1"].shape[0]
    P = H * W                      # lane axis; multiple of 128 avoids masked stores

    x = x_nchw.astype(jnp.float32).reshape(N, 1, P)
    cols = (jnp.arange(P, dtype=jnp.int32) % W).reshape(1, P)

    out_pre = pl.pallas_call(
        _make_trunk_kernel(H, W),
        out_shape=jax.ShapeDtypeStruct((N, r2, P), jnp.float32),
        grid=(N, NB),
        in_specs=[
            pl.BlockSpec((1, P), lambda n, j: (0, 0)),                   # col ids
            pl.BlockSpec((1, 1, P), lambda n, j: (n, 0, 0)),             # input image
            pl.BlockSpec((9, F, 1), lambda n, j: (0, 0, 0)),             # conv_first W
            pl.BlockSpec((F, 1), lambda n, j: (0, 0)),                   # conv_first b
            pl.BlockSpec((1, 9, 4 * F, F), lambda n, j: (j, 0, 0, 0)),   # block conv1 W
            pl.BlockSpec((1, 4 * F, 1), lambda n, j: (j, 0, 0)),         # block conv1 b
            pl.BlockSpec((1, 9, F, 4 * F), lambda n, j: (j, 0, 0, 0)),   # block conv2 W
            pl.BlockSpec((1, F, 1), lambda n, j: (j, 0, 0)),             # block conv2 b
            pl.BlockSpec((9, C_up, F), lambda n, j: (0, 0, 0)),          # upsample W
            pl.BlockSpec((C_up, 1), lambda n, j: (0, 0)),                # upsample b
            pl.BlockSpec((9, r2, C_up), lambda n, j: (0, 0, 0)),         # fused last W
            pl.BlockSpec((r2, 1), lambda n, j: (0, 0)),                  # fused last b
        ],
        out_specs=pl.BlockSpec((1, r2, P), lambda n, j: (n, 0, 0)),
        scratch_shapes=[pltpu.VMEM((F, P), jnp.float32),    # running activation
                        pltpu.VMEM((F, P), jnp.float32)],   # global residual
        compiler_params=pltpu.CompilerParams(
            dimension_semantics=("parallel", "arbitrary"),
            vmem_limit_bytes=_vmem_limit_bytes()),
    )(cols, x, p["wf"], p["bf"], p["w1"], p["b1"], p["w2"], p["b2"],
      p["wu"], p["bu"], p["wl"], p["bl"])

    # Final PixelShuffle of the tiny 1-feature, r^2-phase output:
    # out[n, 0, y*r+i, x*r+j] = out_pre[n, i*r+j, y*W + x]
    out = out_pre.reshape(N, 1, r, r, H, W)
    out = jnp.transpose(out, (0, 1, 4, 2, 5, 3)).reshape(N, 1, H * r, W * r)
    return out


# -----------------------------------------------------------------------------
# Pure-JAX (XLA) reference of the PyTorch module, for validation only.
# -----------------------------------------------------------------------------
def _ref_conv2d(x, w, b):
    y = jax.lax.conv_general_dilated(
        x, w, window_strides=(1, 1), padding="SAME",
        dimension_numbers=("NCHW", "OIHW", "NCHW"))
    return y + b.reshape(1, -1, 1, 1)


def wdsr_reference(x, params, r):
    x = _ref_conv2d(x, *params["first"])
    res = x
    for (w1, b1, w2, b2) in params["blocks"]:
        x = _ref_conv2d(jax.nn.relu(_ref_conv2d(x, w1, b1)), w2, b2) + x
    x = x + res
    x = _ref_conv2d(x, *params["up"])
    n, c, h, w = x.shape
    f = c // (r * r)
    x = x.reshape(n, f, r, r, h, w)
    x = jnp.transpose(x, (0, 1, 4, 2, 5, 3)).reshape(n, f, h * r, w * r)
    return _ref_conv2d(x, *params["last"])


if __name__ == "__main__":
    # Small, forward-consistent shapes: batch=2, 1 input channel, 16x16 image,
    # num_features=8, 2 residual blocks, scale_factor=2 -> output (2, 1, 32, 32).
    NUM_BLOCKS = 2
    NUM_FEATURES = 8
    SCALE = 2

    key = jax.random.PRNGKey(0)
    k_params, k_input = jax.random.split(key)
    params = init_wdsr_params(k_params, NUM_BLOCKS, NUM_FEATURES, SCALE)
    prepped = prepare_wdsr_params(params, SCALE)          # one-time weight prep
    x = jax.random.normal(k_input, (2, 1, 16, 16), jnp.float32)

    fwd = jax.jit(functools.partial(wdsr_forward, scale_factor=SCALE))
    y = fwd(x, prepped)
    jax.block_until_ready(y)
    assert y.shape == (2, 1, 16 * SCALE, 16 * SCALE), y.shape

    # Cross-check against the pure-JAX/XLA reference of the PyTorch module.
    y_ref = wdsr_reference(x, params, SCALE)
    err = float(jnp.max(jnp.abs(y - y_ref)))
    assert err < 1e-3, f"max abs error vs reference: {err}"

    print("KERNEL_OK")
</pallas_src>

<mosaic_0001>
module attributes {stable_mosaic.version = 11 : i64} {
  func.func @kernel(%arg0: i32, %arg1: i32, %arg2: memref<1x256xi32, #tpu.memory_space<vmem>>, %arg3: memref<1x1x256xf32, #tpu.memory_space<vmem>>, %arg4: memref<9x8x1xf32, #tpu.memory_space<vmem>>, %arg5: memref<8x1xf32, #tpu.memory_space<vmem>>, %arg6: memref<1x9x32x8xf32, #tpu.memory_space<vmem>>, %arg7: memref<1x32x1xf32, #tpu.memory_space<vmem>>, %arg8: memref<1x9x8x32xf32, #tpu.memory_space<vmem>>, %arg9: memref<1x8x1xf32, #tpu.memory_space<vmem>>, %arg10: memref<9x32x8xf32, #tpu.memory_space<vmem>>, %arg11: memref<32x1xf32, #tpu.memory_space<vmem>>, %arg12: memref<9x4x32xf32, #tpu.memory_space<vmem>>, %arg13: memref<4x1xf32, #tpu.memory_space<vmem>>, %arg14: memref<1x4x256xf32, #tpu.memory_space<vmem>>, %arg15: memref<8x256xf32, #tpu.memory_space<vmem>>, %arg16: memref<8x256xf32, #tpu.memory_space<vmem>>) attributes {dimension_semantics = [#tpu.dimension_semantics<parallel>, #tpu.dimension_semantics<arbitrary>], iteration_bounds = array<i64: 2, 2>, scalar_prefetch = 0 : i64, scratch_operands = 2 : i64, tpu.core_type = #tpu.core_type<tc>, window_params = [{pipeline_mode = #tpu.pipeline_mode<synchronous>, transform_indices = @transform_0, window_bounds = array<i64: 1, 256>}, {transform_indices = @transform_1, window_bounds = array<i64: 1, 1, 256>}, {pipeline_mode = #tpu.pipeline_mode<synchronous>, transform_indices = @transform_2, window_bounds = array<i64: 9, 8, 1>}, {pipeline_mode = #tpu.pipeline_mode<synchronous>, transform_indices = @transform_3, window_bounds = array<i64: 8, 1>}, {transform_indices = @transform_4, window_bounds = array<i64: 1, 9, 32, 8>}, {transform_indices = @transform_5, window_bounds = array<i64: 1, 32, 1>}, {transform_indices = @transform_6, window_bounds = array<i64: 1, 9, 8, 32>}, {transform_indices = @transform_7, window_bounds = array<i64: 1, 8, 1>}, {pipeline_mode = #tpu.pipeline_mode<synchronous>, transform_indices = @transform_8, window_bounds = array<i64: 9, 32, 8>}, {pipeline_mode = #tpu.pipeline_mode<synchronous>, transform_indices = @transform_9, window_bounds = array<i64: 32, 1>}, {pipeline_mode = #tpu.pipeline_mode<synchronous>, transform_indices = @transform_10, window_bounds = array<i64: 9, 4, 32>}, {pipeline_mode = #tpu.pipeline_mode<synchronous>, transform_indices = @transform_11, window_bounds = array<i64: 4, 1>}, {transform_indices = @transform_12, window_bounds = array<i64: 1, 4, 256>}]} {
    %c0 = arith.constant 0 : index
    %c0_0 = arith.constant 0 : index
    %0 = vector.load %arg2[%c0, %c0_0] : memref<1x256xi32, #tpu.memory_space<vmem>>, vector<1x256xi32>
    %1 = tpu.iota {dimensions = array<i32: 1>} : vector<1x256xi32>
    %c16_i32 = arith.constant 16 : i32
    %2 = vector.broadcast %c16_i32 : i32 to vector<1x256xi32>
    %3 = arith.cmpi sge, %1, %2 : vector<1x256xi32>
    %c240_i32 = arith.constant 240 : i32
    %4 = vector.broadcast %c240_i32 : i32 to vector<1x256xi32>
    %5 = arith.cmpi slt, %1, %4 : vector<1x256xi32>
    %c1_i32 = arith.constant 1 : i32
    %6 = vector.broadcast %c1_i32 : i32 to vector<1x256xi32>
    %7 = arith.cmpi sge, %0, %6 : vector<1x256xi32>
    %c14_i32 = arith.constant 14 : i32
    %8 = vector.broadcast %c14_i32 : i32 to vector<1x256xi32>
    %9 = arith.cmpi sle, %0, %8 : vector<1x256xi32>
    %c0_i32 = arith.constant 0 : i32
    %10 = arith.cmpi eq, %arg1, %c0_i32 : i32
    %11 = arith.extui %10 : i1 to i32
    %c0_i32_1 = arith.constant 0 : i32
    %12 = arith.cmpi ne, %11, %c0_i32_1 : i32
    scf.if %12 {
      %c0_56 = arith.constant 0 : index
      %c0_57 = arith.constant 0 : index
      %c0_58 = arith.constant 0 : index
      %215 = vector.load %arg3[%c0_56, %c0_57, %c0_58] : memref<1x1x256xf32, #tpu.memory_space<vmem>>, vector<1x1x256xf32>
      %216 = vector.shape_cast %215 : vector<1x1x256xf32> to vector<1x256xf32>
      %c0_59 = arith.constant 0 : index
      %c0_60 = arith.constant 0 : index
      %c0_61 = arith.constant 0 : index
      %217 = vector.load %arg4[%c0_59, %c0_60, %c0_61] : memref<9x8x1xf32, #tpu.memory_space<vmem>>, vector<9x8x1xf32>
      %c0_62 = arith.constant 0 : index
      %c0_63 = arith.constant 0 : index
      %218 = vector.load %arg5[%c0_62, %c0_63] : memref<8x1xf32, #tpu.memory_space<vmem>>, vector<8x1xf32>
      %219 = vector.extract_strided_slice %216 {offsets = [0, 240], sizes = [1, 16], strides = [1, 1]} : vector<1x256xf32> to vector<1x16xf32>
      %220 = vector.extract_strided_slice %216 {offsets = [0, 0], sizes = [1, 240], strides = [1, 1]} : vector<1x256xf32> to vector<1x240xf32>
      %221 = tpu.concatenate %219, %220 in 1 : vector<1x16xf32>, vector<1x240xf32> -> vector<1x256xf32>
      %cst_64 = arith.constant 0.000000e+00 : f32
      %222 = vector.broadcast %cst_64 : f32 to vector<1x256xf32>
      %223 = arith.select %3, %221, %222 : vector<1x256xi1>, vector<1x256xf32>
      %224 = vector.extract_strided_slice %216 {offsets = [0, 16], sizes = [1, 240], strides = [1, 1]} : vector<1x256xf32> to vector<1x240xf32>
      %225 = vector.extract_strided_slice %216 {offsets = [0, 0], sizes = [1, 16], strides = [1, 1]} : vector<1x256xf32> to vector<1x16xf32>
      %226 = tpu.concatenate %224, %225 in 1 : vector<1x240xf32>, vector<1x16xf32> -> vector<1x256xf32>
      %cst_65 = arith.constant 0.000000e+00 : f32
      %227 = vector.broadcast %cst_65 : f32 to vector<1x256xf32>
      %228 = arith.select %5, %226, %227 : vector<1x256xi1>, vector<1x256xf32>
      %229 = vector.extract_strided_slice %223 {offsets = [0, 255], sizes = [1, 1], strides = [1, 1]} : vector<1x256xf32> to vector<1x1xf32>
      %230 = vector.extract_strided_slice %223 {offsets = [0, 0], sizes = [1, 255], strides = [1, 1]} : vector<1x256xf32> to vector<1x255xf32>
      %231 = tpu.concatenate %229, %230 in 1 : vector<1x1xf32>, vector<1x255xf32> -> vector<1x256xf32>
      %cst_66 = arith.constant 0.000000e+00 : f32
      %232 = vector.broadcast %cst_66 : f32 to vector<1x256xf32>
      %233 = arith.select %7, %231, %232 : vector<1x256xi1>, vector<1x256xf32>
      %234 = vector.extract_strided_slice %223 {offsets = [0, 1], sizes = [1, 255], strides = [1, 1]} : vector<1x256xf32> to vector<1x255xf32>
      %235 = vector.extract_strided_slice %223 {offsets = [0, 0], sizes = [1, 1], strides = [1, 1]} : vector<1x256xf32> to vector<1x1xf32>
      %236 = tpu.concatenate %234, %235 in 1 : vector<1x255xf32>, vector<1x1xf32> -> vector<1x256xf32>
      %cst_67 = arith.constant 0.000000e+00 : f32
      %237 = vector.broadcast %cst_67 : f32 to vector<1x256xf32>
      %238 = arith.select %9, %236, %237 : vector<1x256xi1>, vector<1x256xf32>
      %239 = vector.extract_strided_slice %217 {offsets = [0, 0, 0], sizes = [1, 8, 1], strides = [1, 1, 1]} : vector<9x8x1xf32> to vector<1x8x1xf32>
      %240 = vector.shape_cast %239 : vector<1x8x1xf32> to vector<8x1xf32>
      %241 = vector.broadcast %240 : vector<8x1xf32> to vector<8x256xf32>
      %242 = vector.broadcast %233 : vector<1x256xf32> to vector<8x256xf32>
      %243 = arith.mulf %241, %242 : vector<8x256xf32>
      %244 = vector.extract_strided_slice %217 {offsets = [1, 0, 0], sizes = [1, 8, 1], strides = [1, 1, 1]} : vector<9x8x1xf32> to vector<1x8x1xf32>
      %245 = vector.shape_cast %244 : vector<1x8x1xf32> to vector<8x1xf32>
      %246 = vector.broadcast %245 : vector<8x1xf32> to vector<8x256xf32>
      %247 = vector.broadcast %223 : vector<1x256xf32> to vector<8x256xf32>
      %248 = arith.mulf %246, %247 : vector<8x256xf32>
      %249 = arith.addf %243, %248 : vector<8x256xf32>
      %250 = vector.extract_strided_slice %217 {offsets = [2, 0, 0], sizes = [1, 8, 1], strides = [1, 1, 1]} : vector<9x8x1xf32> to vector<1x8x1xf32>
      %251 = vector.shape_cast %250 : vector<1x8x1xf32> to vector<8x1xf32>
      %252 = vector.broadcast %251 : vector<8x1xf32> to vector<8x256xf32>
      %253 = vector.broadcast %238 : vector<1x256xf32> to vector<8x256xf32>
      %254 = arith.mulf %252, %253 : vector<8x256xf32>
      %255 = arith.addf %249, %254 : vector<8x256xf32>
      %256 = vector.extract_strided_slice %216 {offsets = [0, 255], sizes = [1, 1], strides = [1, 1]} : vector<1x256xf32> to vector<1x1xf32>
      %257 = vector.extract_strided_slice %216 {offsets = [0, 0], sizes = [1, 255], strides = [1, 1]} : vector<1x256xf32> to vector<1x255xf32>
      %258 = tpu.concatenate %256, %257 in 1 : vector<1x1xf32>, vector<1x255xf32> -> vector<1x256xf32>
      %cst_68 = arith.constant 0.000000e+00 : f32
      %259 = vector.broadcast %cst_68 : f32 to vector<1x256xf32>
      %260 = arith.select %7, %258, %259 : vector<1x256xi1>, vector<1x256xf32>
      %261 = vector.extract_strided_slice %216 {offsets = [0, 1], sizes = [1, 255], strides = [1, 1]} : vector<1x256xf32> to vector<1x255xf32>
      %262 = vector.extract_strided_slice %216 {offsets = [0, 0], sizes = [1, 1], strides = [1, 1]} : vector<1x256xf32> to vector<1x1xf32>
      %263 = tpu.concatenate %261, %262 in 1 : vector<1x255xf32>, vector<1x1xf32> -> vector<1x256xf32>
      %cst_69 = arith.constant 0.000000e+00 : f32
      %264 = vector.broadcast %cst_69 : f32 to vector<1x256xf32>
      %265 = arith.select %9, %263, %264 : vector<1x256xi1>, vector<1x256xf32>
      %266 = vector.extract_strided_slice %217 {offsets = [3, 0, 0], sizes = [1, 8, 1], strides = [1, 1, 1]} : vector<9x8x1xf32> to vector<1x8x1xf32>
      %267 = vector.shape_cast %266 : vector<1x8x1xf32> to vector<8x1xf32>
      %268 = vector.broadcast %267 : vector<8x1xf32> to vector<8x256xf32>
      %269 = vector.broadcast %260 : vector<1x256xf32> to vector<8x256xf32>
      %270 = arith.mulf %268, %269 : vector<8x256xf32>
      %271 = arith.addf %255, %270 : vector<8x256xf32>
      %272 = vector.extract_strided_slice %217 {offsets = [4, 0, 0], sizes = [1, 8, 1], strides = [1, 1, 1]} : vector<9x8x1xf32> to vector<1x8x1xf32>
      %273 = vector.shape_cast %272 : vector<1x8x1xf32> to vector<8x1xf32>
      %274 = vector.broadcast %273 : vector<8x1xf32> to vector<8x256xf32>
      %275 = vector.broadcast %216 : vector<1x256xf32> to vector<8x256xf32>
      %276 = arith.mulf %274, %275 : vector<8x256xf32>
      %277 = arith.addf %271, %276 : vector<8x256xf32>
      %278 = vector.extract_strided_slice %217 {offsets = [5, 0, 0], sizes = [1, 8, 1], strides = [1, 1, 1]} : vector<9x8x1xf32> to vector<1x8x1xf32>
      %279 = vector.shape_cast %278 : vector<1x8x1xf32> to vector<8x1xf32>
      %280 = vector.broadcast %279 : vector<8x1xf32> to vector<8x256xf32>
      %281 = vector.broadcast %265 : vector<1x256xf32> to vector<8x256xf32>
      %282 = arith.mulf %280, %281 : vector<8x256xf32>
      %283 = arith.addf %277, %282 : vector<8x256xf32>
      %284 = vector.extract_strided_slice %228 {offsets = [0, 255], sizes = [1, 1], strides = [1, 1]} : vector<1x256xf32> to vector<1x1xf32>
      %285 = vector.extract_strided_slice %228 {offsets = [0, 0], sizes = [1, 255], strides = [1, 1]} : vector<1x256xf32> to vector<1x255xf32>
      %286 = tpu.concatenate %284, %285 in 1 : vector<1x1xf32>, vector<1x255xf32> -> vector<1x256xf32>
      %cst_70 = arith.constant 0.000000e+00 : f32
      %287 = vector.broadcast %cst_70 : f32 to vector<1x256xf32>
      %288 = arith.select %7, %286, %287 : vector<1x256xi1>, vector<1x256xf32>
      %289 = vector.extract_strided_slice %228 {offsets = [0, 1], sizes = [1, 255], strides = [1, 1]} : vector<1x256xf32> to vector<1x255xf32>
      %290 = vector.extract_strided_slice %228 {offsets = [0, 0], sizes = [1, 1], strides = [1, 1]} : vector<1x256xf32> to vector<1x1xf32>
      %291 = tpu.concatenate %289, %290 in 1 : vector<1x255xf32>, vector<1x1xf32> -> vector<1x256xf32>
      %cst_71 = arith.constant 0.000000e+00 : f32
      %292 = vector.broadcast %cst_71 : f32 to vector<1x256xf32>
      %293 = arith.select %9, %291, %292 : vector<1x256xi1>, vector<1x256xf32>
      %294 = vector.extract_strided_slice %217 {offsets = [6, 0, 0], sizes = [1, 8, 1], strides = [1, 1, 1]} : vector<9x8x1xf32> to vector<1x8x1xf32>
      %295 = vector.shape_cast %294 : vector<1x8x1xf32> to vector<8x1xf32>
      %296 = vector.broadcast %295 : vector<8x1xf32> to vector<8x256xf32>
      %297 = vector.broadcast %288 : vector<1x256xf32> to vector<8x256xf32>
      %298 = arith.mulf %296, %297 : vector<8x256xf32>
      %299 = arith.addf %283, %298 : vector<8x256xf32>
      %300 = vector.extract_strided_slice %217 {offsets = [7, 0, 0], sizes = [1, 8, 1], strides = [1, 1, 1]} : vector<9x8x1xf32> to vector<1x8x1xf32>
      %301 = vector.shape_cast %300 : vector<1x8x1xf32> to vector<8x1xf32>
      %302 = vector.broadcast %301 : vector<8x1xf32> to vector<8x256xf32>
      %303 = vector.broadcast %228 : vector<1x256xf32> to vector<8x256xf32>
      %304 = arith.mulf %302, %303 : vector<8x256xf32>
      %305 = arith.addf %299, %304 : vector<8x256xf32>
      %306 = vector.extract_strided_slice %217 {offsets = [8, 0, 0], sizes = [1, 8, 1], strides = [1, 1, 1]} : vector<9x8x1xf32> to vector<1x8x1xf32>
      %307 = vector.shape_cast %306 : vector<1x8x1xf32> to vector<8x1xf32>
      %308 = vector.broadcast %307 : vector<8x1xf32> to vector<8x256xf32>
      %309 = vector.broadcast %293 : vector<1x256xf32> to vector<8x256xf32>
      %310 = arith.mulf %308, %309 : vector<8x256xf32>
      %311 = arith.addf %305, %310 : vector<8x256xf32>
      %312 = vector.broadcast %218 : vector<8x1xf32> to vector<8x256xf32>
      %313 = arith.addf %311, %312 : vector<8x256xf32>
      %c0_72 = arith.constant 0 : index
      %c0_73 = arith.constant 0 : index
      %314 = vector.load %arg15[%c0_72, %c0_73] : memref<8x256xf32, #tpu.memory_space<vmem>>, vector<8x256xf32>
      tpu.vector_store %arg15[%c0_72, %c0_73], %313 {strides = array<i32>} : memref<8x256xf32, #tpu.memory_space<vmem>>, vector<8x256xf32>,
      %c0_74 = arith.constant 0 : index
      %c0_75 = arith.constant 0 : index
      %315 = vector.load %arg16[%c0_74, %c0_75] : memref<8x256xf32, #tpu.memory_space<vmem>>, vector<8x256xf32>
      tpu.vector_store %arg16[%c0_74, %c0_75], %313 {strides = array<i32>} : memref<8x256xf32, #tpu.memory_space<vmem>>, vector<8x256xf32>,
    } else {
    }
    %c0_2 = arith.constant 0 : index
    %c0_3 = arith.constant 0 : index
    %13 = vector.load %arg15[%c0_2, %c0_3] : memref<8x256xf32, #tpu.memory_space<vmem>>, vector<8x256xf32>
    %c0_4 = arith.constant 0 : index
    %c0_5 = arith.constant 0 : index
    %c0_6 = arith.constant 0 : index
    %c0_7 = arith.constant 0 : index
    %14 = vector.load %arg6[%c0_4, %c0_5, %c0_6, %c0_7] : memref<1x9x32x8xf32, #tpu.memory_space<vmem>>, vector<1x9x32x8xf32>
    %15 = vector.shape_cast %14 : vector<1x9x32x8xf32> to vector<9x32x8xf32>
    %c0_8 = arith.constant 0 : index
    %c0_9 = arith.constant 0 : index
    %c0_10 = arith.constant 0 : index
    %16 = vector.load %arg7[%c0_8, %c0_9, %c0_10] : memref<1x32x1xf32, #tpu.memory_space<vmem>>, vector<1x32x1xf32>
    %17 = vector.shape_cast %16 : vector<1x32x1xf32> to vector<32x1xf32>
    %18 = vector.extract_strided_slice %13 {offsets = [0, 240], sizes = [8, 16], strides = [1, 1]} : vector<8x256xf32> to vector<8x16xf32>
    %19 = vector.extract_strided_slice %13 {offsets = [0, 0], sizes = [8, 240], strides = [1, 1]} : vector<8x256xf32> to vector<8x240xf32>
    %20 = tpu.concatenate %18, %19 in 1 : vector<8x16xf32>, vector<8x240xf32> -> vector<8x256xf32>
    %cst = arith.constant 0.000000e+00 : f32
    %21 = vector.shape_cast %3 : vector<1x256xi1> to vector<1x256xi1>
    %22 = vector.broadcast %21 : vector<1x256xi1> to vector<8x256xi1>
    %23 = vector.broadcast %cst : f32 to vector<8x256xf32>
    %24 = arith.select %22, %20, %23 : vector<8x256xi1>, vector<8x256xf32>
    %25 = vector.extract_strided_slice %13 {offsets = [0, 16], sizes = [8, 240], strides = [1, 1]} : vector<8x256xf32> to vector<8x240xf32>
    %26 = vector.extract_strided_slice %13 {offsets = [0, 0], sizes = [8, 16], strides = [1, 1]} : vector<8x256xf32> to vector<8x16xf32>
    %27 = tpu.concatenate %25, %26 in 1 : vector<8x240xf32>, vector<8x16xf32> -> vector<8x256xf32>
    %cst_11 = arith.constant 0.000000e+00 : f32
    %28 = vector.shape_cast %5 : vector<1x256xi1> to vector<1x256xi1>
    %29 = vector.broadcast %28 : vector<1x256xi1> to vector<8x256xi1>
    %30 = vector.broadcast %cst_11 : f32 to vector<8x256xf32>
    %31 = arith.select %29, %27, %30 : vector<8x256xi1>, vector<8x256xf32>
    %32 = vector.extract_strided_slice %24 {offsets = [0, 255], sizes = [8, 1], strides = [1, 1]} : vector<8x256xf32> to vector<8x1xf32>
    %33 = vector.extract_strided_slice %24 {offsets = [0, 0], sizes = [8, 255], strides = [1, 1]} : vector<8x256xf32> to vector<8x255xf32>
    %34 = tpu.concatenate %32, %33 in 1 : vector<8x1xf32>, vector<8x255xf32> -> vector<8x256xf32>
    %cst_12 = arith.constant 0.000000e+00 : f32
    %35 = vector.shape_cast %7 : vector<1x256xi1> to vector<1x256xi1>
    %36 = vector.broadcast %35 : vector<1x256xi1> to vector<8x256xi1>
    %37 = vector.broadcast %cst_12 : f32 to vector<8x256xf32>
    %38 = arith.select %36, %34, %37 : vector<8x256xi1>, vector<8x256xf32>
    %39 = vector.extract_strided_slice %24 {offsets = [0, 1], sizes = [8, 255], strides = [1, 1]} : vector<8x256xf32> to vector<8x255xf32>
    %40 = vector.extract_strided_slice %24 {offsets = [0, 0], sizes = [8, 1], strides = [1, 1]} : vector<8x256xf32> to vector<8x1xf32>
    %41 = tpu.concatenate %39, %40 in 1 : vector<8x255xf32>, vector<8x1xf32> -> vector<8x256xf32>
    %cst_13 = arith.constant 0.000000e+00 : f32
    %42 = vector.shape_cast %9 : vector<1x256xi1> to vector<1x256xi1>
    %43 = vector.broadcast %42 : vector<1x256xi1> to vector<8x256xi1>
    %44 = vector.broadcast %cst_13 : f32 to vector<8x256xf32>
    %45 = arith.select %43, %41, %44 : vector<8x256xi1>, vector<8x256xf32>
    %46 = vector.extract_strided_slice %15 {offsets = [0, 0, 0], sizes = [1, 32, 8], strides = [1, 1, 1]} : vector<9x32x8xf32> to vector<1x32x8xf32>
    %47 = vector.shape_cast %46 : vector<1x32x8xf32> to vector<32x8xf32>
    %cst_14 = arith.constant dense<0.000000e+00> : vector<32x256xf32>
    %48 = tpu.matmul %47, %38, %cst_14 {dimension_numbers = #tpu.dot_dimension_numbers<[1], [0], [0], [1], [0, 0, 1, 1], [], []>} : vector<32x8xf32>, vector<8x256xf32>, vector<32x256xf32> -> vector<32x256xf32>
    %49 = vector.extract_strided_slice %15 {offsets = [1, 0, 0], sizes = [1, 32, 8], strides = [1, 1, 1]} : vector<9x32x8xf32> to vector<1x32x8xf32>
    %50 = vector.shape_cast %49 : vector<1x32x8xf32> to vector<32x8xf32>
    %cst_15 = arith.constant dense<0.000000e+00> : vector<32x256xf32>
    %51 = tpu.matmul %50, %24, %cst_15 {dimension_numbers = #tpu.dot_dimension_numbers<[1], [0], [0], [1], [0, 0, 1, 1], [], []>} : vector<32x8xf32>, vector<8x256xf32>, vector<32x256xf32> -> vector<32x256xf32>
    %52 = arith.addf %48, %51 : vector<32x256xf32>
    %53 = vector.extract_strided_slice %15 {offsets = [2, 0, 0], sizes = [1, 32, 8], strides = [1, 1, 1]} : vector<9x32x8xf32> to vector<1x32x8xf32>
    %54 = vector.shape_cast %53 : vector<1x32x8xf32> to vector<32x8xf32>
    %cst_16 = arith.constant dense<0.000000e+00> : vector<32x256xf32>
    %55 = tpu.matmul %54, %45, %cst_16 {dimension_numbers = #tpu.dot_dimension_numbers<[1], [0], [0], [1], [0, 0, 1, 1], [], []>} : vector<32x8xf32>, vector<8x256xf32>, vector<32x256xf32> -> vector<32x256xf32>
    %56 = arith.addf %52, %55 : vector<32x256xf32>
    %57 = vector.extract_strided_slice %13 {offsets = [0, 255], sizes = [8, 1], strides = [1, 1]} : vector<8x256xf32> to vector<8x1xf32>
    %58 = vector.extract_strided_slice %13 {offsets = [0, 0], sizes = [8, 255], strides = [1, 1]} : vector<8x256xf32> to vector<8x255xf32>
    %59 = tpu.concatenate %57, %58 in 1 : vector<8x1xf32>, vector<8x255xf32> -> vector<8x256xf32>
    %cst_17 = arith.constant 0.000000e+00 : f32
    %60 = vector.shape_cast %7 : vector<1x256xi1> to vector<1x256xi1>
    %61 = vector.broadcast %60 : vector<1x256xi1> to vector<8x256xi1>
    %62 = vector.broadcast %cst_17 : f32 to vector<8x256xf32>
    %63 = arith.select %61, %59, %62 : vector<8x256xi1>, vector<8x256xf32>
    %64 = vector.extract_strided_slice %13 {offsets = [0, 1], sizes = [8, 255], strides = [1, 1]} : vector<8x256xf32> to vector<8x255xf32>
    %65 = vector.extract_strided_slice %13 {offsets = [0, 0], sizes = [8, 1], strides = [1, 1]} : vector<8x256xf32> to vector<8x1xf32>
    %66 = tpu.concatenate %64, %65 in 1 : vector<8x255xf32>, vector<8x1xf32> -> vector<8x256xf32>
    %cst_18 = arith.constant 0.000000e+00 : f32
    %67 = vector.shape_cast %9 : vector<1x256xi1> to vector<1x256xi1>
    %68 = vector.broadcast %67 : vector<1x256xi1> to vector<8x256xi1>
    %69 = vector.broadcast %cst_18 : f32 to vector<8x256xf32>
    %70 = arith.select %68, %66, %69 : vector<8x256xi1>, vector<8x256xf32>
    %71 = vector.extract_strided_slice %15 {offsets = [3, 0, 0], sizes = [1, 32, 8], strides = [1, 1, 1]} : vector<9x32x8xf32> to vector<1x32x8xf32>
    %72 = vector.shape_cast %71 : vector<1x32x8xf32> to vector<32x8xf32>
    %cst_19 = arith.constant dense<0.000000e+00> : vector<32x256xf32>
    %73 = tpu.matmul %72, %63, %cst_19 {dimension_numbers = #tpu.dot_dimension_numbers<[1], [0], [0], [1], [0, 0, 1, 1], [], []>} : vector<32x8xf32>, vector<8x256xf32>, vector<32x256xf32> -> vector<32x256xf32>
    %74 = arith.addf %56, %73 : vector<32x256xf32>
    %75 = vector.extract_strided_slice %15 {offsets = [4, 0, 0], sizes = [1, 32, 8], strides = [1, 1, 1]} : vector<9x32x8xf32> to vector<1x32x8xf32>
    %76 = vector.shape_cast %75 : vector<1x32x8xf32> to vector<32x8xf32>
    %cst_20 = arith.constant dense<0.000000e+00> : vector<32x256xf32>
    %77 = tpu.matmul %76, %13, %cst_20 {dimension_numbers = #tpu.dot_dimension_numbers<[1], [0], [0], [1], [0, 0, 1, 1], [], []>} : vector<32x8xf32>, vector<8x256xf32>, vector<32x256xf32> -> vector<32x256xf32>
    %78 = arith.addf %74, %77 : vector<32x256xf32>
    %79 = vector.extract_strided_slice %15 {offsets = [5, 0, 0], sizes = [1, 32, 8], strides = [1, 1, 1]} : vector<9x32x8xf32> to vector<1x32x8xf32>
    %80 = vector.shape_cast %79 : vector<1x32x8xf32> to vector<32x8xf32>
    %cst_21 = arith.constant dense<0.000000e+00> : vector<32x256xf32>
    %81 = tpu.matmul %80, %70, %cst_21 {dimension_numbers = #tpu.dot_dimension_numbers<[1], [0], [0], [1], [0, 0, 1, 1], [], []>} : vector<32x8xf32>, vector<8x256xf32>, vector<32x256xf32> -> vector<32x256xf32>
    %82 = arith.addf %78, %81 : vector<32x256xf32>
    %83 = vector.extract_strided_slice %31 {offsets = [0, 255], sizes = [8, 1], strides = [1, 1]} : vector<8x256xf32> to vector<8x1xf32>
    %84 = vector.extract_strided_slice %31 {offsets = [0, 0], sizes = [8, 255], strides = [1, 1]} : vector<8x256xf32> to vector<8x255xf32>
    %85 = tpu.concatenate %83, %84 in 1 : vector<8x1xf32>, vector<8x255xf32> -> vector<8x256xf32>
    %cst_22 = arith.constant 0.000000e+00 : f32
    %86 = vector.shape_cast %7 : vector<1x256xi1> to vector<1x256xi1>
    %87 = vector.broadcast %86 : vector<1x256xi1> to vector<8x256xi1>
    %88 = vector.broadcast %cst_22 : f32 to vector<8x256xf32>
    %89 = arith.select %87, %85, %88 : vector<8x256xi1>, vector<8x256xf32>
    %90 = vector.extract_strided_slice %31 {offsets = [0, 1], sizes = [8, 255], strides = [1, 1]} : vector<8x256xf32> to vector<8x255xf32>
    %91 = vector.extract_strided_slice %31 {offsets = [0, 0], sizes = [8, 1], strides = [1, 1]} : vector<8x256xf32> to vector<8x1xf32>
    %92 = tpu.concatenate %90, %91 in 1 : vector<8x255xf32>, vector<8x1xf32> -> vector<8x256xf32>
    %cst_23 = arith.constant 0.000000e+00 : f32
    %93 = vector.shape_cast %9 : vector<1x256xi1> to vector<1x256xi1>
    %94 = vector.broadcast %93 : vector<1x256xi1> to vector<8x256xi1>
    %95 = vector.broadcast %cst_23 : f32 to vector<8x256xf32>
    %96 = arith.select %94, %92, %95 : vector<8x256xi1>, vector<8x256xf32>
    %97 = vector.extract_strided_slice %15 {offsets = [6, 0, 0], sizes = [1, 32, 8], strides = [1, 1, 1]} : vector<9x32x8xf32> to vector<1x32x8xf32>
    %98 = vector.shape_cast %97 : vector<1x32x8xf32> to vector<32x8xf32>
    %cst_24 = arith.constant dense<0.000000e+00> : vector<32x256xf32>
    %99 = tpu.matmul %98, %89, %cst_24 {dimension_numbers = #tpu.dot_dimension_numbers<[1], [0], [0], [1], [0, 0, 1, 1], [], []>} : vector<32x8xf32>, vector<8x256xf32>, vector<32x256xf32> -> vector<32x256xf32>
    %100 = arith.addf %82, %99 : vector<32x256xf32>
    %101 = vector.extract_strided_slice %15 {offsets = [7, 0, 0], sizes = [1, 32, 8], strides = [1, 1, 1]} : vector<9x32x8xf32> to vector<1x32x8xf32>
    %102 = vector.shape_cast %101 : vector<1x32x8xf32> to vector<32x8xf32>
    %cst_25 = arith.constant dense<0.000000e+00> : vector<32x256xf32>
    %103 = tpu.matmul %102, %31, %cst_25 {dimension_numbers = #tpu.dot_dimension_numbers<[1], [0], [0], [1], [0, 0, 1, 1], [], []>} : vector<32x8xf32>, vector<8x256xf32>, vector<32x256xf32> -> vector<32x256xf32>
    %104 = arith.addf %100, %103 : vector<32x256xf32>
    %105 = vector.extract_strided_slice %15 {offsets = [8, 0, 0], sizes = [1, 32, 8], strides = [1, 1, 1]} : vector<9x32x8xf32> to vector<1x32x8xf32>
    %106 = vector.shape_cast %105 : vector<1x32x8xf32> to vector<32x8xf32>
    %cst_26 = arith.constant dense<0.000000e+00> : vector<32x256xf32>
    %107 = tpu.matmul %106, %96, %cst_26 {dimension_numbers = #tpu.dot_dimension_numbers<[1], [0], [0], [1], [0, 0, 1, 1], [], []>} : vector<32x8xf32>, vector<8x256xf32>, vector<32x256xf32> -> vector<32x256xf32>
    %108 = arith.addf %104, %107 : vector<32x256xf32>
    %109 = vector.broadcast %17 : vector<32x1xf32> to vector<32x256xf32>
    %110 = arith.addf %108, %109 : vector<32x256xf32>
    %cst_27 = arith.constant 0.000000e+00 : f32
    %111 = vector.broadcast %cst_27 : f32 to vector<32x256xf32>
    %112 = arith.maximumf %110, %111 : vector<32x256xf32>
    %c0_28 = arith.constant 0 : index
    %c0_29 = arith.constant 0 : index
    %c0_30 = arith.constant 0 : index
    %c0_31 = arith.constant 0 : index
    %113 = vector.load %arg8[%c0_28, %c0_29, %c0_30, %c0_31] : memref<1x9x8x32xf32, #tpu.memory_space<vmem>>, vector<1x9x8x32xf32>
    %114 = vector.shape_cast %113 : vector<1x9x8x32xf32> to vector<9x8x32xf32>
    %c0_32 = arith.constant 0 : index
    %c0_33 = arith.constant 0 : index
    %c0_34 = arith.constant 0 : index
    %115 = vector.load %arg9[%c0_32, %c0_33, %c0_34] : memref<1x8x1xf32, #tpu.memory_space<vmem>>, vector<1x8x1xf32>
    %116 = vector.shape_cast %115 : vector<1x8x1xf32> to vector<8x1xf32>
    %117 = vector.extract_strided_slice %112 {offsets = [0, 240], sizes = [32, 16], strides = [1, 1]} : vector<32x256xf32> to vector<32x16xf32>
    %118 = vector.extract_strided_slice %112 {offsets = [0, 0], sizes = [32, 240], strides = [1, 1]} : vector<32x256xf32> to vector<32x240xf32>
    %119 = tpu.concatenate %117, %118 in 1 : vector<32x16xf32>, vector<32x240xf32> -> vector<32x256xf32>
    %cst_35 = arith.constant 0.000000e+00 : f32
    %120 = vector.shape_cast %3 : vector<1x256xi1> to vector<1x256xi1>
    %121 = vector.broadcast %120 : vector<1x256xi1> to vector<32x256xi1>
    %122 = vector.broadcast %cst_35 : f32 to vector<32x256xf32>
    %123 = arith.select %121, %119, %122 : vector<32x256xi1>, vector<32x256xf32>
    %124 = vector.extract_strided_slice %112 {offsets = [0, 16], sizes = [32, 240], strides = [1, 1]} : vector<32x256xf32> to vector<32x240xf32>
    %125 = vector.extract_strided_slice %112 {offsets = [0, 0], sizes = [32, 16], strides = [1, 1]} : vector<32x256xf32> to vector<32x16xf32>
    %126 = tpu.concatenate %124, %125 in 1 : vector<32x240xf32>, vector<32x16xf32> -> vector<32x256xf32>
    %cst_36 = arith.constant 0.000000e+00 : f32
    %127 = vector.shape_cast %5 : vector<1x256xi1> to vector<1x256xi1>
    %128 = vector.broadcast %127 : vector<1x256xi1> to vector<32x256xi1>
    %129 = vector.broadcast %cst_36 : f32 to vector<32x256xf32>
    %130 = arith.select %128, %126, %129 : vector<32x256xi1>, vector<32x256xf32>
    %131 = vector.extract_strided_slice %123 {offsets = [0, 255], sizes = [32, 1], strides = [1, 1]} : vector<32x256xf32> to vector<32x1xf32>
    %132 = vector.extract_strided_slice %123 {offsets = [0, 0], sizes = [32, 255], strides = [1, 1]} : vector<32x256xf32> to vector<32x255xf32>
    %133 = tpu.concatenate %131, %132 in 1 : vector<32x1xf32>, vector<32x255xf32> -> vector<32x256xf32>
    %cst_37 = arith.constant 0.000000e+00 : f32
    %134 = vector.shape_cast %7 : vector<1x256xi1> to vector<1x256xi1>
    %135 = vector.broadcast %134 : vector<1x256xi1> to vector<32x256xi1>
    %136 = vector.broadcast %cst_37 : f32 to vector<32x256xf32>
    %137 = arith.select %135, %133, %136 : vector<32x256xi1>, vector<32x256xf32>
    %138 = vector.extract_strided_slice %123 {offsets = [0, 1], sizes = [32, 255], strides = [1, 1]} : vector<32x256xf32> to vector<32x255xf32>
    %139 = vector.extract_strided_slice %123 {offsets = [0, 0], sizes = [32, 1], strides = [1, 1]} : vector<32x256xf32> to vector<32x1xf32>
    %140 = tpu.concatenate %138, %139 in 1 : vector<32x255xf32>, vector<32x1xf32> -> vector<32x256xf32>
    %cst_38 = arith.constant 0.000000e+00 : f32
    %141 = vector.shape_cast %9 : vector<1x256xi1> to vector<1x256xi1>
    %142 = vector.broadcast %141 : vector<1x256xi1> to vector<32x256xi1>
    %143 = vector.broadcast %cst_38 : f32 to vector<32x256xf32>
    %144 = arith.select %142, %140, %143 : vector<32x256xi1>, vector<32x256xf32>
    %145 = vector.extract_strided_slice %114 {offsets = [0, 0, 0], sizes = [1, 8, 32], strides = [1, 1, 1]} : vector<9x8x32xf32> to vector<1x8x32xf32>
    %146 = vector.shape_cast %145 : vector<1x8x32xf32> to vector<8x32xf32>
    %cst_39 = arith.constant dense<0.000000e+00> : vector<8x256xf32>
    %147 = tpu.matmul %146, %137, %cst_39 {dimension_numbers = #tpu.dot_dimension_numbers<[1], [0], [0], [1], [0, 0, 1, 1], [], []>} : vector<8x32xf32>, vector<32x256xf32>, vector<8x256xf32> -> vector<8x256xf32>
    %148 = vector.extract_strided_slice %114 {offsets = [1, 0, 0], sizes = [1, 8, 32], strides = [1, 1, 1]} : vector<9x8x32xf32> to vector<1x8x32xf32>
    %149 = vector.shape_cast %148 : vector<1x8x32xf32> to vector<8x32xf32>
    %cst_40 = arith.constant dense<0.000000e+00> : vector<8x256xf32>
    %150 = tpu.matmul %149, %123, %cst_40 {dimension_numbers = #tpu.dot_dimension_numbers<[1], [0], [0], [1], [0, 0, 1, 1], [], []>} : vector<8x32xf32>, vector<32x256xf32>, vector<8x256xf32> -> vector<8x256xf32>
    %151 = arith.addf %147, %150 : vector<8x256xf32>
    %152 = vector.extract_strided_slice %114 {offsets = [2, 0, 0], sizes = [1, 8, 32], strides = [1, 1, 1]} : vector<9x8x32xf32> to vector<1x8x32xf32>
    %153 = vector.shape_cast %152 : vector<1x8x32xf32> to vector<8x32xf32>
    %cst_41 = arith.constant dense<0.000000e+00> : vector<8x256xf32>
    %154 = tpu.matmul %153, %144, %cst_41 {dimension_numbers = #tpu.dot_dimension_numbers<[1], [0], [0], [1], [0, 0, 1, 1], [], []>} : vector<8x32xf32>, vector<32x256xf32>, vector<8x256xf32> -> vector<8x256xf32>
    %155 = arith.addf %151, %154 : vector<8x256xf32>
    %156 = vector.extract_strided_slice %112 {offsets = [0, 255], sizes = [32, 1], strides = [1, 1]} : vector<32x256xf32> to vector<32x1xf32>
    %157 = vector.extract_strided_slice %112 {offsets = [0, 0], sizes = [32, 255], strides = [1, 1]} : vector<32x256xf32> to vector<32x255xf32>
    %158 = tpu.concatenate %156, %157 in 1 : vector<32x1xf32>, vector<32x255xf32> -> vector<32x256xf32>
    %cst_42 = arith.constant 0.000000e+00 : f32
    %159 = vector.shape_cast %7 : vector<1x256xi1> to vector<1x256xi1>
    %160 = vector.broadcast %159 : vector<1x256xi1> to vector<32x256xi1>
    %161 = vector.broadcast %cst_42 : f32 to vector<32x256xf32>
    %162 = arith.select %160, %158, %161 : vector<32x256xi1>, vector<32x256xf32>
    %163 = vector.extract_strided_slice %112 {offsets = [0, 1], sizes = [32, 255], strides = [1, 1]} : vector<32x256xf32> to vector<32x255xf32>
    %164 = vector.extract_strided_slice %112 {offsets = [0, 0], sizes = [32, 1], strides = [1, 1]} : vector<32x256xf32> to vector<32x1xf32>
    %165 = tpu.concatenate %163, %164 in 1 : vector<32x255xf32>, vector<32x1xf32> -> vector<32x256xf32>
    %cst_43 = arith.constant 0.000000e+00 : f32
    %166 = vector.shape_cast %9 : vector<1x256xi1> to vector<1x256xi1>
    %167 = vector.broadcast %166 : vector<1x256xi1> to vector<32x256xi1>
    %168 = vector.broadcast %cst_43 : f32 to vector<32x256xf32>
    %169 = arith.select %167, %165, %168 : vector<32x256xi1>, vector<32x256xf32>
    %170 = vector.extract_strided_slice %114 {offsets = [3, 0, 0], sizes = [1, 8, 32], strides = [1, 1, 1]} : vector<9x8x32xf32> to vector<1x8x32xf32>
    %171 = vector.shape_cast %170 : vector<1x8x32xf32> to vector<8x32xf32>
    %cst_44 = arith.constant dense<0.000000e+00> : vector<8x256xf32>
    %172 = tpu.matmul %171, %162, %cst_44 {dimension_numbers = #tpu.dot_dimension_numbers<[1], [0], [0], [1], [0, 0, 1, 1], [], []>} : vector<8x32xf32>, vector<32x256xf32>, vector<8x256xf32> -> vector<8x256xf32>
    %173 = arith.addf %155, %172 : vector<8x256xf32>
    %174 = vector.extract_strided_slice %114 {offsets = [4, 0, 0], sizes = [1, 8, 32], strides = [1, 1, 1]} : vector<9x8x32xf32> to vector<1x8x32xf32>
    %175 = vector.shape_cast %174 : vector<1x8x32xf32> to vector<8x32xf32>
    %cst_45 = arith.constant dense<0.000000e+00> : vector<8x256xf32>
    %176 = tpu.matmul %175, %112, %cst_45 {dimension_numbers = #tpu.dot_dimension_numbers<[1], [0], [0], [1], [0, 0, 1, 1], [], []>} : vector<8x32xf32>, vector<32x256xf32>, vector<8x256xf32> -> vector<8x256xf32>
    %177 = arith.addf %173, %176 : vector<8x256xf32>
    %178 = vector.extract_strided_slice %114 {offsets = [5, 0, 0], sizes = [1, 8, 32], strides = [1, 1, 1]} : vector<9x8x32xf32> to vector<1x8x32xf32>
    %179 = vector.shape_cast %178 : vector<1x8x32xf32> to vector<8x32xf32>
    %cst_46 = arith.constant dense<0.000000e+00> : vector<8x256xf32>
    %180 = tpu.matmul %179, %169, %cst_46 {dimension_numbers = #tpu.dot_dimension_numbers<[1], [0], [0], [1], [0, 0, 1, 1], [], []>} : vector<8x32xf32>, vector<32x256xf32>, vector<8x256xf32> -> vector<8x256xf32>
    %181 = arith.addf %177, %180 : vector<8x256xf32>
    %182 = vector.extract_strided_slice %130 {offsets = [0, 255], sizes = [32, 1], strides = [1, 1]} : vector<32x256xf32> to vector<32x1xf32>
    %183 = vector.extract_strided_slice %130 {offsets = [0, 0], sizes = [32, 255], strides = [1, 1]} : vector<32x256xf32> to vector<32x255xf32>
    %184 = tpu.concatenate %182, %183 in 1 : vector<32x1xf32>, vector<32x255xf32> -> vector<32x256xf32>
    %cst_47 = arith.constant 0.000000e+00 : f32
    %185 = vector.shape_cast %7 : vector<1x256xi1> to vector<1x256xi1>
    %186 = vector.broadcast %185 : vector<1x256xi1> to vector<32x256xi1>
    %187 = vector.broadcast %cst_47 : f32 to vector<32x256xf32>
    %188 = arith.select %186, %184, %187 : vector<32x256xi1>, vector<32x256xf32>
    %189 = vector.extract_strided_slice %130 {offsets = [0, 1], sizes = [32, 255], strides = [1, 1]} : vector<32x256xf32> to vector<32x255xf32>
    %190 = vector.extract_strided_slice %130 {offsets = [0, 0], sizes = [32, 1], strides = [1, 1]} : vector<32x256xf32> to vector<32x1xf32>
    %191 = tpu.concatenate %189, %190 in 1 : vector<32x255xf32>, vector<32x1xf32> -> vector<32x256xf32>
    %cst_48 = arith.constant 0.000000e+00 : f32
    %192 = vector.shape_cast %9 : vector<1x256xi1> to vector<1x256xi1>
    %193 = vector.broadcast %192 : vector<1x256xi1> to vector<32x256xi1>
    %194 = vector.broadcast %cst_48 : f32 to vector<32x256xf32>
    %195 = arith.select %193, %191, %194 : vector<32x256xi1>, vector<32x256xf32>
    %196 = vector.extract_strided_slice %114 {offsets = [6, 0, 0], sizes = [1, 8, 32], strides = [1, 1, 1]} : vector<9x8x32xf32> to vector<1x8x32xf32>
    %197 = vector.shape_cast %196 : vector<1x8x32xf32> to vector<8x32xf32>
    %cst_49 = arith.constant dense<0.000000e+00> : vector<8x256xf32>
    %198 = tpu.matmul %197, %188, %cst_49 {dimension_numbers = #tpu.dot_dimension_numbers<[1], [0], [0], [1], [0, 0, 1, 1], [], []>} : vector<8x32xf32>, vector<32x256xf32>, vector<8x256xf32> -> vector<8x256xf32>
    %199 = arith.addf %181, %198 : vector<8x256xf32>
    %200 = vector.extract_strided_slice %114 {offsets = [7, 0, 0], sizes = [1, 8, 32], strides = [1, 1, 1]} : vector<9x8x32xf32> to vector<1x8x32xf32>
    %201 = vector.shape_cast %200 : vector<1x8x32xf32> to vector<8x32xf32>
    %cst_50 = arith.constant dense<0.000000e+00> : vector<8x256xf32>
    %202 = tpu.matmul %201, %130, %cst_50 {dimension_numbers = #tpu.dot_dimension_numbers<[1], [0], [0], [1], [0, 0, 1, 1], [], []>} : vector<8x32xf32>, vector<32x256xf32>, vector<8x256xf32> -> vector<8x256xf32>
    %203 = arith.addf %199, %202 : vector<8x256xf32>
    %204 = vector.extract_strided_slice %114 {offsets = [8, 0, 0], sizes = [1, 8, 32], strides = [1, 1, 1]} : vector<9x8x32xf32> to vector<1x8x32xf32>
    %205 = vector.shape_cast %204 : vector<1x8x32xf32> to vector<8x32xf32>
    %cst_51 = arith.constant dense<0.000000e+00> : vector<8x256xf32>
    %206 = tpu.matmul %205, %195, %cst_51 {dimension_numbers = #tpu.dot_dimension_numbers<[1], [0], [0], [1], [0, 0, 1, 1], [], []>} : vector<8x32xf32>, vector<32x256xf32>, vector<8x256xf32> -> vector<8x256xf32>
    %207 = arith.addf %203, %206 : vector<8x256xf32>
    %208 = vector.broadcast %116 : vector<8x1xf32> to vector<8x256xf32>
    %209 = arith.addf %207, %208 : vector<8x256xf32>
    %210 = arith.addf %209, %13 : vector<8x256xf32>
    %c0_52 = arith.constant 0 : index
    %c0_53 = arith.constant 0 : index
    %211 = vector.load %arg15[%c0_52, %c0_53] : memref<8x256xf32, #tpu.memory_space<vmem>>, vector<8x256xf32>
    tpu.vector_store %arg15[%c0_52, %c0_53], %210 {strides = array<i32>} : memref<8x256xf32, #tpu.memory_space<vmem>>, vector<8x256xf32>,
    %c1_i32_54 = arith.constant 1 : i32
    %212 = arith.cmpi eq, %arg1, %c1_i32_54 : i32
    %213 = arith.extui %212 : i1 to i32
    %c0_i32_55 = arith.constant 0 : i32
    %214 = arith.cmpi ne, %213, %c0_i32_55 : i32
    scf.if %214 {
      %c0_56 = arith.constant 0 : index
      %c0_57 = arith.constant 0 : index
      %215 = vector.load %arg16[%c0_56, %c0_57] : memref<8x256xf32, #tpu.memory_space<vmem>>, vector<8x256xf32>
      %216 = arith.addf %210, %215 : vector<8x256xf32>
      %c0_58 = arith.constant 0 : index
      %c0_59 = arith.constant 0 : index
      %c0_60 = arith.constant 0 : index
      %217 = vector.load %arg10[%c0_58, %c0_59, %c0_60] : memref<9x32x8xf32, #tpu.memory_space<vmem>>, vector<9x32x8xf32>
      %c0_61 = arith.constant 0 : index
      %c0_62 = arith.constant 0 : index
      %218 = vector.load %arg11[%c0_61, %c0_62] : memref<32x1xf32, #tpu.memory_space<vmem>>, vector<32x1xf32>
      %219 = vector.extract_strided_slice %216 {offsets = [0, 240], sizes = [8, 16], strides = [1, 1]} : vector<8x256xf32> to vector<8x16xf32>
      %220 = vector.extract_strided_slice %216 {offsets = [0, 0], sizes = [8, 240], strides = [1, 1]} : vector<8x256xf32> to vector<8x240xf32>
      %221 = tpu.concatenate %219, %220 in 1 : vector<8x16xf32>, vector<8x240xf32> -> vector<8x256xf32>
      %cst_63 = arith.constant 0.000000e+00 : f32
      %222 = vector.shape_cast %3 : vector<1x256xi1> to vector<1x256xi1>
      %223 = vector.broadcast %222 : vector<1x256xi1> to vector<8x256xi1>
      %224 = vector.broadcast %cst_63 : f32 to vector<8x256xf32>
      %225 = arith.select %223, %221, %224 : vector<8x256xi1>, vector<8x256xf32>
      %226 = vector.extract_strided_slice %216 {offsets = [0, 16], sizes = [8, 240], strides = [1, 1]} : vector<8x256xf32> to vector<8x240xf32>
      %227 = vector.extract_strided_slice %216 {offsets = [0, 0], sizes = [8, 16], strides = [1, 1]} : vector<8x256xf32> to vector<8x16xf32>
      %228 = tpu.concatenate %226, %227 in 1 : vector<8x240xf32>, vector<8x16xf32> -> vector<8x256xf32>
      %cst_64 = arith.constant 0.000000e+00 : f32
      %229 = vector.shape_cast %5 : vector<1x256xi1> to vector<1x256xi1>
      %230 = vector.broadcast %229 : vector<1x256xi1> to vector<8x256xi1>
      %231 = vector.broadcast %cst_64 : f32 to vector<8x256xf32>
      %232 = arith.select %230, %228, %231 : vector<8x256xi1>, vector<8x256xf32>
      %233 = vector.extract_strided_slice %225 {offsets = [0, 255], sizes = [8, 1], strides = [1, 1]} : vector<8x256xf32> to vector<8x1xf32>
      %234 = vector.extract_strided_slice %225 {offsets = [0, 0], sizes = [8, 255], strides = [1, 1]} : vector<8x256xf32> to vector<8x255xf32>
      %235 = tpu.concatenate %233, %234 in 1 : vector<8x1xf32>, vector<8x255xf32> -> vector<8x256xf32>
      %cst_65 = arith.constant 0.000000e+00 : f32
      %236 = vector.shape_cast %7 : vector<1x256xi1> to vector<1x256xi1>
      %237 = vector.broadcast %236 : vector<1x256xi1> to vector<8x256xi1>
      %238 = vector.broadcast %cst_65 : f32 to vector<8x256xf32>
      %239 = arith.select %237, %235, %238 : vector<8x256xi1>, vector<8x256xf32>
      %240 = vector.extract_strided_slice %225 {offsets = [0, 1], sizes = [8, 255], strides = [1, 1]} : vector<8x256xf32> to vector<8x255xf32>
      %241 = vector.extract_strided_slice %225 {offsets = [0, 0], sizes = [8, 1], strides = [1, 1]} : vector<8x256xf32> to vector<8x1xf32>
      %242 = tpu.concatenate %240, %241 in 1 : vector<8x255xf32>, vector<8x1xf32> -> vector<8x256xf32>
      %cst_66 = arith.constant 0.000000e+00 : f32
      %243 = vector.shape_cast %9 : vector<1x256xi1> to vector<1x256xi1>
      %244 = vector.broadcast %243 : vector<1x256xi1> to vector<8x256xi1>
      %245 = vector.broadcast %cst_66 : f32 to vector<8x256xf32>
      %246 = arith.select %244, %242, %245 : vector<8x256xi1>, vector<8x256xf32>
      %247 = vector.extract_strided_slice %217 {offsets = [0, 0, 0], sizes = [1, 32, 8], strides = [1, 1, 1]} : vector<9x32x8xf32> to vector<1x32x8xf32>
      %248 = vector.shape_cast %247 : vector<1x32x8xf32> to vector<32x8xf32>
      %cst_67 = arith.constant dense<0.000000e+00> : vector<32x256xf32>
      %249 = tpu.matmul %248, %239, %cst_67 {dimension_numbers = #tpu.dot_dimension_numbers<[1], [0], [0], [1], [0, 0, 1, 1], [], []>} : vector<32x8xf32>, vector<8x256xf32>, vector<32x256xf32> -> vector<32x256xf32>
      %250 = vector.extract_strided_slice %217 {offsets = [1, 0, 0], sizes = [1, 32, 8], strides = [1, 1, 1]} : vector<9x32x8xf32> to vector<1x32x8xf32>
      %251 = vector.shape_cast %250 : vector<1x32x8xf32> to vector<32x8xf32>
      %cst_68 = arith.constant dense<0.000000e+00> : vector<32x256xf32>
      %252 = tpu.matmul %251, %225, %cst_68 {dimension_numbers = #tpu.dot_dimension_numbers<[1], [0], [0], [1], [0, 0, 1, 1], [], []>} : vector<32x8xf32>, vector<8x256xf32>, vector<32x256xf32> -> vector<32x256xf32>
      %253 = arith.addf %249, %252 : vector<32x256xf32>
      %254 = vector.extract_strided_slice %217 {offsets = [2, 0, 0], sizes = [1, 32, 8], strides = [1, 1, 1]} : vector<9x32x8xf32> to vector<1x32x8xf32>
      %255 = vector.shape_cast %254 : vector<1x32x8xf32> to vector<32x8xf32>
      %cst_69 = arith.constant dense<0.000000e+00> : vector<32x256xf32>
      %256 = tpu.matmul %255, %246, %cst_69 {dimension_numbers = #tpu.dot_dimension_numbers<[1], [0], [0], [1], [0, 0, 1, 1], [], []>} : vector<32x8xf32>, vector<8x256xf32>, vector<32x256xf32> -> vector<32x256xf32>
      %257 = arith.addf %253, %256 : vector<32x256xf32>
      %258 = vector.extract_strided_slice %216 {offsets = [0, 255], sizes = [8, 1], strides = [1, 1]} : vector<8x256xf32> to vector<8x1xf32>
      %259 = vector.extract_strided_slice %216 {offsets = [0, 0], sizes = [8, 255], strides = [1, 1]} : vector<8x256xf32> to vector<8x255xf32>
      %260 = tpu.concatenate %258, %259 in 1 : vector<8x1xf32>, vector<8x255xf32> -> vector<8x256xf32>
      %cst_70 = arith.constant 0.000000e+00 : f32
      %261 = vector.shape_cast %7 : vector<1x256xi1> to vector<1x256xi1>
      %262 = vector.broadcast %261 : vector<1x256xi1> to vector<8x256xi1>
      %263 = vector.broadcast %cst_70 : f32 to vector<8x256xf32>
      %264 = arith.select %262, %260, %263 : vector<8x256xi1>, vector<8x256xf32>
      %265 = vector.extract_strided_slice %216 {offsets = [0, 1], sizes = [8, 255], strides = [1, 1]} : vector<8x256xf32> to vector<8x255xf32>
      %266 = vector.extract_strided_slice %216 {offsets = [0, 0], sizes = [8, 1], strides = [1, 1]} : vector<8x256xf32> to vector<8x1xf32>
      %267 = tpu.concatenate %265, %266 in 1 : vector<8x255xf32>, vector<8x1xf32> -> vector<8x256xf32>
      %cst_71 = arith.constant 0.000000e+00 : f32
      %268 = vector.shape_cast %9 : vector<1x256xi1> to vector<1x256xi1>
      %269 = vector.broadcast %268 : vector<1x256xi1> to vector<8x256xi1>
      %270 = vector.broadcast %cst_71 : f32 to vector<8x256xf32>
      %271 = arith.select %269, %267, %270 : vector<8x256xi1>, vector<8x256xf32>
      %272 = vector.extract_strided_slice %217 {offsets = [3, 0, 0], sizes = [1, 32, 8], strides = [1, 1, 1]} : vector<9x32x8xf32> to vector<1x32x8xf32>
      %273 = vector.shape_cast %272 : vector<1x32x8xf32> to vector<32x8xf32>
      %cst_72 = arith.constant dense<0.000000e+00> : vector<32x256xf32>
      %274 = tpu.matmul %273, %264, %cst_72 {dimension_numbers = #tpu.dot_dimension_numbers<[1], [0], [0], [1], [0, 0, 1, 1], [], []>} : vector<32x8xf32>, vector<8x256xf32>, vector<32x256xf32> -> vector<32x256xf32>
      %275 = arith.addf %257, %274 : vector<32x256xf32>
      %276 = vector.extract_strided_slice %217 {offsets = [4, 0, 0], sizes = [1, 32, 8], strides = [1, 1, 1]} : vector<9x32x8xf32> to vector<1x32x8xf32>
      %277 = vector.shape_cast %276 : vector<1x32x8xf32> to vector<32x8xf32>
      %cst_73 = arith.constant dense<0.000000e+00> : vector<32x256xf32>
      %278 = tpu.matmul %277, %216, %cst_73 {dimension_numbers = #tpu.dot_dimension_numbers<[1], [0], [0], [1], [0, 0, 1, 1], [], []>} : vector<32x8xf32>, vector<8x256xf32>, vector<32x256xf32> -> vector<32x256xf32>
      %279 = arith.addf %275, %278 : vector<32x256xf32>
      %280 = vector.extract_strided_slice %217 {offsets = [5, 0, 0], sizes = [1, 32, 8], strides = [1, 1, 1]} : vector<9x32x8xf32> to vector<1x32x8xf32>
      %281 = vector.shape_cast %280 : vector<1x32x8xf32> to vector<32x8xf32>
      %cst_74 = arith.constant dense<0.000000e+00> : vector<32x256xf32>
      %282 = tpu.matmul %281, %271, %cst_74 {dimension_numbers = #tpu.dot_dimension_numbers<[1], [0], [0], [1], [0, 0, 1, 1], [], []>} : vector<32x8xf32>, vector<8x256xf32>, vector<32x256xf32> -> vector<32x256xf32>
      %283 = arith.addf %279, %282 : vector<32x256xf32>
      %284 = vector.extract_strided_slice %232 {offsets = [0, 255], sizes = [8, 1], strides = [1, 1]} : vector<8x256xf32> to vector<8x1xf32>
      %285 = vector.extract_strided_slice %232 {offsets = [0, 0], sizes = [8, 255], strides = [1, 1]} : vector<8x256xf32> to vector<8x255xf32>
      %286 = tpu.concatenate %284, %285 in 1 : vector<8x1xf32>, vector<8x255xf32> -> vector<8x256xf32>
      %cst_75 = arith.constant 0.000000e+00 : f32
      %287 = vector.shape_cast %7 : vector<1x256xi1> to vector<1x256xi1>
      %288 = vector.broadcast %287 : vector<1x256xi1> to vector<8x256xi1>
      %289 = vector.broadcast %cst_75 : f32 to vector<8x256xf32>
      %290 = arith.select %288, %286, %289 : vector<8x256xi1>, vector<8x256xf32>
      %291 = vector.extract_strided_slice %232 {offsets = [0, 1], sizes = [8, 255], strides = [1, 1]} : vector<8x256xf32> to vector<8x255xf32>
      %292 = vector.extract_strided_slice %232 {offsets = [0, 0], sizes = [8, 1], strides = [1, 1]} : vector<8x256xf32> to vector<8x1xf32>
      %293 = tpu.concatenate %291, %292 in 1 : vector<8x255xf32>, vector<8x1xf32> -> vector<8x256xf32>
      %cst_76 = arith.constant 0.000000e+00 : f32
      %294 = vector.shape_cast %9 : vector<1x256xi1> to vector<1x256xi1>
      %295 = vector.broadcast %294 : vector<1x256xi1> to vector<8x256xi1>
      %296 = vector.broadcast %cst_76 : f32 to vector<8x256xf32>
      %297 = arith.select %295, %293, %296 : vector<8x256xi1>, vector<8x256xf32>
      %298 = vector.extract_strided_slice %217 {offsets = [6, 0, 0], sizes = [1, 32, 8], strides = [1, 1, 1]} : vector<9x32x8xf32> to vector<1x32x8xf32>
      %299 = vector.shape_cast %298 : vector<1x32x8xf32> to vector<32x8xf32>
      %cst_77 = arith.constant dense<0.000000e+00> : vector<32x256xf32>
      %300 = tpu.matmul %299, %290, %cst_77 {dimension_numbers = #tpu.dot_dimension_numbers<[1], [0], [0], [1], [0, 0, 1, 1], [], []>} : vector<32x8xf32>, vector<8x256xf32>, vector<32x256xf32> -> vector<32x256xf32>
      %301 = arith.addf %283, %300 : vector<32x256xf32>
      %302 = vector.extract_strided_slice %217 {offsets = [7, 0, 0], sizes = [1, 32, 8], strides = [1, 1, 1]} : vector<9x32x8xf32> to vector<1x32x8xf32>
      %303 = vector.shape_cast %302 : vector<1x32x8xf32> to vector<32x8xf32>
      %cst_78 = arith.constant dense<0.000000e+00> : vector<32x256xf32>
      %304 = tpu.matmul %303, %232, %cst_78 {dimension_numbers = #tpu.dot_dimension_numbers<[1], [0], [0], [1], [0, 0, 1, 1], [], []>} : vector<32x8xf32>, vector<8x256xf32>, vector<32x256xf32> -> vector<32x256xf32>
      %305 = arith.addf %301, %304 : vector<32x256xf32>
      %306 = vector.extract_strided_slice %217 {offsets = [8, 0, 0], sizes = [1, 32, 8], strides = [1, 1, 1]} : vector<9x32x8xf32> to vector<1x32x8xf32>
      %307 = vector.shape_cast %306 : vector<1x32x8xf32> to vector<32x8xf32>
      %cst_79 = arith.constant dense<0.000000e+00> : vector<32x256xf32>
      %308 = tpu.matmul %307, %297, %cst_79 {dimension_numbers = #tpu.dot_dimension_numbers<[1], [0], [0], [1], [0, 0, 1, 1], [], []>} : vector<32x8xf32>, vector<8x256xf32>, vector<32x256xf32> -> vector<32x256xf32>
      %309 = arith.addf %305, %308 : vector<32x256xf32>
      %310 = vector.broadcast %218 : vector<32x1xf32> to vector<32x256xf32>
      %311 = arith.addf %309, %310 : vector<32x256xf32>
      %c0_80 = arith.constant 0 : index
      %c0_81 = arith.constant 0 : index
      %c0_82 = arith.constant 0 : index
      %312 = vector.load %arg12[%c0_80, %c0_81, %c0_82] : memref<9x4x32xf32, #tpu.memory_space<vmem>>, vector<9x4x32xf32>
      %c0_83 = arith.constant 0 : index
      %c0_84 = arith.constant 0 : index
      %313 = vector.load %arg13[%c0_83, %c0_84] : memref<4x1xf32, #tpu.memory_space<vmem>>, vector<4x1xf32>
      %314 = vector.extract_strided_slice %311 {offsets = [0, 240], sizes = [32, 16], strides = [1, 1]} : vector<32x256xf32> to vector<32x16xf32>
      %315 = vector.extract_strided_slice %311 {offsets = [0, 0], sizes = [32, 240], strides = [1, 1]} : vector<32x256xf32> to vector<32x240xf32>
      %316 = tpu.concatenate %314, %315 in 1 : vector<32x16xf32>, vector<32x240xf32> -> vector<32x256xf32>
      %cst_85 = arith.constant 0.000000e+00 : f32
      %317 = vector.shape_cast %3 : vector<1x256xi1> to vector<1x256xi1>
      %318 = vector.broadcast %317 : vector<1x256xi1> to vector<32x256xi1>
      %319 = vector.broadcast %cst_85 : f32 to vector<32x256xf32>
      %320 = arith.select %318, %316, %319 : vector<32x256xi1>, vector<32x256xf32>
      %321 = vector.extract_strided_slice %311 {offsets = [0, 16], sizes = [32, 240], strides = [1, 1]} : vector<32x256xf32> to vector<32x240xf32>
      %322 = vector.extract_strided_slice %311 {offsets = [0, 0], sizes = [32, 16], strides = [1, 1]} : vector<32x256xf32> to vector<32x16xf32>
      %323 = tpu.concatenate %321, %322 in 1 : vector<32x240xf32>, vector<32x16xf32> -> vector<32x256xf32>
      %cst_86 = arith.constant 0.000000e+00 : f32
      %324 = vector.shape_cast %5 : vector<1x256xi1> to vector<1x256xi1>
      %325 = vector.broadcast %324 : vector<1x256xi1> to vector<32x256xi1>
      %326 = vector.broadcast %cst_86 : f32 to vector<32x256xf32>
      %327 = arith.select %325, %323, %326 : vector<32x256xi1>, vector<32x256xf32>
      %328 = vector.extract_strided_slice %320 {offsets = [0, 255], sizes = [32, 1], strides = [1, 1]} : vector<32x256xf32> to vector<32x1xf32>
      %329 = vector.extract_strided_slice %320 {offsets = [0, 0], sizes = [32, 255], strides = [1, 1]} : vector<32x256xf32> to vector<32x255xf32>
      %330 = tpu.concatenate %328, %329 in 1 : vector<32x1xf32>, vector<32x255xf32> -> vector<32x256xf32>
      %cst_87 = arith.constant 0.000000e+00 : f32
      %331 = vector.shape_cast %7 : vector<1x256xi1> to vector<1x256xi1>
      %332 = vector.broadcast %331 : vector<1x256xi1> to vector<32x256xi1>
      %333 = vector.broadcast %cst_87 : f32 to vector<32x256xf32>
      %334 = arith.select %332, %330, %333 : vector<32x256xi1>, vector<32x256xf32>
      %335 = vector.extract_strided_slice %320 {offsets = [0, 1], sizes = [32, 255], strides = [1, 1]} : vector<32x256xf32> to vector<32x255xf32>
      %336 = vector.extract_strided_slice %320 {offsets = [0, 0], sizes = [32, 1], strides = [1, 1]} : vector<32x256xf32> to vector<32x1xf32>
      %337 = tpu.concatenate %335, %336 in 1 : vector<32x255xf32>, vector<32x1xf32> -> vector<32x256xf32>
      %cst_88 = arith.constant 0.000000e+00 : f32
      %338 = vector.shape_cast %9 : vector<1x256xi1> to vector<1x256xi1>
      %339 = vector.broadcast %338 : vector<1x256xi1> to vector<32x256xi1>
      %340 = vector.broadcast %cst_88 : f32 to vector<32x256xf32>
      %341 = arith.select %339, %337, %340 : vector<32x256xi1>, vector<32x256xf32>
      %342 = vector.extract_strided_slice %312 {offsets = [0, 0, 0], sizes = [1, 4, 32], strides = [1, 1, 1]} : vector<9x4x32xf32> to vector<1x4x32xf32>
      %343 = vector.shape_cast %342 : vector<1x4x32xf32> to vector<4x32xf32>
      %cst_89 = arith.constant dense<0.000000e+00> : vector<4x256xf32>
      %344 = tpu.matmul %343, %334, %cst_89 {dimension_numbers = #tpu.dot_dimension_numbers<[1], [0], [0], [1], [0, 0, 1, 1], [], []>} : vector<4x32xf32>, vector<32x256xf32>, vector<4x256xf32> -> vector<4x256xf32>
      %345 = vector.extract_strided_slice %312 {offsets = [1, 0, 0], sizes = [1, 4, 32], strides = [1, 1, 1]} : vector<9x4x32xf32> to vector<1x4x32xf32>
      %346 = vector.shape_cast %345 : vector<1x4x32xf32> to vector<4x32xf32>
      %cst_90 = arith.constant dense<0.000000e+00> : vector<4x256xf32>
      %347 = tpu.matmul %346, %320, %cst_90 {dimension_numbers = #tpu.dot_dimension_numbers<[1], [0], [0], [1], [0, 0, 1, 1], [], []>} : vector<4x32xf32>, vector<32x256xf32>, vector<4x256xf32> -> vector<4x256xf32>
      %348 = arith.addf %344, %347 : vector<4x256xf32>
      %349 = vector.extract_strided_slice %312 {offsets = [2, 0, 0], sizes = [1, 4, 32], strides = [1, 1, 1]} : vector<9x4x32xf32> to vector<1x4x32xf32>
      %350 = vector.shape_cast %349 : vector<1x4x32xf32> to vector<4x32xf32>
      %cst_91 = arith.constant dense<0.000000e+00> : vector<4x256xf32>
      %351 = tpu.matmul %350, %341, %cst_91 {dimension_numbers = #tpu.dot_dimension_numbers<[1], [0], [0], [1], [0, 0, 1, 1], [], []>} : vector<4x32xf32>, vector<32x256xf32>, vector<4x256xf32> -> vector<4x256xf32>
      %352 = arith.addf %348, %351 : vector<4x256xf32>
      %353 = vector.extract_strided_slice %311 {offsets = [0, 255], sizes = [32, 1], strides = [1, 1]} : vector<32x256xf32> to vector<32x1xf32>
      %354 = vector.extract_strided_slice %311 {offsets = [0, 0], sizes = [32, 255], strides = [1, 1]} : vector<32x256xf32> to vector<32x255xf32>
      %355 = tpu.concatenate %353, %354 in 1 : vector<32x1xf32>, vector<32x255xf32> -> vector<32x256xf32>
      %cst_92 = arith.constant 0.000000e+00 : f32
      %356 = vector.shape_cast %7 : vector<1x256xi1> to vector<1x256xi1>
      %357 = vector.broadcast %356 : vector<1x256xi1> to vector<32x256xi1>
      %358 = vector.broadcast %cst_92 : f32 to vector<32x256xf32>
      %359 = arith.select %357, %355, %358 : vector<32x256xi1>, vector<32x256xf32>
      %360 = vector.extract_strided_slice %311 {offsets = [0, 1], sizes = [32, 255], strides = [1, 1]} : vector<32x256xf32> to vector<32x255xf32>
      %361 = vector.extract_strided_slice %311 {offsets = [0, 0], sizes = [32, 1], strides = [1, 1]} : vector<32x256xf32> to vector<32x1xf32>
      %362 = tpu.concatenate %360, %361 in 1 : vector<32x255xf32>, vector<32x1xf32> -> vector<32x256xf32>
      %cst_93 = arith.constant 0.000000e+00 : f32
      %363 = vector.shape_cast %9 : vector<1x256xi1> to vector<1x256xi1>
      %364 = vector.broadcast %363 : vector<1x256xi1> to vector<32x256xi1>
      %365 = vector.broadcast %cst_93 : f32 to vector<32x256xf32>
      %366 = arith.select %364, %362, %365 : vector<32x256xi1>, vector<32x256xf32>
      %367 = vector.extract_strided_slice %312 {offsets = [3, 0, 0], sizes = [1, 4, 32], strides = [1, 1, 1]} : vector<9x4x32xf32> to vector<1x4x32xf32>
      %368 = vector.shape_cast %367 : vector<1x4x32xf32> to vector<4x32xf32>
      %cst_94 = arith.constant dense<0.000000e+00> : vector<4x256xf32>
      %369 = tpu.matmul %368, %359, %cst_94 {dimension_numbers = #tpu.dot_dimension_numbers<[1], [0], [0], [1], [0, 0, 1, 1], [], []>} : vector<4x32xf32>, vector<32x256xf32>, vector<4x256xf32> -> vector<4x256xf32>
      %370 = arith.addf %352, %369 : vector<4x256xf32>
      %371 = vector.extract_strided_slice %312 {offsets = [4, 0, 0], sizes = [1, 4, 32], strides = [1, 1, 1]} : vector<9x4x32xf32> to vector<1x4x32xf32>
      %372 = vector.shape_cast %371 : vector<1x4x32xf32> to vector<4x32xf32>
      %cst_95 = arith.constant dense<0.000000e+00> : vector<4x256xf32>
      %373 = tpu.matmul %372, %311, %cst_95 {dimension_numbers = #tpu.dot_dimension_numbers<[1], [0], [0], [1], [0, 0, 1, 1], [], []>} : vector<4x32xf32>, vector<32x256xf32>, vector<4x256xf32> -> vector<4x256xf32>
      %374 = arith.addf %370, %373 : vector<4x256xf32>
      %375 = vector.extract_strided_slice %312 {offsets = [5, 0, 0], sizes = [1, 4, 32], strides = [1, 1, 1]} : vector<9x4x32xf32> to vector<1x4x32xf32>
      %376 = vector.shape_cast %375 : vector<1x4x32xf32> to vector<4x32xf32>
      %cst_96 = arith.constant dense<0.000000e+00> : vector<4x256xf32>
      %377 = tpu.matmul %376, %366, %cst_96 {dimension_numbers = #tpu.dot_dimension_numbers<[1], [0], [0], [1], [0, 0, 1, 1], [], []>} : vector<4x32xf32>, vector<32x256xf32>, vector<4x256xf32> -> vector<4x256xf32>
      %378 = arith.addf %374, %377 : vector<4x256xf32>
      %379 = vector.extract_strided_slice %327 {offsets = [0, 255], sizes = [32, 1], strides = [1, 1]} : vector<32x256xf32> to vector<32x1xf32>
      %380 = vector.extract_strided_slice %327 {offsets = [0, 0], sizes = [32, 255], strides = [1, 1]} : vector<32x256xf32> to vector<32x255xf32>
      %381 = tpu.concatenate %379, %380 in 1 : vector<32x1xf32>, vector<32x255xf32> -> vector<32x256xf32>
      %cst_97 = arith.constant 0.000000e+00 : f32
      %382 = vector.shape_cast %7 : vector<1x256xi1> to vector<1x256xi1>
      %383 = vector.broadcast %382 : vector<1x256xi1> to vector<32x256xi1>
      %384 = vector.broadcast %cst_97 : f32 to vector<32x256xf32>
      %385 = arith.select %383, %381, %384 : vector<32x256xi1>, vector<32x256xf32>
      %386 = vector.extract_strided_slice %327 {offsets = [0, 1], sizes = [32, 255], strides = [1, 1]} : vector<32x256xf32> to vector<32x255xf32>
      %387 = vector.extract_strided_slice %327 {offsets = [0, 0], sizes = [32, 1], strides = [1, 1]} : vector<32x256xf32> to vector<32x1xf32>
      %388 = tpu.concatenate %386, %387 in 1 : vector<32x255xf32>, vector<32x1xf32> -> vector<32x256xf32>
      %cst_98 = arith.constant 0.000000e+00 : f32
      %389 = vector.shape_cast %9 : vector<1x256xi1> to vector<1x256xi1>
      %390 = vector.broadcast %389 : vector<1x256xi1> to vector<32x256xi1>
      %391 = vector.broadcast %cst_98 : f32 to vector<32x256xf32>
      %392 = arith.select %390, %388, %391 : vector<32x256xi1>, vector<32x256xf32>
      %393 = vector.extract_strided_slice %312 {offsets = [6, 0, 0], sizes = [1, 4, 32], strides = [1, 1, 1]} : vector<9x4x32xf32> to vector<1x4x32xf32>
      %394 = vector.shape_cast %393 : vector<1x4x32xf32> to vector<4x32xf32>
      %cst_99 = arith.constant dense<0.000000e+00> : vector<4x256xf32>
      %395 = tpu.matmul %394, %385, %cst_99 {dimension_numbers = #tpu.dot_dimension_numbers<[1], [0], [0], [1], [0, 0, 1, 1], [], []>} : vector<4x32xf32>, vector<32x256xf32>, vector<4x256xf32> -> vector<4x256xf32>
      %396 = arith.addf %378, %395 : vector<4x256xf32>
      %397 = vector.extract_strided_slice %312 {offsets = [7, 0, 0], sizes = [1, 4, 32], strides = [1, 1, 1]} : vector<9x4x32xf32> to vector<1x4x32xf32>
      %398 = vector.shape_cast %397 : vector<1x4x32xf32> to vector<4x32xf32>
      %cst_100 = arith.constant dense<0.000000e+00> : vector<4x256xf32>
      %399 = tpu.matmul %398, %327, %cst_100 {dimension_numbers = #tpu.dot_dimension_numbers<[1], [0], [0], [1], [0, 0, 1, 1], [], []>} : vector<4x32xf32>, vector<32x256xf32>, vector<4x256xf32> -> vector<4x256xf32>
      %400 = arith.addf %396, %399 : vector<4x256xf32>
      %401 = vector.extract_strided_slice %312 {offsets = [8, 0, 0], sizes = [1, 4, 32], strides = [1, 1, 1]} : vector<9x4x32xf32> to vector<1x4x32xf32>
      %402 = vector.shape_cast %401 : vector<1x4x32xf32> to vector<4x32xf32>
      %cst_101 = arith.constant dense<0.000000e+00> : vector<4x256xf32>
      %403 = tpu.matmul %402, %392, %cst_101 {dimension_numbers = #tpu.dot_dimension_numbers<[1], [0], [0], [1], [0, 0, 1, 1], [], []>} : vector<4x32xf32>, vector<32x256xf32>, vector<4x256xf32> -> vector<4x256xf32>
      %404 = arith.addf %400, %403 : vector<4x256xf32>
      %405 = vector.broadcast %313 : vector<4x1xf32> to vector<4x256xf32>
      %406 = arith.addf %404, %405 : vector<4x256xf32>
      %c0_102 = arith.constant 0 : index
      %c0_103 = arith.constant 0 : index
      %c0_104 = arith.constant 0 : index
      %407 = vector.load %arg14[%c0_102, %c0_103, %c0_104] : memref<1x4x256xf32, #tpu.memory_space<vmem>>, vector<1x4x256xf32>
      %408 = vector.shape_cast %407 : vector<1x4x256xf32> to vector<4x256xf32>
      %409 = vector.shape_cast %406 : vector<4x256xf32> to vector<1x4x256xf32>
      tpu.vector_store %arg14[%c0_102, %c0_103, %c0_104], %409 {strides = array<i32>} : memref<1x4x256xf32, #tpu.memory_space<vmem>>, vector<1x4x256xf32>,
    } else {
    }
    return
  }
  func.func @transform_0(%arg0: i32, %arg1: i32) -> (i32, i32) {
    %c0_i32 = arith.constant 0 : i32
    %c0_i32_0 = arith.constant 0 : i32
    %c0_i32_1 = arith.constant 0 : i32
    return %c0_i32, %c0_i32_0 : i32, i32
  }
  func.func @transform_1(%arg0: i32, %arg1: i32) -> (i32, i32, i32) {
    %c0_i32 = arith.constant 0 : i32
    %c0_i32_0 = arith.constant 0 : i32
    %c0_i32_1 = arith.constant 0 : i32
    return %arg0, %c0_i32, %c0_i32_0 : i32, i32, i32
  }
  func.func @transform_2(%arg0: i32, %arg1: i32) -> (i32, i32, i32) {
    %c0_i32 = arith.constant 0 : i32
    %c0_i32_0 = arith.constant 0 : i32
    %c0_i32_1 = arith.constant 0 : i32
    %c0_i32_2 = arith.constant 0 : i32
    return %c0_i32, %c0_i32_0, %c0_i32_1 : i32, i32, i32
  }
  func.func @transform_3(%arg0: i32, %arg1: i32) -> (i32, i32) {
    %c0_i32 = arith.constant 0 : i32
    %c0_i32_0 = arith.constant 0 : i32
    %c0_i32_1 = arith.constant 0 : i32
    return %c0_i32, %c0_i32_0 : i32, i32
  }
  func.func @transform_4(%arg0: i32, %arg1: i32) -> (i32, i32, i32, i32) {
    %c0_i32 = arith.constant 0 : i32
    %c0_i32_0 = arith.constant 0 : i32
    %c0_i32_1 = arith.constant 0 : i32
    %c0_i32_2 = arith.constant 0 : i32
    return %arg1, %c0_i32, %c0_i32_0, %c0_i32_1 : i32, i32, i32, i32
  }
  func.func @transform_5(%arg0: i32, %arg1: i32) -> (i32, i32, i32) {
    %c0_i32 = arith.constant 0 : i32
    %c0_i32_0 = arith.constant 0 : i32
    %c0_i32_1 = arith.constant 0 : i32
    return %arg1, %c0_i32, %c0_i32_0 : i32, i32, i32
  }
  func.func @transform_6(%arg0: i32, %arg1: i32) -> (i32, i32, i32, i32) {
    %c0_i32 = arith.constant 0 : i32
    %c0_i32_0 = arith.constant 0 : i32
    %c0_i32_1 = arith.constant 0 : i32
    %c0_i32_2 = arith.constant 0 : i32
    return %arg1, %c0_i32, %c0_i32_0, %c0_i32_1 : i32, i32, i32, i32
  }
  func.func @transform_7(%arg0: i32, %arg1: i32) -> (i32, i32, i32) {
    %c0_i32 = arith.constant 0 : i32
    %c0_i32_0 = arith.constant 0 : i32
    %c0_i32_1 = arith.constant 0 : i32
    return %arg1, %c0_i32, %c0_i32_0 : i32, i32, i32
  }
  func.func @transform_8(%arg0: i32, %arg1: i32) -> (i32, i32, i32) {
    %c0_i32 = arith.constant 0 : i32
    %c0_i32_0 = arith.constant 0 : i32
    %c0_i32_1 = arith.constant 0 : i32
    %c0_i32_2 = arith.constant 0 : i32
    return %c0_i32, %c0_i32_0, %c0_i32_1 : i32, i32, i32
  }
  func.func @transform_9(%arg0: i32, %arg1: i32) -> (i32, i32) {
    %c0_i32 = arith.constant 0 : i32
    %c0_i32_0 = arith.constant 0 : i32
    %c0_i32_1 = arith.constant 0 : i32
    return %c0_i32, %c0_i32_0 : i32, i32
  }
  func.func @transform_10(%arg0: i32, %arg1: i32) -> (i32, i32, i32) {
    %c0_i32 = arith.constant 0 : i32
    %c0_i32_0 = arith.constant 0 : i32
    %c0_i32_1 = arith.constant 0 : i32
    %c0_i32_2 = arith.constant 0 : i32
    return %c0_i32, %c0_i32_0, %c0_i32_1 : i32, i32, i32
  }
  func.func @transform_11(%arg0: i32, %arg1: i32) -> (i32, i32) {
    %c0_i32 = arith.constant 0 : i32
    %c0_i32_0 = arith.constant 0 : i32
    %c0_i32_1 = arith.constant 0 : i32
    return %c0_i32, %c0_i32_0 : i32, i32
  }
  func.func @transform_12(%arg0: i32, %arg1: i32) -> (i32, i32, i32) {
    %c0_i32 = arith.constant 0 : i32
    %c0_i32_0 = arith.constant 0 : i32
    %c0_i32_1 = arith.constant 0 : i32
    return %arg0, %c0_i32, %c0_i32_0 : i32, i32, i32
  }
}

</mosaic_0001>

<llo_original>
// kernel: wdsr_forward.1
$region0: #{wdsr_forward.1}
  #allocation0 [shape = 'u32[]', space=smem, size = 0x4, offset = 0x4, fixed_abs, tag = 'smem constant byte address 0x4 - core index']
  #allocation1 [shape = 'u32[144,128]{1,0:T(1,128)}', space=vmem, size = 0x12000, scoped, tag = 'internal scratch']
  #allocation2 [shape = 'f32[8,256]{1,0:T(8,128)}', space=vmem, size = 0x2000, scoped, tag = 'scratch operand']
  #allocation3 [shape = 'f32[8,256]{1,0:T(8,128)}', space=vmem, size = 0x2000, scoped, tag = 'scratch operand']
  %s0 = inlined_call_operand.vmem [shape: s32[1,256], index: 0, kind: input, shape index: {}]
  %s1 = inlined_call_operand.vmem [shape: f32[2,1,256], index: 1, kind: input, shape index: {}]
  %s2 = inlined_call_operand.vmem [shape: f32[9,8,1], index: 2, kind: input, shape index: {}]
  %s3 = inlined_call_operand.vmem [shape: f32[8,1], index: 3, kind: input, shape index: {}]
  %s4 = inlined_call_operand.vmem [shape: f32[2,9,32,8], index: 4, kind: input, shape index: {}]
  %s5 = inlined_call_operand.vmem [shape: f32[2,32,1], index: 5, kind: input, shape index: {}]
  %s6 = inlined_call_operand.vmem [shape: f32[2,9,8,32], index: 6, kind: input, shape index: {}]
  %s7 = inlined_call_operand.vmem [shape: f32[2,8,1], index: 7, kind: input, shape index: {}]
  %s8 = inlined_call_operand.vmem [shape: f32[9,32,8], index: 8, kind: input, shape index: {}]
  %s9 = inlined_call_operand.vmem [shape: f32[32,1], index: 9, kind: input, shape index: {}]
  %s10 = inlined_call_operand.vmem [shape: f32[9,4,32], index: 10, kind: input, shape index: {}]
  %s11 = inlined_call_operand.vmem [shape: f32[4,1], index: 11, kind: input, shape index: {}]
  %s12 = inlined_call_operand.vmem [shape: f32[2,4,256], index: 12, kind: output, shape index: {}]
  %s13 = sld [smem:[#allocation0]]
  $region89: #{wdsr_forward.1} parent=0
    _
  %s15 = ssub.s32 1, %s13
  %s16 = scalar_select 0, %s15, %s13
  loop: start=0, step=1, limit=6
  $region2: #{wdsr_forward.1} parent=0 // loop_pre_header
    _
  $region3: #{wdsr_forward.1} parent=0 // loop_header
    %s18 = sphi 0, %s22
    %p19 = scmp.ge.s32.totalorder %s18, 6
    %s25 = sphi 0, %s37
    %s26 = sphi 0, %s33
    %s27 = sphi 0, %s25
    %s28 = sphi 0, %s26
    %s29 = sphi 0, %s27
    %s30 = sphi 0, %s28
    %s38 = sphi 0, %s38
    %s40 = sphi 0, %s38
    %s41 = sphi 0, %s40
    %s55 = sphi 0, %s41
    %s61 = sphi 0, %s63
    %s64 = sphi 0, %s61
    %s65 = sphi 0, %s64
    %s81 = sphi 0, %s65
    %s85 = sphi 0, %s85
    %s87 = sphi 0, %s85
    %s88 = sphi 0, %s87
    %s102 = sphi 0, %s88
    %s106 = sphi 0, %s106
    %s108 = sphi 0, %s106
    %s109 = sphi 0, %s108
    %s123 = sphi 0, %s109
    %s129 = sphi 0, %s131
    %s132 = sphi 0, %s129
    %s133 = sphi 0, %s132
    %s149 = sphi 0, %s133
    %s155 = sphi 0, %s157
    %s158 = sphi 0, %s155
    %s159 = sphi 0, %s158
    %s175 = sphi 0, %s159
    %s181 = sphi 0, %s183
    %s184 = sphi 0, %s181
    %s185 = sphi 0, %s184
    %s201 = sphi 0, %s185
    %s207 = sphi 0, %s209
    %s210 = sphi 0, %s207
    %s211 = sphi 0, %s210
    %s227 = sphi 0, %s211
    %s231 = sphi 0, %s231
    %s233 = sphi 0, %s231
    %s234 = sphi 0, %s233
    %s248 = sphi 0, %s234
    %s252 = sphi 0, %s252
    %s254 = sphi 0, %s252
    %s255 = sphi 0, %s254
    %s269 = sphi 0, %s255
    %s273 = sphi 0, %s273
    %s275 = sphi 0, %s273
    %s276 = sphi 0, %s275
    %s290 = sphi 0, %s276
    %s294 = sphi 0, %s294
    %s296 = sphi 0, %s294
    %s297 = sphi 0, %s296
    %s311 = sphi 0, %s297
    %s317 = sphi 0, %s319
    %s320 = sphi 0, %s317
    %s321 = sphi 0, %s320
    %s337 = sphi 0, %s321
  $region4: #{wdsr_forward.1} parent=0 // loop_header_branch
    %21 = sbr.rel (%p19) target = $region8
  $region5: #{wdsr_forward.1} parent=0 // loop_body
    %s23 = ssub.s32 %s18, 1
    %s24 = ssub.s32 %s18, 2
    %s31 = sadd.s32 1, %s26
    %p32 = scmp.ge.s32.totalorder %s31, 2
    %s33 = scalar_select %p32, 0, %s31
    %s34 = sadd.s32 1, %s25
    %s35 = scalar_select %p32, %s34, %s25
    %p36 = scmp.ge.s32.totalorder %s35, 2
    %s37 = scalar_select %p36, 0, %s35
    %s39 = sadd.s32 %s38, 1
    %p42 = scmp.eq.s32.totalorder %s18, 3
    %p43 = scmp.ne.s32.totalorder %s38, %s40
    %p44 = scmp.eq.s32.totalorder %s18, 0
    %p45 = por %p43, %p44
    %p46 = scmp.ne.s32.totalorder %s38, %s40
    %p47 = scmp.eq.s32.totalorder %s23, 3
    %p48 = por %p46, %p47
    %p49 = scmp.ne.s32.totalorder %s40, %s41
    %p50 = scmp.eq.s32.totalorder %s23, 0
    %p51 = por %p49, %p50
    %p52 = scmp.ne.s32.totalorder %s40, %s41
    %p53 = scmp.eq.s32.totalorder %s24, 3
    %p54 = por %p52, %p53
    %p56 = scmp.ne.s32.totalorder %s41, %s55
    %p57 = scmp.eq.s32.totalorder %s24, 0
    %p58 = por %p56, %p57
    %s59 = ssub.s32 %s25, %s37
    %p60 = scmp.eq.s32.totalorder %s59, 0
    %s62 = sadd.s32 %s61, 1
    %s63 = scalar_select %p60, %s61, %s62
    %p66 = pneg %p60
    %p67 = scmp.eq.s32.totalorder %s18, 3
    %p68 = por %p66, %p67
    %p69 = scmp.ne.s32.totalorder %s61, %s64
    %p70 = scmp.eq.s32.totalorder %s18, 0
    %p71 = por %p69, %p70
    %p72 = scmp.ne.s32.totalorder %s61, %s64
    %p73 = scmp.eq.s32.totalorder %s23, 3
    %p74 = por %p72, %p73
    %p75 = scmp.ne.s32.totalorder %s64, %s65
    %p76 = scmp.eq.s32.totalorder %s23, 0
    %p77 = por %p75, %p76
    %p78 = scmp.ne.s32.totalorder %s64, %s65
    %p79 = scmp.eq.s32.totalorder %s24, 3
    %p80 = por %p78, %p79
    %p82 = scmp.ne.s32.totalorder %s65, %s81
    %p83 = scmp.eq.s32.totalorder %s24, 0
    %p84 = por %p82, %p83
    %s86 = sadd.s32 %s85, 1
    %p89 = scmp.eq.s32.totalorder %s18, 3
    %p90 = scmp.ne.s32.totalorder %s85, %s87
    %p91 = scmp.eq.s32.totalorder %s18, 0
    %p92 = por %p90, %p91
    %p93 = scmp.ne.s32.totalorder %s85, %s87
    %p94 = scmp.eq.s32.totalorder %s23, 3
    %p95 = por %p93, %p94
    %p96 = scmp.ne.s32.totalorder %s87, %s88
    %p97 = scmp.eq.s32.totalorder %s23, 0
    %p98 = por %p96, %p97
    %p99 = scmp.ne.s32.totalorder %s87, %s88
    %p100 = scmp.eq.s32.totalorder %s24, 3
    %p101 = por %p99, %p100
    %p103 = scmp.ne.s32.totalorder %s88, %s102
    %p104 = scmp.eq.s32.totalorder %s24, 0
    %p105 = por %p103, %p104
    %s107 = sadd.s32 %s106, 1
    %p110 = scmp.eq.s32.totalorder %s18, 3
    %p111 = scmp.ne.s32.totalorder %s106, %s108
    %p112 = scmp.eq.s32.totalorder %s18, 0
    %p113 = por %p111, %p112
    %p114 = scmp.ne.s32.totalorder %s106, %s108
    %p115 = scmp.eq.s32.totalorder %s23, 3
    %p116 = por %p114, %p115
    %p117 = scmp.ne.s32.totalorder %s108, %s109
    %p118 = scmp.eq.s32.totalorder %s23, 0
    %p119 = por %p117, %p118
    %p120 = scmp.ne.s32.totalorder %s108, %s109
    %p121 = scmp.eq.s32.totalorder %s24, 3
    %p122 = por %p120, %p121
    %p124 = scmp.ne.s32.totalorder %s109, %s123
    %p125 = scmp.eq.s32.totalorder %s24, 0
    %p126 = por %p124, %p125
    %s127 = ssub.s32 %s26, %s33
    %p128 = scmp.eq.s32.totalorder %s127, 0
    %s130 = sadd.s32 %s129, 1
    %s131 = scalar_select %p128, %s129, %s130
    %p134 = pneg %p128
    %p135 = scmp.eq.s32.totalorder %s18, 3
    %p136 = por %p134, %p135
    %p137 = scmp.ne.s32.totalorder %s129, %s132
    %p138 = scmp.eq.s32.totalorder %s18, 0
    %p139 = por %p137, %p138
    %p140 = scmp.ne.s32.totalorder %s129, %s132
    %p141 = scmp.eq.s32.totalorder %s23, 3
    %p142 = por %p140, %p141
    %p143 = scmp.ne.s32.totalorder %s132, %s133
    %p144 = scmp.eq.s32.totalorder %s23, 0
    %p145 = por %p143, %p144
    %p146 = scmp.ne.s32.totalorder %s132, %s133
    %p147 = scmp.eq.s32.totalorder %s24, 3
    %p148 = por %p146, %p147
    %p150 = scmp.ne.s32.totalorder %s133, %s149
    %p151 = scmp.eq.s32.totalorder %s24, 0
    %p152 = por %p150, %p151
    %s153 = ssub.s32 %s26, %s33
    %p154 = scmp.eq.s32.totalorder %s153, 0
    %s156 = sadd.s32 %s155, 1
    %s157 = scalar_select %p154, %s155, %s156
    %p160 = pneg %p154
    %p161 = scmp.eq.s32.totalorder %s18, 3
    %p162 = por %p160, %p161
    %p163 = scmp.ne.s32.totalorder %s155, %s158
    %p164 = scmp.eq.s32.totalorder %s18, 0
    %p165 = por %p163, %p164
    %p166 = scmp.ne.s32.totalorder %s155, %s158
    %p167 = scmp.eq.s32.totalorder %s23, 3
    %p168 = por %p166, %p167
    %p169 = scmp.ne.s32.totalorder %s158, %s159
    %p170 = scmp.eq.s32.totalorder %s23, 0
    %p171 = por %p169, %p170
    %p172 = scmp.ne.s32.totalorder %s158, %s159
    %p173 = scmp.eq.s32.totalorder %s24, 3
    %p174 = por %p172, %p173
    %p176 = scmp.ne.s32.totalorder %s159, %s175
    %p177 = scmp.eq.s32.totalorder %s24, 0
    %p178 = por %p176, %p177
    %s179 = ssub.s32 %s26, %s33
    %p180 = scmp.eq.s32.totalorder %s179, 0
    %s182 = sadd.s32 %s181, 1
    %s183 = scalar_select %p180, %s181, %s182
    %p186 = pneg %p180
    %p187 = scmp.eq.s32.totalorder %s18, 3
    %p188 = por %p186, %p187
    %p189 = scmp.ne.s32.totalorder %s181, %s184
    %p190 = scmp.eq.s32.totalorder %s18, 0
    %p191 = por %p189, %p190
    %p192 = scmp.ne.s32.totalorder %s181, %s184
    %p193 = scmp.eq.s32.totalorder %s23, 3
    %p194 = por %p192, %p193
    %p195 = scmp.ne.s32.totalorder %s184, %s185
    %p196 = scmp.eq.s32.totalorder %s23, 0
    %p197 = por %p195, %p196
    %p198 = scmp.ne.s32.totalorder %s184, %s185
    %p199 = scmp.eq.s32.totalorder %s24, 3
    %p200 = por %p198, %p199
    %p202 = scmp.ne.s32.totalorder %s185, %s201
    %p203 = scmp.eq.s32.totalorder %s24, 0
    %p204 = por %p202, %p203
    %s205 = ssub.s32 %s26, %s33
    %p206 = scmp.eq.s32.totalorder %s205, 0
    %s208 = sadd.s32 %s207, 1
    %s209 = scalar_select %p206, %s207, %s208
    %p212 = pneg %p206
    %p213 = scmp.eq.s32.totalorder %s18, 3
    %p214 = por %p212, %p213
    %p215 = scmp.ne.s32.totalorder %s207, %s210
    %p216 = scmp.eq.s32.totalorder %s18, 0
    %p217 = por %p215, %p216
    %p218 = scmp.ne.s32.totalorder %s207, %s210
    %p219 = scmp.eq.s32.totalorder %s23, 3
    %p220 = por %p218, %p219
    %p221 = scmp.ne.s32.totalorder %s210, %s211
    %p222 = scmp.eq.s32.totalorder %s23, 0
    %p223 = por %p221, %p222
    %p224 = scmp.ne.s32.totalorder %s210, %s211
    %p225 = scmp.eq.s32.totalorder %s24, 3
    %p226 = por %p224, %p225
    %p228 = scmp.ne.s32.totalorder %s211, %s227
    %p229 = scmp.eq.s32.totalorder %s24, 0
    %p230 = por %p228, %p229
    %s232 = sadd.s32 %s231, 1
    %p235 = scmp.eq.s32.totalorder %s18, 3
    %p236 = scmp.ne.s32.totalorder %s231, %s233
    %p237 = scmp.eq.s32.totalorder %s18, 0
    %p238 = por %p236, %p237
    %p239 = scmp.ne.s32.totalorder %s231, %s233
    %p240 = scmp.eq.s32.totalorder %s23, 3
    %p241 = por %p239, %p240
    %p242 = scmp.ne.s32.totalorder %s233, %s234
    %p243 = scmp.eq.s32.totalorder %s23, 0
    %p244 = por %p242, %p243
    %p245 = scmp.ne.s32.totalorder %s233, %s234
    %p246 = scmp.eq.s32.totalorder %s24, 3
    %p247 = por %p245, %p246
    %p249 = scmp.ne.s32.totalorder %s234, %s248
    %p250 = scmp.eq.s32.totalorder %s24, 0
    %p251 = por %p249, %p250
    %s253 = sadd.s32 %s252, 1
    %p256 = scmp.eq.s32.totalorder %s18, 3
    %p257 = scmp.ne.s32.totalorder %s252, %s254
    %p258 = scmp.eq.s32.totalorder %s18, 0
    %p259 = por %p257, %p258
    %p260 = scmp.ne.s32.totalorder %s252, %s254
    %p261 = scmp.eq.s32.totalorder %s23, 3
    %p262 = por %p260, %p261
    %p263 = scmp.ne.s32.totalorder %s254, %s255
    %p264 = scmp.eq.s32.totalorder %s23, 0
    %p265 = por %p263, %p264
    %p266 = scmp.ne.s32.totalorder %s254, %s255
    %p267 = scmp.eq.s32.totalorder %s24, 3
    %p268 = por %p266, %p267
    %p270 = scmp.ne.s32.totalorder %s255, %s269
    %p271 = scmp.eq.s32.totalorder %s24, 0
    %p272 = por %p270, %p271
    %s274 = sadd.s32 %s273, 1
    %p277 = scmp.eq.s32.totalorder %s18, 3
    %p278 = scmp.ne.s32.totalorder %s273, %s275
    %p279 = scmp.eq.s32.totalorder %s18, 0
    %p280 = por %p278, %p279
    %p281 = scmp.ne.s32.totalorder %s273, %s275
    %p282 = scmp.eq.s32.totalorder %s23, 3
    %p283 = por %p281, %p282
    %p284 = scmp.ne.s32.totalorder %s275, %s276
    %p285 = scmp.eq.s32.totalorder %s23, 0
    %p286 = por %p284, %p285
    %p287 = scmp.ne.s32.totalorder %s275, %s276
    %p288 = scmp.eq.s32.totalorder %s24, 3
    %p289 = por %p287, %p288
    %p291 = scmp.ne.s32.totalorder %s276, %s290
    %p292 = scmp.eq.s32.totalorder %s24, 0
    %p293 = por %p291, %p292
    %s295 = sadd.s32 %s294, 1
    %p298 = scmp.eq.s32.totalorder %s18, 3
    %p299 = scmp.ne.s32.totalorder %s294, %s296
    %p300 = scmp.eq.s32.totalorder %s18, 0
    %p301 = por %p299, %p300
    %p302 = scmp.ne.s32.totalorder %s294, %s296
    %p303 = scmp.eq.s32.totalorder %s23, 3
    %p304 = por %p302, %p303
    %p305 = scmp.ne.s32.totalorder %s296, %s297
    %p306 = scmp.eq.s32.totalorder %s23, 0
    %p307 = por %p305, %p306
    %p308 = scmp.ne.s32.totalorder %s296, %s297
    %p309 = scmp.eq.s32.totalorder %s24, 3
    %p310 = por %p308, %p309
    %p312 = scmp.ne.s32.totalorder %s297, %s311
    %p313 = scmp.eq.s32.totalorder %s24, 0
    %p314 = por %p312, %p313
    %s315 = ssub.s32 %s25, %s37
    %p316 = scmp.eq.s32.totalorder %s315, 0
    %s318 = sadd.s32 %s317, 1
    %s319 = scalar_select %p316, %s317, %s318
    %p322 = pneg %p316
    %p323 = scmp.eq.s32.totalorder %s18, 3
    %p324 = por %p322, %p323
    %p325 = scmp.ne.s32.totalorder %s317, %s320
    %p326 = scmp.eq.s32.totalorder %s18, 0
    %p327 = por %p325, %p326
    %p328 = scmp.ne.s32.totalorder %s317, %s320
    %p329 = scmp.eq.s32.totalorder %s23, 3
    %p330 = por %p328, %p329
    %p331 = scmp.ne.s32.totalorder %s320, %s321
    %p332 = scmp.eq.s32.totalorder %s23, 0
    %p333 = por %p331, %p332
    %p334 = scmp.ne.s32.totalorder %s320, %s321
    %p335 = scmp.eq.s32.totalorder %s24, 3
    %p336 = por %p334, %p335
    %p338 = scmp.ne.s32.totalorder %s321, %s337
    %p339 = scmp.eq.s32.totalorder %s24, 0
    %p340 = por %p338, %p339
    %p341 = scmp.le.s32.totalorder 1, %s18
    %p342 = scmp.lt.s32.totalorder %s18, 5
    %p343 = pnand %p341, %p342
    %p344 = pneg %p343
    // Predicated region
    $region9: #{wdsr_forward.1} parent=5 // pred_check
      _
    $region10: #{wdsr_forward.1} parent=5 // pred_check_branch
      %346 = sbr.rel (%p343) target = $region12
    $region11: #{wdsr_forward.1} parent=5 // pred_region
      %s347 = ssub.s32 %s18, 1
      // Predicated region
      $region13: #{wdsr_forward.1} parent=11 // pred_check
        %p348 = pneg %p51
      $region14: #{wdsr_forward.1} parent=11 // pred_check_branch
        %350 = sbr.rel (%p348) target = $region16
      $region15: #{wdsr_forward.1} parent=11 // pred_region
        _
      $region16: #{wdsr_forward.1} parent=11 // pred_fallthru
        _
      // Predicated region
      $region17: #{wdsr_forward.1} parent=11 // pred_check
        %p351 = pneg %p98
      $region18: #{wdsr_forward.1} parent=11 // pred_check_branch
        %353 = sbr.rel (%p351) target = $region20
      $region19: #{wdsr_forward.1} parent=11 // pred_region
        _
      $region20: #{wdsr_forward.1} parent=11 // pred_fallthru
        _
      // Predicated region
      $region21: #{wdsr_forward.1} parent=11 // pred_check
        %p354 = pneg %p119
      $region22: #{wdsr_forward.1} parent=11 // pred_check_branch
        %356 = sbr.rel (%p354) target = $region24
      $region23: #{wdsr_forward.1} parent=11 // pred_region
        _
      $region24: #{wdsr_forward.1} parent=11 // pred_fallthru
        _
      // Predicated region
      $region25: #{wdsr_forward.1} parent=11 // pred_check
        %p357 = pneg %p244
      $region26: #{wdsr_forward.1} parent=11 // pred_check_branch
        %359 = sbr.rel (%p357) target = $region28
      $region27: #{wdsr_forward.1} parent=11 // pred_region
        _
      $region28: #{wdsr_forward.1} parent=11 // pred_fallthru
        _
      // Predicated region
      $region29: #{wdsr_forward.1} parent=11 // pred_check
        %p360 = pneg %p265
      $region30: #{wdsr_forward.1} parent=11 // pred_check_branch
        %362 = sbr.rel (%p360) target = $region32
      $region31: #{wdsr_forward.1} parent=11 // pred_region
        _
      $region32: #{wdsr_forward.1} parent=11 // pred_fallthru
        _
      // Predicated region
      $region33: #{wdsr_forward.1} parent=11 // pred_check
        %p363 = pneg %p286
      $region34: #{wdsr_forward.1} parent=11 // pred_check_branch
        %365 = sbr.rel (%p363) target = $region36
      $region35: #{wdsr_forward.1} parent=11 // pred_region
        _
      $region36: #{wdsr_forward.1} parent=11 // pred_fallthru
        _
      // Predicated region
      $region37: #{wdsr_forward.1} parent=11 // pred_check
        %p366 = pneg %p307
      $region38: #{wdsr_forward.1} parent=11 // pred_check_branch
        %368 = sbr.rel (%p366) target = $region40
      $region39: #{wdsr_forward.1} parent=11 // pred_region
        _
      $region40: #{wdsr_forward.1} parent=11 // pred_fallthru
        _
    $region12: #{wdsr_forward.1} parent=5 // pred_fallthru
      _
    %p369 = scmp.lt.s32.totalorder %s18, 4
    // Predicated region
    $region41: #{wdsr_forward.1} parent=5 // pred_check
      %p370 = pneg %p369
    $region42: #{wdsr_forward.1} parent=5 // pred_check_branch
      %372 = sbr.rel (%p370) target = $region44
    $region43: #{wdsr_forward.1} parent=5 // pred_region
      // Predicated region
      $region45: #{wdsr_forward.1} parent=43 // pred_check
        %p373 = pneg %p71
      $region46: #{wdsr_forward.1} parent=43 // pred_check_branch
        %375 = sbr.rel (%p373) target = $region48
      $region47: #{wdsr_forward.1} parent=43 // pred_region
        %p376 = scmp.lt.s32.totalorder %s25, 1
        %s377 = scalar_select %p376, %s25, 1
        %s378 = smul.addr %s377, 2
        %s379 = scalar_lea.vmem %s1, %s378
      $region48: #{wdsr_forward.1} parent=43 // pred_fallthru
        _
      // Predicated region
      $region49: #{wdsr_forward.1} parent=43 // pred_check
        %p380 = pneg %p139
      $region50: #{wdsr_forward.1} parent=43 // pred_check_branch
        %382 = sbr.rel (%p380) target = $region52
      $region51: #{wdsr_forward.1} parent=43 // pred_region
        %p383 = scmp.lt.s32.totalorder %s26, 1
        %s384 = scalar_select %p383, %s26, 1
        %s385 = smul.addr %s384, 36
        %s386 = smul.addr %s385, 8
        %s387 = scalar_lea.vmem %s4, %s386
      $region52: #{wdsr_forward.1} parent=43 // pred_fallthru
        _
      // Predicated region
      $region53: #{wdsr_forward.1} parent=43 // pred_check
        %p388 = pneg %p165
      $region54: #{wdsr_forward.1} parent=43 // pred_check_branch
        %390 = sbr.rel (%p388) target = $region56
      $region55: #{wdsr_forward.1} parent=43 // pred_region
        %p391 = scmp.lt.s32.totalorder %s26, 1
        %s392 = scalar_select %p391, %s26, 1
        %s393 = smul.addr %s392, 4
        %s394 = smul.addr %s393, 8
        %s395 = scalar_lea.vmem %s5, %s394
      $region56: #{wdsr_forward.1} parent=43 // pred_fallthru
        _
      // Predicated region
      $region57: #{wdsr_forward.1} parent=43 // pred_check
        %p396 = pneg %p191
      $region58: #{wdsr_forward.1} parent=43 // pred_check_branch
        %398 = sbr.rel (%p396) target = $region60
      $region59: #{wdsr_forward.1} parent=43 // pred_region
        %p399 = scmp.lt.s32.totalorder %s26, 1
        %s400 = scalar_select %p399, %s26, 1
        %s401 = smul.addr %s400, 9
        %s402 = smul.addr %s401, 8
        %s403 = scalar_lea.vmem %s6, %s402
      $region60: #{wdsr_forward.1} parent=43 // pred_fallthru
        _
      // Predicated region
      $region61: #{wdsr_forward.1} parent=43 // pred_check
        %p404 = pneg %p217
      $region62: #{wdsr_forward.1} parent=43 // pred_check_branch
        %406 = sbr.rel (%p404) target = $region64
      $region63: #{wdsr_forward.1} parent=43 // pred_region
        %p407 = scmp.lt.s32.totalorder %s26, 1
        %s408 = scalar_select %p407, %s26, 1
        %s409 = smul.addr %s408, 8
        %s410 = scalar_lea.vmem %s7, %s409
      $region64: #{wdsr_forward.1} parent=43 // pred_fallthru
        _
    $region44: #{wdsr_forward.1} parent=5 // pred_fallthru
      _
    %p411 = scmp.le.s32.totalorder 1, %s18
    %p412 = scmp.lt.s32.totalorder %s18, 5
    %p413 = pnand %p411, %p412
    %p414 = pneg %p413
    // Predicated region
    $region65: #{wdsr_forward.1} parent=5 // pred_check
      _
    $region66: #{wdsr_forward.1} parent=5 // pred_check_branch
      %416 = sbr.rel (%p413) target = $region68
    $region67: #{wdsr_forward.1} parent=5 // pred_region
      %s417 = ssub.s32 %s18, 1
      %p418 = pneg %p51
      %p419 = pneg %p48
      %p420 = scmp.lt.s32.totalorder %s27, 1
      %s421 = scalar_select %p420, %s27, 1
      %s422 = smul.addr %s421, 2
      %s423 = scalar_lea.vmem %s1, %s422
      %p424 = pneg %p77
      %p425 = pneg %p74
      %p426 = pneg %p98
      %p427 = pneg %p95
      %p428 = pneg %p119
      %p429 = pneg %p116
      %p430 = scmp.lt.s32.totalorder %s28, 1
      %s431 = scalar_select %p430, %s28, 1
      %s432 = smul.addr %s431, 36
      %s433 = smul.addr %s432, 8
      %s434 = scalar_lea.vmem %s4, %s433
      %p435 = pneg %p145
      %p436 = pneg %p142
      %p437 = scmp.lt.s32.totalorder %s28, 1
      %s438 = scalar_select %p437, %s28, 1
      %s439 = smul.addr %s438, 4
      %s440 = smul.addr %s439, 8
      %s441 = scalar_lea.vmem %s5, %s440
      %p442 = pneg %p171
      %p443 = pneg %p168
      %p444 = scmp.lt.s32.totalorder %s28, 1
      %s445 = scalar_select %p444, %s28, 1
      %s446 = smul.addr %s445, 9
      %s447 = smul.addr %s446, 8
      %s448 = scalar_lea.vmem %s6, %s447
      %p449 = pneg %p197
      %p450 = pneg %p194
      %p451 = scmp.lt.s32.totalorder %s28, 1
      %s452 = scalar_select %p451, %s28, 1
      %s453 = smul.addr %s452, 8
      %s454 = scalar_lea.vmem %s7, %s453
      %p455 = pneg %p223
      %p456 = pneg %p220
      %p457 = pneg %p244
      %p458 = pneg %p241
      %p459 = pneg %p265
      %p460 = pneg %p262
      %p461 = pneg %p286
      %p462 = pneg %p283
      %p463 = pneg %p307
      %p464 = pneg %p304
      %p465 = pneg %p333
      %p466 = pneg %p330
      %p467 = scmp.lt.s32.totalorder %s27, 1
      %s468 = scalar_select %p467, %s27, 1
      %s469 = smul.addr %s468, 2
      %s470 = smul.addr %s469, 4
      %s471 = scalar_lea.vmem %s12, %s470
      %p472 = scmp.lt.s32.totalorder %s27, 1
      %s473 = scalar_select %p472, %s27, 1
      %s474 = smul.addr %s473, 2
      %s475 = scalar_lea.vmem %s1, %s474
      %p476 = scmp.lt.s32.totalorder %s28, 1
      %s477 = scalar_select %p476, %s28, 1
      %s478 = smul.addr %s477, 36
      %s479 = smul.addr %s478, 8
      %s480 = scalar_lea.vmem %s4, %s479
      %p481 = scmp.lt.s32.totalorder %s28, 1
      %s482 = scalar_select %p481, %s28, 1
      %s483 = smul.addr %s482, 4
      %s484 = smul.addr %s483, 8
      %s485 = scalar_lea.vmem %s5, %s484
      %p486 = scmp.lt.s32.totalorder %s28, 1
      %s487 = scalar_select %p486, %s28, 1
      %s488 = smul.addr %s487, 9
      %s489 = smul.addr %s488, 8
      %s490 = scalar_lea.vmem %s6, %s489
      %p491 = scmp.lt.s32.totalorder %s28, 1
      %s492 = scalar_select %p491, %s28, 1
      %s493 = smul.addr %s492, 8
      %s494 = scalar_lea.vmem %s7, %s493
      %p495 = scmp.lt.s32.totalorder %s27, 1
      %s496 = scalar_select %p495, %s27, 1
      %s497 = smul.addr %s496, 2
      %s498 = smul.addr %s497, 4
      %s499 = scalar_lea.vmem %s12, %s498
      %v500 = vld [vmem:[%s0] sm:$0x3]
      %v501 = vlaneseq
      %v502 = vand.u32 %v501, 127
      %v503 = vadd.s32 %v502, 128
      %vm504 = vcmp.ge.s32.totalorder %v502, 16
      %vm505 = vcmp.ge.s32.totalorder %v503, 16
      %vm506 = vcmp.lt.s32.totalorder %v502, 240
      %vm507 = vcmp.lt.s32.totalorder %v503, 240
      %vm508 = vcmp.ge.s32.totalorder %v500, 1
      %vm509 = vcmp.le.s32.totalorder %v500, 14
      %p510 = scmp.eq.s32.totalorder %s28, 0
      // Predicated region
      $region69: #{wdsr_forward.1} parent=67 // pred_check
        %p511 = pneg %p510
      $region70: #{wdsr_forward.1} parent=67 // pred_check_branch
        %513 = sbr.rel (%p511) target = $region72
      $region71: #{wdsr_forward.1} parent=67 // pred_region
        %v514 = vld [vmem:[%s475] sm:$0x3]
        %v515 = vld [vmem:[%s2] sm:$0xff]
        %v516 = vld [vmem:[%s2 + $0x8] sm:$0xff]
        %v517 = vld [vmem:[%s2 + $0x10] sm:$0xff]
        %v518 = vld [vmem:[%s2 + $0x18] sm:$0xff]
        %v519 = vld [vmem:[%s2 + $0x20] sm:$0xff]
        %v520 = vld [vmem:[%s2 + $0x28] sm:$0xff]
        %v521 = vld [vmem:[%s2 + $0x30] sm:$0xff]
        %v522 = vld [vmem:[%s2 + $0x38] sm:$0xff]
        %v523 = vld [vmem:[%s2 + $0x40] sm:$0xff]
        %v524 = vld [vmem:[%s3] sm:$0xff]
        %v526 = vlaneseq
        %v527 = vshrl.u32 %v526, 7
        %v528 = vsub.s32 1, %v527
        %v529 = vrot.slane %v514, %v528
        %530 = vrot.lane.b32.xlu0 %v529, 16
        %v531 = vpop.permute.xlu0 %530
        %v533 = vlaneseq
        %v534 = vshrl.u32 %v533, 7
        %v535 = vsub.s32 0, %v534
        %v536 = vrot.slane %v514, %v535
        %537 = vrot.lane.b32.xlu0 %v536, 16
        %v538 = vpop.permute.xlu0 %537
        %vm539 = vcmask 130048
        %v540 = vsel %vm539, %v538, %v531
        %v543 = vsel %vm539, %v531, %v538
        %v544 = vsel %vm504, %v543, 0.0
        %v545 = vsel %vm505, %v540, 0.0
        %546 = vrot.lane.b32.xlu0 %v536, 112
        %v547 = vpop.permute.xlu0 %546
        %548 = vrot.lane.b32.xlu0 %v529, 112
        %v549 = vpop.permute.xlu0 %548
        %vm550 = vcmask 916480
        %v551 = vsel %vm550, %v547, %v549
        %v555 = vsel %vm550, %v549, %v547
        %v556 = vsel %vm506, %v551, 0.0
        %v557 = vsel %vm507, %v555, 0.0
        %559 = vrot.lane.b32.xlu0 %v545, 1
        %v560 = vpop.permute.xlu0 %559
        %563 = vrot.lane.b32.xlu0 %v544, 1
        %v564 = vpop.permute.xlu0 %563
        %vm565 = vcmask 7168
        %v566 = vsel %vm565, %v564, %v560
        %v568 = vsel %vm565, %v560, %v564
        %v570 = vcombine.low %v568, %v566
        %v572 = vunpack.c.l.s4 1966171168
        %v573 = vunpack.c.0.s8 %v572
        %v574 = vlaneseq
        %v575 = vshrl.u32 %v574, 7
        %v576 = vsub.s32 %v573, %v575
        %v577 = vrot.slane %v570, %v576
        %v579 = vunpack.c.l.s4 1966171168
        %v580 = vunpack.c.0.s8 %v579
        %v581 = vlaneseq
        %v582 = vshrl.u32 %v581, 7
        %v583 = vsub.s32 %v580, %v582
        %v584 = vrot.slane %v577, %v583
        %v586 = vsel %vm508, %v584, 0.0
        %587 = vrot.lane.b32.xlu0 %v544, 127
        %v588 = vpop.permute.xlu0 %587
        %589 = vrot.lane.b32.xlu0 %v545, 127
        %v590 = vpop.permute.xlu0 %589
        %vm591 = vcmask 1039360
        %v592 = vsel %vm591, %v588, %v590
        %v595 = vsel %vm591, %v590, %v588
        %v597 = vcombine.low %v592, %v595
        %v599 = vunpack.c.l.s4 1966171168
        %v600 = vunpack.c.0.s8 %v599
        %v601 = vlaneseq
        %v602 = vshrl.u32 %v601, 7
        %v603 = vsub.s32 %v600, %v602
        %v604 = vrot.slane %v597, %v603
        %v606 = vunpack.c.l.s4 1966171168
        %v607 = vunpack.c.0.s8 %v606
        %v608 = vlaneseq
        %v609 = vshrl.u32 %v608, 7
        %v610 = vsub.s32 %v607, %v609
        %v611 = vrot.slane %v604, %v610
        %v613 = vsel %vm509, %v611, 0.0
        %615 = vset.pattern.permute.xlu0 0
        %616 = vperm.xlu0 %615, %v515
        %v617 = vpop.permute.xlu0 %616
        %v620 = vlaneseq
        %v621 = vshrl.u32 %v620, 7
        %v622 = vsub.s32 0, %v621
        %v623 = vrot.slane %v586, %v622
        %v624 = vlaneseq
        %v625 = vshrl.u32 %v624, 7
        %v626 = vsub.s32 1, %v625
        %v627 = vrot.slane %v586, %v626
        %v630 = vmul.f32 %v617, %v623
        %v631 = vmul.f32 %v617, %v627
        %633 = vset.pattern.permute.xlu0 0
        %634 = vperm.xlu0 %633, %v516
        %v635 = vpop.permute.xlu0 %634
        %v637 = vlaneseq
        %v638 = vshrl.u32 %v637, 7
        %v639 = vsub.s32 0, %v638
        %v640 = vrot.slane %v544, %v639
        %v641 = vlaneseq
        %v642 = vshrl.u32 %v641, 7
        %v643 = vsub.s32 0, %v642
        %v644 = vrot.slane %v545, %v643
        %v645 = vmul.f32 %v635, %v640
        %v646 = vmul.f32 %v635, %v644
        %v647 = vadd.f32 %v630, %v645
        %v648 = vadd.f32 %v631, %v646
        %650 = vset.pattern.permute.xlu0 0
        %651 = vperm.xlu0 %650, %v517
        %v652 = vpop.permute.xlu0 %651
        %v655 = vlaneseq
        %v656 = vshrl.u32 %v655, 7
        %v657 = vsub.s32 0, %v656
        %v658 = vrot.slane %v613, %v657
        %v659 = vlaneseq
        %v660 = vshrl.u32 %v659, 7
        %v661 = vsub.s32 1, %v660
        %v662 = vrot.slane %v613, %v661
        %v665 = vmul.f32 %v652, %v658
        %v666 = vmul.f32 %v652, %v662
        %v667 = vadd.f32 %v647, %v665
        %v668 = vadd.f32 %v648, %v666
        %669 = vrot.lane.b32.xlu0 %v529, 1
        %v670 = vpop.permute.xlu0 %669
        %672 = vrot.lane.b32.xlu0 %v536, 1
        %v673 = vpop.permute.xlu0 %672
        %v674 = vsel %vm565, %v673, %v670
        %v676 = vsel %vm565, %v670, %v673
        %v678 = vcombine.low %v676, %v674
        %v680 = vunpack.c.l.s4 1966171168
        %v681 = vunpack.c.0.s8 %v680
        %v682 = vlaneseq
        %v683 = vshrl.u32 %v682, 7
        %v684 = vsub.s32 %v681, %v683
        %v685 = vrot.slane %v678, %v684
        %v687 = vunpack.c.l.s4 1966171168
        %v688 = vunpack.c.0.s8 %v687
        %v689 = vlaneseq
        %v690 = vshrl.u32 %v689, 7
        %v691 = vsub.s32 %v688, %v690
        %v692 = vrot.slane %v685, %v691
        %v694 = vsel %vm508, %v692, 0.0
        %695 = vrot.lane.b32.xlu0 %v536, 127
        %v696 = vpop.permute.xlu0 %695
        %697 = vrot.lane.b32.xlu0 %v529, 127
        %v698 = vpop.permute.xlu0 %697
        %v699 = vsel %vm591, %v696, %v698
        %v702 = vsel %vm591, %v698, %v696
        %v704 = vcombine.low %v699, %v702
        %v706 = vunpack.c.l.s4 1966171168
        %v707 = vunpack.c.0.s8 %v706
        %v708 = vlaneseq
        %v709 = vshrl.u32 %v708, 7
        %v710 = vsub.s32 %v707, %v709
        %v711 = vrot.slane %v704, %v710
        %v713 = vunpack.c.l.s4 1966171168
        %v714 = vunpack.c.0.s8 %v713
        %v715 = vlaneseq
        %v716 = vshrl.u32 %v715, 7
        %v717 = vsub.s32 %v714, %v716
        %v718 = vrot.slane %v711, %v717
        %v720 = vsel %vm509, %v718, 0.0
        %722 = vset.pattern.permute.xlu0 0
        %723 = vperm.xlu0 %722, %v518
        %v724 = vpop.permute.xlu0 %723
        %v727 = vlaneseq
        %v728 = vshrl.u32 %v727, 7
        %v729 = vsub.s32 0, %v728
        %v730 = vrot.slane %v694, %v729
        %v731 = vlaneseq
        %v732 = vshrl.u32 %v731, 7
        %v733 = vsub.s32 1, %v732
        %v734 = vrot.slane %v694, %v733
        %v737 = vmul.f32 %v724, %v730
        %v738 = vmul.f32 %v724, %v734
        %v739 = vadd.f32 %v667, %v737
        %v740 = vadd.f32 %v668, %v738
        %742 = vset.pattern.permute.xlu0 0
        %743 = vperm.xlu0 %742, %v519
        %v744 = vpop.permute.xlu0 %743
        %v748 = vmul.f32 %v744, %v536
        %v749 = vmul.f32 %v744, %v529
        %v750 = vadd.f32 %v739, %v748
        %v751 = vadd.f32 %v740, %v749
        %753 = vset.pattern.permute.xlu0 0
        %754 = vperm.xlu0 %753, %v520
        %v755 = vpop.permute.xlu0 %754
        %v758 = vlaneseq
        %v759 = vshrl.u32 %v758, 7
        %v760 = vsub.s32 0, %v759
        %v761 = vrot.slane %v720, %v760
        %v762 = vlaneseq
        %v763 = vshrl.u32 %v762, 7
        %v764 = vsub.s32 1, %v763
        %v765 = vrot.slane %v720, %v764
        %v768 = vmul.f32 %v755, %v761
        %v769 = vmul.f32 %v755, %v765
        %v770 = vadd.f32 %v750, %v768
        %v771 = vadd.f32 %v751, %v769
        %773 = vrot.lane.b32.xlu0 %v557, 1
        %v774 = vpop.permute.xlu0 %773
        %777 = vrot.lane.b32.xlu0 %v556, 1
        %v778 = vpop.permute.xlu0 %777
        %v779 = vsel %vm565, %v778, %v774
        %v781 = vsel %vm565, %v774, %v778
        %v783 = vcombine.low %v781, %v779
        %v785 = vunpack.c.l.s4 1966171168
        %v786 = vunpack.c.0.s8 %v785
        %v787 = vlaneseq
        %v788 = vshrl.u32 %v787, 7
        %v789 = vsub.s32 %v786, %v788
        %v790 = vrot.slane %v783, %v789
        %v792 = vunpack.c.l.s4 1966171168
        %v793 = vunpack.c.0.s8 %v792
        %v794 = vlaneseq
        %v795 = vshrl.u32 %v794, 7
        %v796 = vsub.s32 %v793, %v795
        %v797 = vrot.slane %v790, %v796
        %v799 = vsel %vm508, %v797, 0.0
        %800 = vrot.lane.b32.xlu0 %v556, 127
        %v801 = vpop.permute.xlu0 %800
        %802 = vrot.lane.b32.xlu0 %v557, 127
        %v803 = vpop.permute.xlu0 %802
        %v804 = vsel %vm591, %v801, %v803
        %v807 = vsel %vm591, %v803, %v801
        %v809 = vcombine.low %v804, %v807
        %v811 = vunpack.c.l.s4 1966171168
        %v812 = vunpack.c.0.s8 %v811
        %v813 = vlaneseq
        %v814 = vshrl.u32 %v813, 7
        %v815 = vsub.s32 %v812, %v814
        %v816 = vrot.slane %v809, %v815
        %v818 = vunpack.c.l.s4 1966171168
        %v819 = vunpack.c.0.s8 %v818
        %v820 = vlaneseq
        %v821 = vshrl.u32 %v820, 7
        %v822 = vsub.s32 %v819, %v821
        %v823 = vrot.slane %v816, %v822
        %v825 = vsel %vm509, %v823, 0.0
        %827 = vset.pattern.permute.xlu0 0
        %828 = vperm.xlu0 %827, %v521
        %v829 = vpop.permute.xlu0 %828
        %v832 = vlaneseq
        %v833 = vshrl.u32 %v832, 7
        %v834 = vsub.s32 0, %v833
        %v835 = vrot.slane %v799, %v834
        %v836 = vlaneseq
        %v837 = vshrl.u32 %v836, 7
        %v838 = vsub.s32 1, %v837
        %v839 = vrot.slane %v799, %v838
        %v842 = vmul.f32 %v829, %v835
        %v843 = vmul.f32 %v829, %v839
        %v844 = vadd.f32 %v770, %v842
        %v845 = vadd.f32 %v771, %v843
        %847 = vset.pattern.permute.xlu0 0
        %848 = vperm.xlu0 %847, %v522
        %v849 = vpop.permute.xlu0 %848
        %v851 = vlaneseq
        %v852 = vshrl.u32 %v851, 7
        %v853 = vsub.s32 0, %v852
        %v854 = vrot.slane %v556, %v853
        %v855 = vlaneseq
        %v856 = vshrl.u32 %v855, 7
        %v857 = vsub.s32 0, %v856
        %v858 = vrot.slane %v557, %v857
        %v859 = vmul.f32 %v849, %v854
        %v860 = vmul.f32 %v849, %v858
        %v861 = vadd.f32 %v844, %v859
        %v862 = vadd.f32 %v845, %v860
        %864 = vset.pattern.permute.xlu0 0
        %865 = vperm.xlu0 %864, %v523
        %v866 = vpop.permute.xlu0 %865
        %v869 = vlaneseq
        %v870 = vshrl.u32 %v869, 7
        %v871 = vsub.s32 0, %v870
        %v872 = vrot.slane %v825, %v871
        %v873 = vlaneseq
        %v874 = vshrl.u32 %v873, 7
        %v875 = vsub.s32 1, %v874
        %v876 = vrot.slane %v825, %v875
        %v879 = vmul.f32 %v866, %v872
        %v880 = vmul.f32 %v866, %v876
        %v881 = vadd.f32 %v861, %v879
        %v882 = vadd.f32 %v862, %v880
        %884 = vset.pattern.permute.xlu0 0
        %885 = vperm.xlu0 %884, %v524
        %v886 = vpop.permute.xlu0 %885
        %v888 = vadd.f32 %v881, %v886
        %v889 = vadd.f32 %v882, %v886
        %890 = vst [vmem:[#allocation2] sm:$0xff] %v888
        %891 = vst [vmem:[#allocation2 + $0x8] sm:$0xff] %v889
        %892 = vst [vmem:[#allocation3] sm:$0xff] %v888
        %893 = vst [vmem:[#allocation3 + $0x8] sm:$0xff] %v889
      $region72: #{wdsr_forward.1} parent=67 // pred_fallthru
        _
      %v894 = vld [vmem:[#allocation2] sm:$0xff]
      %v895 = vld [vmem:[#allocation2 + $0x8] sm:$0xff]
      %v896 = vld [vmem:[%s480] sm:$0xff]
      %v897 = vld [vmem:[%s480 + $0x8] sm:$0xff]
      %v898 = vld [vmem:[%s480 + $0x10] sm:$0xff]
      %v899 = vld [vmem:[%s480 + $0x18] sm:$0xff]
      %v900 = vld [vmem:[%s480 + $0x20] sm:$0xff]
      %v901 = vld [vmem:[%s480 + $0x28] sm:$0xff]
      %v902 = vld [vmem:[%s480 + $0x30] sm:$0xff]
      %v903 = vld [vmem:[%s480 + $0x38] sm:$0xff]
      %v904 = vld [vmem:[%s480 + $0x40] sm:$0xff]
      %v905 = vld [vmem:[%s480 + $0x48] sm:$0xff]
      %v906 = vld [vmem:[%s480 + $0x50] sm:$0xff]
      %v907 = vld [vmem:[%s480 + $0x58] sm:$0xff]
      %v908 = vld [vmem:[%s480 + $0x60] sm:$0xff]
      %v909 = vld [vmem:[%s480 + $0x68] sm:$0xff]
      %v910 = vld [vmem:[%s480 + $0x70] sm:$0xff]
      %v911 = vld [vmem:[%s480 + $0x78] sm:$0xff]
      %v912 = vld [vmem:[%s480 + $0x80] sm:$0xff]
      %v913 = vld [vmem:[%s480 + $0x88] sm:$0xff]
      %v914 = vld [vmem:[%s480 + $0x90] sm:$0xff]
      %v915 = vld [vmem:[%s480 + $0x98] sm:$0xff]
      %v916 = vld [vmem:[%s480 + $0xa0] sm:$0xff]
      %v917 = vld [vmem:[%s480 + $0xa8] sm:$0xff]
      %v918 = vld [vmem:[%s480 + $0xb0] sm:$0xff]
      %v919 = vld [vmem:[%s480 + $0xb8] sm:$0xff]
      %v920 = vld [vmem:[%s480 + $0xc0] sm:$0xff]
      %v921 = vld [vmem:[%s480 + $0xc8] sm:$0xff]
      %v922 = vld [vmem:[%s480 + $0xd0] sm:$0xff]
      %v923 = vld [vmem:[%s480 + $0xd8] sm:$0xff]
      %v924 = vld [vmem:[%s480 + $0xe0] sm:$0xff]
      %v925 = vld [vmem:[%s480 + $0xe8] sm:$0xff]
      %v926 = vld [vmem:[%s480 + $0xf0] sm:$0xff]
      %v927 = vld [vmem:[%s480 + $0xf8] sm:$0xff]
      %v928 = vld [vmem:[%s480 + $0x100] sm:$0xff]
      %v929 = vld [vmem:[%s480 + $0x108] sm:$0xff]
      %v930 = vld [vmem:[%s480 + $0x110] sm:$0xff]
      %v931 = vld [vmem:[%s480 + $0x118] sm:$0xff]
      %v932 = vld [vmem:[%s485] sm:$0xff]
      %v933 = vld [vmem:[%s485 + $0x8] sm:$0xff]
      %v934 = vld [vmem:[%s485 + $0x10] sm:$0xff]
      %v935 = vld [vmem:[%s485 + $0x18] sm:$0xff]
      %937 = vrot.lane.b32.xlu0 %v895, 16
      %v938 = vpop.permute.xlu0 %937
      %941 = vrot.lane.b32.xlu0 %v894, 16
      %v942 = vpop.permute.xlu0 %941
      %vm943 = vcmask 130048
      %v944 = vsel %vm943, %v942, %v938
      %v947 = vsel %vm943, %v938, %v942
      %v948 = vsel %vm504, 1, 0
      %v949 = vsel %vm505, 1, 0
      %vm950 = vcmp.eq.s32.totalorder %v948, 1
      %vm951 = vcmp.eq.s32.totalorder %v949, 1
      %v952 = vsel %vm950, %v947, 0.0
      %v953 = vsel %vm951, %v944, 0.0
      %954 = vrot.lane.b32.xlu0 %v894, 112
      %v955 = vpop.permute.xlu0 %954
      %956 = vrot.lane.b32.xlu0 %v895, 112
      %v957 = vpop.permute.xlu0 %956
      %vm958 = vcmask 916480
      %v959 = vsel %vm958, %v955, %v957
      %v963 = vsel %vm958, %v957, %v955
      %v964 = vsel %vm506, 1, 0
      %v965 = vsel %vm507, 1, 0
      %vm966 = vcmp.eq.s32.totalorder %v964, 1
      %vm967 = vcmp.eq.s32.totalorder %v965, 1
      %v968 = vsel %vm966, %v959, 0.0
      %v969 = vsel %vm967, %v963, 0.0
      %971 = vrot.lane.b32.xlu0 %v953, 1
      %v972 = vpop.permute.xlu0 %971
      %975 = vrot.lane.b32.xlu0 %v952, 1
      %v976 = vpop.permute.xlu0 %975
      %vm977 = vcmask 7168
      %v978 = vsel %vm977, %v976, %v972
      %v981 = vsel %vm977, %v972, %v976
      %v982 = vsel %vm508, 1, 0
      %v983 = vlaneseq
      %v984 = vshrl.u32 %v983, 7
      %v985 = vsub.s32 0, %v984
      %v986 = vrot.slane %v982, %v985
      %v987 = vlaneseq
      %v988 = vshrl.u32 %v987, 7
      %v989 = vsub.s32 1, %v988
      %v990 = vrot.slane %v982, %v989
      %vm991 = vcmp.eq.s32.totalorder %v986, 1
      %vm992 = vcmp.eq.s32.totalorder %v990, 1
      %v993 = vsel %vm991, %v981, 0.0
      %v994 = vsel %vm992, %v978, 0.0
      %995 = vrot.lane.b32.xlu0 %v952, 127
      %v996 = vpop.permute.xlu0 %995
      %997 = vrot.lane.b32.xlu0 %v953, 127
      %v998 = vpop.permute.xlu0 %997
      %vm999 = vcmask 1039360
      %v1000 = vsel %vm999, %v996, %v998
      %v1004 = vsel %vm999, %v998, %v996
      %v1005 = vsel %vm509, 1, 0
      %v1006 = vlaneseq
      %v1007 = vshrl.u32 %v1006, 7
      %v1008 = vsub.s32 0, %v1007
      %v1009 = vrot.slane %v1005, %v1008
      %v1010 = vlaneseq
      %v1011 = vshrl.u32 %v1010, 7
      %v1012 = vsub.s32 1, %v1011
      %v1013 = vrot.slane %v1005, %v1012
      %vm1014 = vcmp.eq.s32.totalorder %v1009, 1
      %vm1015 = vcmp.eq.s32.totalorder %v1013, 1
      %v1016 = vsel %vm1014, %v1000, 0.0
      %v1017 = vsel %vm1015, %v1004, 0.0
      %vm1018 = vcmask 64512
      %v1020 = vsel %vm1018, %v900, 0
      %v1023 = vsel %vm1018, %v901, 0
      %v1026 = vsel %vm1018, %v902, 0
      %v1029 = vsel %vm1018, %v903, 0
      %1031 = vmatprep.subr.mxu0 %v953
      %1032 = vmatpush1.msra.mxu0 %v952
      %1033 = vmatprep.subr.mxu0 0.0
      %1034 = vmatpush1.msra.mxu0 0.0
      %1035 = vmatprep.subr.mxu0 0.0
      %1036 = vmatpush1.msra.mxu0 0.0
      %1037 = vmatprep.subr.mxu0 0.0
      %1038 = vmatpush1.msra.mxu0 0.0
      %1039 = vmatprep.subr.mxu0 0.0
      %1040 = vmatpush1.msra.mxu0 0.0
      %1041 = vmatprep.subr.mxu0 0.0
      %1042 = vmatpush1.msra.mxu0 0.0
      %1043 = vmatprep.subr.mxu0 0.0
      %1044 = vmatpush1.msra.mxu0 0.0
      %1045 = vmatprep.subr.mxu0 0.0
      %1046 = vmatpush1.msra.mxu0 0.0
      %1047 = vmatprep.subr.mxu0 0.0
      %1048 = vmatpush1.msra.mxu0 0.0
      %1049 = vmatprep.subr.mxu0 0.0
      %1050 = vmatpush1.msra.mxu0 0.0
      %1051 = vmatprep.subr.mxu0 0.0
      %1052 = vmatpush1.msra.mxu0 0.0
      %1053 = vmatprep.subr.mxu0 0.0
      %1054 = vmatpush1.msra.mxu0 0.0
      %1055 = vmatprep.subr.mxu0 0.0
      %1056 = vmatpush1.msra.mxu0 0.0
      %1057 = vmatprep.subr.mxu0 0.0
      %1058 = vmatpush1.msra.mxu0 0.0
      %1059 = vmatprep.subr.mxu0 0.0
      %1060 = vmatpush1.msra.mxu0 0.0
      %1061 = vmatprep.subr.mxu0 0.0
      %1062 = vmatpush1.msra.mxu0 0.0
      %1063 = vmatprep.subr.mxu0 0.0
      %1064 = vmatpush1.msra.mxu0 0.0
      %1065 = vmatprep.subr.mxu0 0.0
      %1066 = vmatpush1.msra.mxu0 0.0
      %1067 = vmatprep.subr.mxu0 0.0
      %1068 = vmatpush1.msra.mxu0 0.0
      %1069 = vmatprep.subr.mxu0 0.0
      %1070 = vmatpush1.msra.mxu0 0.0
      %1071 = vmatprep.subr.mxu0 0.0
      %1072 = vmatpush1.msra.mxu0 0.0
      %1073 = vmatprep.subr.mxu0 0.0
      %1074 = vmatpush1.msra.mxu0 0.0
      %1075 = vmatprep.subr.mxu0 0.0
      %1076 = vmatpush1.msra.mxu0 0.0
      %1077 = vmatprep.subr.mxu0 0.0
      %1078 = vmatpush1.msra.mxu0 0.0
      %1079 = vmatprep.subr.mxu0 0.0
      %1080 = vmatpush1.msra.mxu0 0.0
      %1081 = vmatprep.subr.mxu0 0.0
      %1082 = vmatpush1.msra.mxu0 0.0
      %1083 = vmatprep.subr.mxu0 0.0
      %1084 = vmatpush1.msra.mxu0 0.0
      %1085 = vmatprep.subr.mxu0 0.0
      %1086 = vmatpush1.msra.mxu0 0.0
      %1087 = vmatprep.subr.mxu0 0.0
      %1088 = vmatpush1.msra.mxu0 0.0
      %1089 = vmatprep.subr.mxu0 0.0
      %1090 = vmatpush1.msra.mxu0 0.0
      %1091 = vmatprep.subr.mxu0 0.0
      %1092 = vmatpush1.msra.mxu0 0.0
      %1093 = vmatprep.subr.mxu0 0.0
      %1094 = vmatpush1.msra.mxu0 0.0
      %1095 = vmatprep.mubr.f32.mxu0 0.0
      %1096 = vmatmul.mubr.f32.gmra.mrb[0].mxu0 %v1020
      %v1097 = vpop.f32.mrb[0].mxu0
      %v1098 = vadd.f32 0.0, %v1097
      %v1099 = vpop.f32.mrb[0].mxu0
      %v1100 = vadd.f32 0.0, %v1099
      %1101 = vmatprep.mubr.f32.mxu0 0.0
      %1102 = vmatmul.mubr.f32.gmra.mrb[0].mxu0 %v1023
      %v1103 = vpop.f32.mrb[0].mxu0
      %v1104 = vadd.f32 0.0, %v1103
      %v1105 = vpop.f32.mrb[0].mxu0
      %v1106 = vadd.f32 0.0, %v1105
      %1107 = vmatprep.mubr.f32.mxu0 0.0
      %1108 = vmatmul.mubr.f32.gmra.mrb[0].mxu0 %v1026
      %v1109 = vpop.f32.mrb[0].mxu0
      %v1110 = vadd.f32 0.0, %v1109
      %v1111 = vpop.f32.mrb[0].mxu0
      %v1112 = vadd.f32 0.0, %v1111
      %1113 = vmatprep.mubr.f32.mxu0 0.0
      %1114 = vmatmul.mubr.f32.gmra.mrb[0].mxu0 %v1029
      %v1115 = vpop.f32.mrb[0].mxu0
      %v1116 = vadd.f32 0.0, %v1115
      %v1117 = vpop.f32.mrb[0].mxu0
      %v1118 = vadd.f32 0.0, %v1117
      %1119 = vdwg.mxu0
      %v1121 = vsel %vm1018, %v896, 0
      %v1124 = vsel %vm1018, %v897, 0
      %v1127 = vsel %vm1018, %v898, 0
      %v1130 = vsel %vm1018, %v899, 0
      %1132 = vmatprep.subr.mxu0 %v994
      %1133 = vmatpush1.msra.mxu0 %v993
      %1134 = vmatprep.subr.mxu0 0.0
      %1135 = vmatpush1.msra.mxu0 0.0
      %1136 = vmatprep.subr.mxu0 0.0
      %1137 = vmatpush1.msra.mxu0 0.0
      %1138 = vmatprep.subr.mxu0 0.0
      %1139 = vmatpush1.msra.mxu0 0.0
      %1140 = vmatprep.subr.mxu0 0.0
      %1141 = vmatpush1.msra.mxu0 0.0
      %1142 = vmatprep.subr.mxu0 0.0
      %1143 = vmatpush1.msra.mxu0 0.0
      %1144 = vmatprep.subr.mxu0 0.0
      %1145 = vmatpush1.msra.mxu0 0.0
      %1146 = vmatprep.subr.mxu0 0.0
      %1147 = vmatpush1.msra.mxu0 0.0
      %1148 = vmatprep.subr.mxu0 0.0
      %1149 = vmatpush1.msra.mxu0 0.0
      %1150 = vmatprep.subr.mxu0 0.0
      %1151 = vmatpush1.msra.mxu0 0.0
      %1152 = vmatprep.subr.mxu0 0.0
      %1153 = vmatpush1.msra.mxu0 0.0
      %1154 = vmatprep.subr.mxu0 0.0
      %1155 = vmatpush1.msra.mxu0 0.0
      %1156 = vmatprep.subr.mxu0 0.0
      %1157 = vmatpush1.msra.mxu0 0.0
      %1158 = vmatprep.subr.mxu0 0.0
      %1159 = vmatpush1.msra.mxu0 0.0
      %1160 = vmatprep.subr.mxu0 0.0
      %1161 = vmatpush1.msra.mxu0 0.0
      %1162 = vmatprep.subr.mxu0 0.0
      %1163 = vmatpush1.msra.mxu0 0.0
      %1164 = vmatprep.subr.mxu0 0.0
      %1165 = vmatpush1.msra.mxu0 0.0
      %1166 = vmatprep.subr.mxu0 0.0
      %1167 = vmatpush1.msra.mxu0 0.0
      %1168 = vmatprep.subr.mxu0 0.0
      %1169 = vmatpush1.msra.mxu0 0.0
      %1170 = vmatprep.subr.mxu0 0.0
      %1171 = vmatpush1.msra.mxu0 0.0
      %1172 = vmatprep.subr.mxu0 0.0
      %1173 = vmatpush1.msra.mxu0 0.0
      %1174 = vmatprep.subr.mxu0 0.0
      %1175 = vmatpush1.msra.mxu0 0.0
      %1176 = vmatprep.subr.mxu0 0.0
      %1177 = vmatpush1.msra.mxu0 0.0
      %1178 = vmatprep.subr.mxu0 0.0
      %1179 = vmatpush1.msra.mxu0 0.0
      %1180 = vmatprep.subr.mxu0 0.0
      %1181 = vmatpush1.msra.mxu0 0.0
      %1182 = vmatprep.subr.mxu0 0.0
      %1183 = vmatpush1.msra.mxu0 0.0
      %1184 = vmatprep.subr.mxu0 0.0
      %1185 = vmatpush1.msra.mxu0 0.0
      %1186 = vmatprep.subr.mxu0 0.0
      %1187 = vmatpush1.msra.mxu0 0.0
      %1188 = vmatprep.subr.mxu0 0.0
      %1189 = vmatpush1.msra.mxu0 0.0
      %1190 = vmatprep.subr.mxu0 0.0
      %1191 = vmatpush1.msra.mxu0 0.0
      %1192 = vmatprep.subr.mxu0 0.0
      %1193 = vmatpush1.msra.mxu0 0.0
      %1194 = vmatprep.subr.mxu0 0.0
      %1195 = vmatpush1.msra.mxu0 0.0
      %1196 = vmatprep.mubr.f32.mxu0 0.0
      %1197 = vmatmul.mubr.f32.gmra.mrb[0].mxu0 %v1121
      %v1198 = vpop.f32.mrb[0].mxu0
      %v1199 = vadd.f32 %v1098, %v1198
      %v1200 = vpop.f32.mrb[0].mxu0
      %v1201 = vadd.f32 %v1100, %v1200
      %1202 = vmatprep.mubr.f32.mxu0 0.0
      %1203 = vmatmul.mubr.f32.gmra.mrb[0].mxu0 %v1124
      %v1204 = vpop.f32.mrb[0].mxu0
      %v1205 = vadd.f32 %v1104, %v1204
      %v1206 = vpop.f32.mrb[0].mxu0
      %v1207 = vadd.f32 %v1106, %v1206
      %1208 = vmatprep.mubr.f32.mxu0 0.0
      %1209 = vmatmul.mubr.f32.gmra.mrb[0].mxu0 %v1127
      %v1210 = vpop.f32.mrb[0].mxu0
      %v1211 = vadd.f32 %v1110, %v1210
      %v1212 = vpop.f32.mrb[0].mxu0
      %v1213 = vadd.f32 %v1112, %v1212
      %1214 = vmatprep.mubr.f32.mxu0 0.0
      %1215 = vmatmul.mubr.f32.gmra.mrb[0].mxu0 %v1130
      %v1216 = vpop.f32.mrb[0].mxu0
      %v1217 = vadd.f32 %v1116, %v1216
      %v1218 = vpop.f32.mrb[0].mxu0
      %v1219 = vadd.f32 %v1118, %v1218
      %1220 = vdwg.mxu0
      %v1222 = vsel %vm1018, %v904, 0
      %v1225 = vsel %vm1018, %v905, 0
      %v1228 = vsel %vm1018, %v906, 0
      %v1231 = vsel %vm1018, %v907, 0
      %1233 = vmatprep.subr.mxu0 %v1017
      %1234 = vmatpush1.msra.mxu0 %v1016
      %1235 = vmatprep.subr.mxu0 0.0
      %1236 = vmatpush1.msra.mxu0 0.0
      %1237 = vmatprep.subr.mxu0 0.0
      %1238 = vmatpush1.msra.mxu0 0.0
      %1239 = vmatprep.subr.mxu0 0.0
      %1240 = vmatpush1.msra.mxu0 0.0
      %1241 = vmatprep.subr.mxu0 0.0
      %1242 = vmatpush1.msra.mxu0 0.0
      %1243 = vmatprep.subr.mxu0 0.0
      %1244 = vmatpush1.msra.mxu0 0.0
      %1245 = vmatprep.subr.mxu0 0.0
      %1246 = vmatpush1.msra.mxu0 0.0
      %1247 = vmatprep.subr.mxu0 0.0
      %1248 = vmatpush1.msra.mxu0 0.0
      %1249 = vmatprep.subr.mxu0 0.0
      %1250 = vmatpush1.msra.mxu0 0.0
      %1251 = vmatprep.subr.mxu0 0.0
      %1252 = vmatpush1.msra.mxu0 0.0
      %1253 = vmatprep.subr.mxu0 0.0
      %1254 = vmatpush1.msra.mxu0 0.0
      %1255 = vmatprep.subr.mxu0 0.0
      %1256 = vmatpush1.msra.mxu0 0.0
      %1257 = vmatprep.subr.mxu0 0.0
      %1258 = vmatpush1.msra.mxu0 0.0
      %1259 = vmatprep.subr.mxu0 0.0
      %1260 = vmatpush1.msra.mxu0 0.0
      %1261 = vmatprep.subr.mxu0 0.0
      %1262 = vmatpush1.msra.mxu0 0.0
      %1263 = vmatprep.subr.mxu0 0.0
      %1264 = vmatpush1.msra.mxu0 0.0
      %1265 = vmatprep.subr.mxu0 0.0
      %1266 = vmatpush1.msra.mxu0 0.0
      %1267 = vmatprep.subr.mxu0 0.0
      %1268 = vmatpush1.msra.mxu0 0.0
      %1269 = vmatprep.subr.mxu0 0.0
      %1270 = vmatpush1.msra.mxu0 0.0
      %1271 = vmatprep.subr.mxu0 0.0
      %1272 = vmatpush1.msra.mxu0 0.0
      %1273 = vmatprep.subr.mxu0 0.0
      %1274 = vmatpush1.msra.mxu0 0.0
      %1275 = vmatprep.subr.mxu0 0.0
      %1276 = vmatpush1.msra.mxu0 0.0
      %1277 = vmatprep.subr.mxu0 0.0
      %1278 = vmatpush1.msra.mxu0 0.0
      %1279 = vmatprep.subr.mxu0 0.0
      %1280 = vmatpush1.msra.mxu0 0.0
      %1281 = vmatprep.subr.mxu0 0.0
      %1282 = vmatpush1.msra.mxu0 0.0
      %1283 = vmatprep.subr.mxu0 0.0
      %1284 = vmatpush1.msra.mxu0 0.0
      %1285 = vmatprep.subr.mxu0 0.0
      %1286 = vmatpush1.msra.mxu0 0.0
      %1287 = vmatprep.subr.mxu0 0.0
      %1288 = vmatpush1.msra.mxu0 0.0
      %1289 = vmatprep.subr.mxu0 0.0
      %1290 = vmatpush1.msra.mxu0 0.0
      %1291 = vmatprep.subr.mxu0 0.0
      %1292 = vmatpush1.msra.mxu0 0.0
      %1293 = vmatprep.subr.mxu0 0.0
      %1294 = vmatpush1.msra.mxu0 0.0
      %1295 = vmatprep.subr.mxu0 0.0
      %1296 = vmatpush1.msra.mxu0 0.0
      %1297 = vmatprep.mubr.f32.mxu0 0.0
      %1298 = vmatmul.mubr.f32.gmra.mrb[0].mxu0 %v1222
      %v1299 = vpop.f32.mrb[0].mxu0
      %v1300 = vadd.f32 0.0, %v1299
      %v1301 = vpop.f32.mrb[0].mxu0
      %v1302 = vadd.f32 0.0, %v1301
      %1303 = vmatprep.mubr.f32.mxu0 0.0
      %1304 = vmatmul.mubr.f32.gmra.mrb[0].mxu0 %v1225
      %v1305 = vpop.f32.mrb[0].mxu0
      %v1306 = vadd.f32 0.0, %v1305
      %v1307 = vpop.f32.mrb[0].mxu0
      %v1308 = vadd.f32 0.0, %v1307
      %1309 = vmatprep.mubr.f32.mxu0 0.0
      %1310 = vmatmul.mubr.f32.gmra.mrb[0].mxu0 %v1228
      %v1311 = vpop.f32.mrb[0].mxu0
      %v1312 = vadd.f32 0.0, %v1311
      %v1313 = vpop.f32.mrb[0].mxu0
      %v1314 = vadd.f32 0.0, %v1313
      %1315 = vmatprep.mubr.f32.mxu0 0.0
      %1316 = vmatmul.mubr.f32.gmra.mrb[0].mxu0 %v1231
      %v1317 = vpop.f32.mrb[0].mxu0
      %v1318 = vadd.f32 0.0, %v1317
      %v1319 = vpop.f32.mrb[0].mxu0
      %v1320 = vadd.f32 0.0, %v1319
      %1321 = vdwg.mxu0
      %v1322 = vadd.f32 %v1199, %v1300
      %v1323 = vadd.f32 %v1201, %v1302
      %v1324 = vadd.f32 %v1205, %v1306
      %v1325 = vadd.f32 %v1207, %v1308
      %v1326 = vadd.f32 %v1211, %v1312
      %v1327 = vadd.f32 %v1213, %v1314
      %v1328 = vadd.f32 %v1217, %v1318
      %v1329 = vadd.f32 %v1219, %v1320
      %1330 = vrot.lane.b32.xlu0 %v895, 1
      %v1331 = vpop.permute.xlu0 %1330
      %1333 = vrot.lane.b32.xlu0 %v894, 1
      %v1334 = vpop.permute.xlu0 %1333
      %v1335 = vsel %vm977, %v1334, %v1331
      %v1338 = vsel %vm977, %v1331, %v1334
      %v1339 = vsel %vm991, %v1338, 0.0
      %v1340 = vsel %vm992, %v1335, 0.0
      %1341 = vrot.lane.b32.xlu0 %v894, 127
      %v1342 = vpop.permute.xlu0 %1341
      %1343 = vrot.lane.b32.xlu0 %v895, 127
      %v1344 = vpop.permute.xlu0 %1343
      %v1345 = vsel %vm999, %v1342, %v1344
      %v1349 = vsel %vm999, %v1344, %v1342
      %v1350 = vsel %vm1014, %v1345, 0.0
      %v1351 = vsel %vm1015, %v1349, 0.0
      %v1353 = vsel %vm1018, %v908, 0
      %v1356 = vsel %vm1018, %v909, 0
      %v1359 = vsel %vm1018, %v910, 0
      %v1362 = vsel %vm1018, %v911, 0
      %1364 = vmatprep.subr.mxu0 %v1340
      %1365 = vmatpush1.msra.mxu0 %v1339
      %1366 = vmatprep.subr.mxu0 0.0
      %1367 = vmatpush1.msra.mxu0 0.0
      %1368 = vmatprep.subr.mxu0 0.0
      %1369 = vmatpush1.msra.mxu0 0.0
      %1370 = vmatprep.subr.mxu0 0.0
      %1371 = vmatpush1.msra.mxu0 0.0
      %1372 = vmatprep.subr.mxu0 0.0
      %1373 = vmatpush1.msra.mxu0 0.0
      %1374 = vmatprep.subr.mxu0 0.0
      %1375 = vmatpush1.msra.mxu0 0.0
      %1376 = vmatprep.subr.mxu0 0.0
      %1377 = vmatpush1.msra.mxu0 0.0
      %1378 = vmatprep.subr.mxu0 0.0
      %1379 = vmatpush1.msra.mxu0 0.0
      %1380 = vmatprep.subr.mxu0 0.0
      %1381 = vmatpush1.msra.mxu0 0.0
      %1382 = vmatprep.subr.mxu0 0.0
      %1383 = vmatpush1.msra.mxu0 0.0
      %1384 = vmatprep.subr.mxu0 0.0
      %1385 = vmatpush1.msra.mxu0 0.0
      %1386 = vmatprep.subr.mxu0 0.0
      %1387 = vmatpush1.msra.mxu0 0.0
      %1388 = vmatprep.subr.mxu0 0.0
      %1389 = vmatpush1.msra.mxu0 0.0
      %1390 = vmatprep.subr.mxu0 0.0
      %1391 = vmatpush1.msra.mxu0 0.0
      %1392 = vmatprep.subr.mxu0 0.0
      %1393 = vmatpush1.msra.mxu0 0.0
      %1394 = vmatprep.subr.mxu0 0.0
      %1395 = vmatpush1.msra.mxu0 0.0
      %1396 = vmatprep.subr.mxu0 0.0
      %1397 = vmatpush1.msra.mxu0 0.0
      %1398 = vmatprep.subr.mxu0 0.0
      %1399 = vmatpush1.msra.mxu0 0.0
      %1400 = vmatprep.subr.mxu0 0.0
      %1401 = vmatpush1.msra.mxu0 0.0
      %1402 = vmatprep.subr.mxu0 0.0
      %1403 = vmatpush1.msra.mxu0 0.0
      %1404 = vmatprep.subr.mxu0 0.0
      %1405 = vmatpush1.msra.mxu0 0.0
      %1406 = vmatprep.subr.mxu0 0.0
      %1407 = vmatpush1.msra.mxu0 0.0
      %1408 = vmatprep.subr.mxu0 0.0
      %1409 = vmatpush1.msra.mxu0 0.0
      %1410 = vmatprep.subr.mxu0 0.0
      %1411 = vmatpush1.msra.mxu0 0.0
      %1412 = vmatprep.subr.mxu0 0.0
      %1413 = vmatpush1.msra.mxu0 0.0
      %1414 = vmatprep.subr.mxu0 0.0
      %1415 = vmatpush1.msra.mxu0 0.0
      %1416 = vmatprep.subr.mxu0 0.0
      %1417 = vmatpush1.msra.mxu0 0.0
      %1418 = vmatprep.subr.mxu0 0.0
      %1419 = vmatpush1.msra.mxu0 0.0
      %1420 = vmatprep.subr.mxu0 0.0
      %1421 = vmatpush1.msra.mxu0 0.0
      %1422 = vmatprep.subr.mxu0 0.0
      %1423 = vmatpush1.msra.mxu0 0.0
      %1424 = vmatprep.subr.mxu0 0.0
      %1425 = vmatpush1.msra.mxu0 0.0
      %1426 = vmatprep.subr.mxu0 0.0
      %1427 = vmatpush1.msra.mxu0 0.0
      %1428 = vmatprep.mubr.f32.mxu0 0.0
      %1429 = vmatmul.mubr.f32.gmra.mrb[0].mxu0 %v1353
      %v1430 = vpop.f32.mrb[0].mxu0
      %v1431 = vadd.f32 0.0, %v1430
      %v1432 = vpop.f32.mrb[0].mxu0
      %v1433 = vadd.f32 0.0, %v1432
      %1434 = vmatprep.mubr.f32.mxu0 0.0
      %1435 = vmatmul.mubr.f32.gmra.mrb[0].mxu0 %v1356
      %v1436 = vpop.f32.mrb[0].mxu0
      %v1437 = vadd.f32 0.0, %v1436
      %v1438 = vpop.f32.mrb[0].mxu0
      %v1439 = vadd.f32 0.0, %v1438
      %1440 = vmatprep.mubr.f32.mxu0 0.0
      %1441 = vmatmul.mubr.f32.gmra.mrb[0].mxu0 %v1359
      %v1442 = vpop.f32.mrb[0].mxu0
      %v1443 = vadd.f32 0.0, %v1442
      %v1444 = vpop.f32.mrb[0].mxu0
      %v1445 = vadd.f32 0.0, %v1444
      %1446 = vmatprep.mubr.f32.mxu0 0.0
      %1447 = vmatmul.mubr.f32.gmra.mrb[0].mxu0 %v1362
      %v1448 = vpop.f32.mrb[0].mxu0
      %v1449 = vadd.f32 0.0, %v1448
      %v1450 = vpop.f32.mrb[0].mxu0
      %v1451 = vadd.f32 0.0, %v1450
      %1452 = vdwg.mxu0
      %v1453 = vadd.f32 %v1322, %v1431
      %v1454 = vadd.f32 %v1323, %v1433
      %v1455 = vadd.f32 %v1324, %v1437
      %v1456 = vadd.f32 %v1325, %v1439
      %v1457 = vadd.f32 %v1326, %v1443
      %v1458 = vadd.f32 %v1327, %v1445
      %v1459 = vadd.f32 %v1328, %v1449
      %v1460 = vadd.f32 %v1329, %v1451
      %v1462 = vsel %vm1018, %v912, 0
      %v1465 = vsel %vm1018, %v913, 0
      %v1468 = vsel %vm1018, %v914, 0
      %v1471 = vsel %vm1018, %v915, 0
      %1473 = vmatprep.subr.mxu0 %v895
      %1474 = vmatpush1.msra.mxu0 %v894
      %1475 = vmatprep.subr.mxu0 0.0
      %1476 = vmatpush1.msra.mxu0 0.0
      %1477 = vmatprep.subr.mxu0 0.0
      %1478 = vmatpush1.msra.mxu0 0.0
      %1479 = vmatprep.subr.mxu0 0.0
      %1480 = vmatpush1.msra.mxu0 0.0
      %1481 = vmatprep.subr.mxu0 0.0
      %1482 = vmatpush1.msra.mxu0 0.0
      %1483 = vmatprep.subr.mxu0 0.0
      %1484 = vmatpush1.msra.mxu0 0.0
      %1485 = vmatprep.subr.mxu0 0.0
      %1486 = vmatpush1.msra.mxu0 0.0
      %1487 = vmatprep.subr.mxu0 0.0
      %1488 = vmatpush1.msra.mxu0 0.0
      %1489 = vmatprep.subr.mxu0 0.0
      %1490 = vmatpush1.msra.mxu0 0.0
      %1491 = vmatprep.subr.mxu0 0.0
      %1492 = vmatpush1.msra.mxu0 0.0
      %1493 = vmatprep.subr.mxu0 0.0
      %1494 = vmatpush1.msra.mxu0 0.0
      %1495 = vmatprep.subr.mxu0 0.0
      %1496 = vmatpush1.msra.mxu0 0.0
      %1497 = vmatprep.subr.mxu0 0.0
      %1498 = vmatpush1.msra.mxu0 0.0
      %1499 = vmatprep.subr.mxu0 0.0
      %1500 = vmatpush1.msra.mxu0 0.0
      %1501 = vmatprep.subr.mxu0 0.0
      %1502 = vmatpush1.msra.mxu0 0.0
      %1503 = vmatprep.subr.mxu0 0.0
      %1504 = vmatpush1.msra.mxu0 0.0
      %1505 = vmatprep.subr.mxu0 0.0
      %1506 = vmatpush1.msra.mxu0 0.0
      %1507 = vmatprep.subr.mxu0 0.0
      %1508 = vmatpush1.msra.mxu0 0.0
      %1509 = vmatprep.subr.mxu0 0.0
      %1510 = vmatpush1.msra.mxu0 0.0
      %1511 = vmatprep.subr.mxu0 0.0
      %1512 = vmatpush1.msra.mxu0 0.0
      %1513 = vmatprep.subr.mxu0 0.0
      %1514 = vmatpush1.msra.mxu0 0.0
      %1515 = vmatprep.subr.mxu0 0.0
      %1516 = vmatpush1.msra.mxu0 0.0
      %1517 = vmatprep.subr.mxu0 0.0
      %1518 = vmatpush1.msra.mxu0 0.0
      %1519 = vmatprep.subr.mxu0 0.0
      %1520 = vmatpush1.msra.mxu0 0.0
      %1521 = vmatprep.subr.mxu0 0.0
      %1522 = vmatpush1.msra.mxu0 0.0
      %1523 = vmatprep.subr.mxu0 0.0
      %1524 = vmatpush1.msra.mxu0 0.0
      %1525 = vmatprep.subr.mxu0 0.0
      %1526 = vmatpush1.msra.mxu0 0.0
      %1527 = vmatprep.subr.mxu0 0.0
      %1528 = vmatpush1.msra.mxu0 0.0
      %1529 = vmatprep.subr.mxu0 0.0
      %1530 = vmatpush1.msra.mxu0 0.0
      %1531 = vmatprep.subr.mxu0 0.0
      %1532 = vmatpush1.msra.mxu0 0.0
      %1533 = vmatprep.subr.mxu0 0.0
      %1534 = vmatpush1.msra.mxu0 0.0
      %1535 = vmatprep.subr.mxu0 0.0
      %1536 = vmatpush1.msra.mxu0 0.0
      %1537 = vmatprep.mubr.f32.mxu0 0.0
      %1538 = vmatmul.mubr.f32.gmra.mrb[0].mxu0 %v1462
      %v1539 = vpop.f32.mrb[0].mxu0
      %v1540 = vadd.f32 0.0, %v1539
      %v1541 = vpop.f32.mrb[0].mxu0
      %v1542 = vadd.f32 0.0, %v1541
      %1543 = vmatprep.mubr.f32.mxu0 0.0
      %1544 = vmatmul.mubr.f32.gmra.mrb[0].mxu0 %v1465
      %v1545 = vpop.f32.mrb[0].mxu0
      %v1546 = vadd.f32 0.0, %v1545
      %v1547 = vpop.f32.mrb[0].mxu0
      %v1548 = vadd.f32 0.0, %v1547
      %1549 = vmatprep.mubr.f32.mxu0 0.0
      %1550 = vmatmul.mubr.f32.gmra.mrb[0].mxu0 %v1468
      %v1551 = vpop.f32.mrb[0].mxu0
      %v1552 = vadd.f32 0.0, %v1551
      %v1553 = vpop.f32.mrb[0].mxu0
      %v1554 = vadd.f32 0.0, %v1553
      %1555 = vmatprep.mubr.f32.mxu0 0.0
      %1556 = vmatmul.mubr.f32.gmra.mrb[0].mxu0 %v1471
      %v1557 = vpop.f32.mrb[0].mxu0
      %v1558 = vadd.f32 0.0, %v1557
      %v1559 = vpop.f32.mrb[0].mxu0
      %v1560 = vadd.f32 0.0, %v1559
      %1561 = vdwg.mxu0
      %v1562 = vadd.f32 %v1453, %v1540
      %v1563 = vadd.f32 %v1454, %v1542
      %v1564 = vadd.f32 %v1455, %v1546
      %v1565 = vadd.f32 %v1456, %v1548
      %v1566 = vadd.f32 %v1457, %v1552
      %v1567 = vadd.f32 %v1458, %v1554
      %v1568 = vadd.f32 %v1459, %v1558
      %v1569 = vadd.f32 %v1460, %v1560
      %v1571 = vsel %vm1018, %v916, 0
      %v1574 = vsel %vm1018, %v917, 0
      %v1577 = vsel %vm1018, %v918, 0
      %v1580 = vsel %vm1018, %v919, 0
      %1582 = vmatprep.subr.mxu0 %v1351
      %1583 = vmatpush1.msra.mxu0 %v1350
      %1584 = vmatprep.subr.mxu0 0.0
      %1585 = vmatpush1.msra.mxu0 0.0
      %1586 = vmatprep.subr.mxu0 0.0
      %1587 = vmatpush1.msra.mxu0 0.0
      %1588 = vmatprep.subr.mxu0 0.0
      %1589 = vmatpush1.msra.mxu0 0.0
      %1590 = vmatprep.subr.mxu0 0.0
      %1591 = vmatpush1.msra.mxu0 0.0
      %1592 = vmatprep.subr.mxu0 0.0
      %1593 = vmatpush1.msra.mxu0 0.0
      %1594 = vmatprep.subr.mxu0 0.0
      %1595 = vmatpush1.msra.mxu0 0.0
      %1596 = vmatprep.subr.mxu0 0.0
      %1597 = vmatpush1.msra.mxu0 0.0
      %1598 = vmatprep.subr.mxu0 0.0
      %1599 = vmatpush1.msra.mxu0 0.0
      %1600 = vmatprep.subr.mxu0 0.0
      %1601 = vmatpush1.msra.mxu0 0.0
      %1602 = vmatprep.subr.mxu0 0.0
      %1603 = vmatpush1.msra.mxu0 0.0
      %1604 = vmatprep.subr.mxu0 0.0
      %1605 = vmatpush1.msra.mxu0 0.0
      %1606 = vmatprep.subr.mxu0 0.0
      %1607 = vmatpush1.msra.mxu0 0.0
      %1608 = vmatprep.subr.mxu0 0.0
      %1609 = vmatpush1.msra.mxu0 0.0
      %1610 = vmatprep.subr.mxu0 0.0
      %1611 = vmatpush1.msra.mxu0 0.0
      %1612 = vmatprep.subr.mxu0 0.0
      %1613 = vmatpush1.msra.mxu0 0.0
      %1614 = vmatprep.subr.mxu0 0.0
      %1615 = vmatpush1.msra.mxu0 0.0
      %1616 = vmatprep.subr.mxu0 0.0
      %1617 = vmatpush1.msra.mxu0 0.0
      %1618 = vmatprep.subr.mxu0 0.0
      %1619 = vmatpush1.msra.mxu0 0.0
      %1620 = vmatprep.subr.mxu0 0.0
      %1621 = vmatpush1.msra.mxu0 0.0
      %1622 = vmatprep.subr.mxu0 0.0
      %1623 = vmatpush1.msra.mxu0 0.0
      %1624 = vmatprep.subr.mxu0 0.0
      %1625 = vmatpush1.msra.mxu0 0.0
      %1626 = vmatprep.subr.mxu0 0.0
      %1627 = vmatpush1.msra.mxu0 0.0
      %1628 = vmatprep.subr.mxu0 0.0
      %1629 = vmatpush1.msra.mxu0 0.0
      %1630 = vmatprep.subr.mxu0 0.0
      %1631 = vmatpush1.msra.mxu0 0.0
      %1632 = vmatprep.subr.mxu0 0.0
      %1633 = vmatpush1.msra.mxu0 0.0
      %1634 = vmatprep.subr.mxu0 0.0
      %1635 = vmatpush1.msra.mxu0 0.0
      %1636 = vmatprep.subr.mxu0 0.0
      %1637 = vmatpush1.msra.mxu0 0.0
      %1638 = vmatprep.subr.mxu0 0.0
      %1639 = vmatpush1.msra.mxu0 0.0
      %1640 = vmatprep.subr.mxu0 0.0
      %1641 = vmatpush1.msra.mxu0 0.0
      %1642 = vmatprep.subr.mxu0 0.0
      %1643 = vmatpush1.msra.mxu0 0.0
      %1644 = vmatprep.subr.mxu0 0.0
      %1645 = vmatpush1.msra.mxu0 0.0
      %1646 = vmatprep.mubr.f32.mxu0 0.0
      %1647 = vmatmul.mubr.f32.gmra.mrb[0].mxu0 %v1571
      %v1648 = vpop.f32.mrb[0].mxu0
      %v1649 = vadd.f32 0.0, %v1648
      %v1650 = vpop.f32.mrb[0].mxu0
      %v1651 = vadd.f32 0.0, %v1650
      %1652 = vmatprep.mubr.f32.mxu0 0.0
      %1653 = vmatmul.mubr.f32.gmra.mrb[0].mxu0 %v1574
      %v1654 = vpop.f32.mrb[0].mxu0
      %v1655 = vadd.f32 0.0, %v1654
      %v1656 = vpop.f32.mrb[0].mxu0
      %v1657 = vadd.f32 0.0, %v1656
      %1658 = vmatprep.mubr.f32.mxu0 0.0
      %1659 = vmatmul.mubr.f32.gmra.mrb[0].mxu0 %v1577
      %v1660 = vpop.f32.mrb[0].mxu0
      %v1661 = vadd.f32 0.0, %v1660
      %v1662 = vpop.f32.mrb[0].mxu0
      %v1663 = vadd.f32 0.0, %v1662
      %1664 = vmatprep.mubr.f32.mxu0 0.0
      %1665 = vmatmul.mubr.f32.gmra.mrb[0].mxu0 %v1580
      %v1666 = vpop.f32.mrb[0].mxu0
      %v1667 = vadd.f32 0.0, %v1666
      %v1668 = vpop.f32.mrb[0].mxu0
      %v1669 = vadd.f32 0.0, %v1668
      %1670 = vdwg.mxu0
      %v1671 = vadd.f32 %v1562, %v1649
      %v1672 = vadd.f32 %v1563, %v1651
      %v1673 = vadd.f32 %v1564, %v1655
      %v1674 = vadd.f32 %v1565, %v1657
      %v1675 = vadd.f32 %v1566, %v1661
      %v1676 = vadd.f32 %v1567, %v1663
      %v1677 = vadd.f32 %v1568, %v1667
      %v1678 = vadd.f32 %v1569, %v1669
      %1680 = vrot.lane.b32.xlu0 %v969, 1
      %v1681 = vpop.permute.xlu0 %1680
      %1684 = vrot.lane.b32.xlu0 %v968, 1
      %v1685 = vpop.permute.xlu0 %1684
      %v1686 = vsel %vm977, %v1685, %v1681
      %v1689 = vsel %vm977, %v1681, %v1685
      %v1690 = vsel %vm991, %v1689, 0.0
      %v1691 = vsel %vm992, %v1686, 0.0
      %1692 = vrot.lane.b32.xlu0 %v968, 127
      %v1693 = vpop.permute.xlu0 %1692
      %1694 = vrot.lane.b32.xlu0 %v969, 127
      %v1695 = vpop.permute.xlu0 %1694
      %v1696 = vsel %vm999, %v1693, %v1695
      %v1700 = vsel %vm999, %v1695, %v1693
      %v1701 = vsel %vm1014, %v1696, 0.0
      %v1702 = vsel %vm1015, %v1700, 0.0
      %v1704 = vsel %vm1018, %v920, 0
      %v1707 = vsel %vm1018, %v921, 0
      %v1710 = vsel %vm1018, %v922, 0
      %v1713 = vsel %vm1018, %v923, 0
      %1715 = vmatprep.subr.mxu0 %v1691
      %1716 = vmatpush1.msra.mxu0 %v1690
      %1717 = vmatprep.subr.mxu0 0.0
      %1718 = vmatpush1.msra.mxu0 0.0
      %1719 = vmatprep.subr.mxu0 0.0
      %1720 = vmatpush1.msra.mxu0 0.0
      %1721 = vmatprep.subr.mxu0 0.0
      %1722 = vmatpush1.msra.mxu0 0.0
      %1723 = vmatprep.subr.mxu0 0.0
      %1724 = vmatpush1.msra.mxu0 0.0
      %1725 = vmatprep.subr.mxu0 0.0
      %1726 = vmatpush1.msra.mxu0 0.0
      %1727 = vmatprep.subr.mxu0 0.0
      %1728 = vmatpush1.msra.mxu0 0.0
      %1729 = vmatprep.subr.mxu0 0.0
      %1730 = vmatpush1.msra.mxu0 0.0
      %1731 = vmatprep.subr.mxu0 0.0
      %1732 = vmatpush1.msra.mxu0 0.0
      %1733 = vmatprep.subr.mxu0 0.0
      %1734 = vmatpush1.msra.mxu0 0.0
      %1735 = vmatprep.subr.mxu0 0.0
      %1736 = vmatpush1.msra.mxu0 0.0
      %1737 = vmatprep.subr.mxu0 0.0
      %1738 = vmatpush1.msra.mxu0 0.0
      %1739 = vmatprep.subr.mxu0 0.0
      %1740 = vmatpush1.msra.mxu0 0.0
      %1741 = vmatprep.subr.mxu0 0.0
      %1742 = vmatpush1.msra.mxu0 0.0
      %1743 = vmatprep.subr.mxu0 0.0
      %1744 = vmatpush1.msra.mxu0 0.0
      %1745 = vmatprep.subr.mxu0 0.0
      %1746 = vmatpush1.msra.mxu0 0.0
      %1747 = vmatprep.subr.mxu0 0.0
      %1748 = vmatpush1.msra.mxu0 0.0
      %1749 = vmatprep.subr.mxu0 0.0
      %1750 = vmatpush1.msra.mxu0 0.0
      %1751 = vmatprep.subr.mxu0 0.0
      %1752 = vmatpush1.msra.mxu0 0.0
      %1753 = vmatprep.subr.mxu0 0.0
      %1754 = vmatpush1.msra.mxu0 0.0
      %1755 = vmatprep.subr.mxu0 0.0
      %1756 = vmatpush1.msra.mxu0 0.0
      %1757 = vmatprep.subr.mxu0 0.0
      %1758 = vmatpush1.msra.mxu0 0.0
      %1759 = vmatprep.subr.mxu0 0.0
      %1760 = vmatpush1.msra.mxu0 0.0
      %1761 = vmatprep.subr.mxu0 0.0
      %1762 = vmatpush1.msra.mxu0 0.0
      %1763 = vmatprep.subr.mxu0 0.0
      %1764 = vmatpush1.msra.mxu0 0.0
      %1765 = vmatprep.subr.mxu0 0.0
      %1766 = vmatpush1.msra.mxu0 0.0
      %1767 = vmatprep.subr.mxu0 0.0
      %1768 = vmatpush1.msra.mxu0 0.0
      %1769 = vmatprep.subr.mxu0 0.0
      %1770 = vmatpush1.msra.mxu0 0.0
      %1771 = vmatprep.subr.mxu0 0.0
      %1772 = vmatpush1.msra.mxu0 0.0
      %1773 = vmatprep.subr.mxu0 0.0
      %1774 = vmatpush1.msra.mxu0 0.0
      %1775 = vmatprep.subr.mxu0 0.0
      %1776 = vmatpush1.msra.mxu0 0.0
      %1777 = vmatprep.subr.mxu0 0.0
      %1778 = vmatpush1.msra.mxu0 0.0
      %1779 = vmatprep.mubr.f32.mxu0 0.0
      %1780 = vmatmul.mubr.f32.gmra.mrb[0].mxu0 %v1704
      %v1781 = vpop.f32.mrb[0].mxu0
      %v1782 = vadd.f32 0.0, %v1781
      %v1783 = vpop.f32.mrb[0].mxu0
      %v1784 = vadd.f32 0.0, %v1783
      %1785 = vmatprep.mubr.f32.mxu0 0.0
      %1786 = vmatmul.mubr.f32.gmra.mrb[0].mxu0 %v1707
      %v1787 = vpop.f32.mrb[0].mxu0
      %v1788 = vadd.f32 0.0, %v1787
      %v1789 = vpop.f32.mrb[0].mxu0
      %v1790 = vadd.f32 0.0, %v1789
      %1791 = vmatprep.mubr.f32.mxu0 0.0
      %1792 = vmatmul.mubr.f32.gmra.mrb[0].mxu0 %v1710
      %v1793 = vpop.f32.mrb[0].mxu0
      %v1794 = vadd.f32 0.0, %v1793
      %v1795 = vpop.f32.mrb[0].mxu0
      %v1796 = vadd.f32 0.0, %v1795
      %1797 = vmatprep.mubr.f32.mxu0 0.0
      %1798 = vmatmul.mubr.f32.gmra.mrb[0].mxu0 %v1713
      %v1799 = vpop.f32.mrb[0].mxu0
      %v1800 = vadd.f32 0.0, %v1799
      %v1801 = vpop.f32.mrb[0].mxu0
      %v1802 = vadd.f32 0.0, %v1801
      %1803 = vdwg.mxu0
      %v1804 = vadd.f32 %v1671, %v1782
      %v1805 = vadd.f32 %v1672, %v1784
      %v1806 = vadd.f32 %v1673, %v1788
      %v1807 = vadd.f32 %v1674, %v1790
      %v1808 = vadd.f32 %v1675, %v1794
      %v1809 = vadd.f32 %v1676, %v1796
      %v1810 = vadd.f32 %v1677, %v1800
      %v1811 = vadd.f32 %v1678, %v1802
      %v1813 = vsel %vm1018, %v924, 0
      %v1816 = vsel %vm1018, %v925, 0
      %v1819 = vsel %vm1018, %v926, 0
      %v1822 = vsel %vm1018, %v927, 0
      %1824 = vmatprep.subr.mxu0 %v969
      %1825 = vmatpush1.msra.mxu0 %v968
      %1826 = vmatprep.subr.mxu0 0.0
      %1827 = vmatpush1.msra.mxu0 0.0
      %1828 = vmatprep.subr.mxu0 0.0
      %1829 = vmatpush1.msra.mxu0 0.0
      %1830 = vmatprep.subr.mxu0 0.0
      %1831 = vmatpush1.msra.mxu0 0.0
      %1832 = vmatprep.subr.mxu0 0.0
      %1833 = vmatpush1.msra.mxu0 0.0
      %1834 = vmatprep.subr.mxu0 0.0
      %1835 = vmatpush1.msra.mxu0 0.0
      %1836 = vmatprep.subr.mxu0 0.0
      %1837 = vmatpush1.msra.mxu0 0.0
      %1838 = vmatprep.subr.mxu0 0.0
      %1839 = vmatpush1.msra.mxu0 0.0
      %1840 = vmatprep.subr.mxu0 0.0
      %1841 = vmatpush1.msra.mxu0 0.0
      %1842 = vmatprep.subr.mxu0 0.0
      %1843 = vmatpush1.msra.mxu0 0.0
      %1844 = vmatprep.subr.mxu0 0.0
      %1845 = vmatpush1.msra.mxu0 0.0
      %1846 = vmatprep.subr.mxu0 0.0
      %1847 = vmatpush1.msra.mxu0 0.0
      %1848 = vmatprep.subr.mxu0 0.0
      %1849 = vmatpush1.msra.mxu0 0.0
      %1850 = vmatprep.subr.mxu0 0.0
      %1851 = vmatpush1.msra.mxu0 0.0
      %1852 = vmatprep.subr.mxu0 0.0
      %1853 = vmatpush1.msra.mxu0 0.0
      %1854 = vmatprep.subr.mxu0 0.0
      %1855 = vmatpush1.msra.mxu0 0.0
      %1856 = vmatprep.subr.mxu0 0.0
      %1857 = vmatpush1.msra.mxu0 0.0
      %1858 = vmatprep.subr.mxu0 0.0
      %1859 = vmatpush1.msra.mxu0 0.0
      %1860 = vmatprep.subr.mxu0 0.0
      %1861 = vmatpush1.msra.mxu0 0.0
      %1862 = vmatprep.subr.mxu0 0.0
      %1863 = vmatpush1.msra.mxu0 0.0
      %1864 = vmatprep.subr.mxu0 0.0
      %1865 = vmatpush1.msra.mxu0 0.0
      %1866 = vmatprep.subr.mxu0 0.0
      %1867 = vmatpush1.msra.mxu0 0.0
      %1868 = vmatprep.subr.mxu0 0.0
      %1869 = vmatpush1.msra.mxu0 0.0
      %1870 = vmatprep.subr.mxu0 0.0
      %1871 = vmatpush1.msra.mxu0 0.0
      %1872 = vmatprep.subr.mxu0 0.0
      %1873 = vmatpush1.msra.mxu0 0.0
      %1874 = vmatprep.subr.mxu0 0.0
      %1875 = vmatpush1.msra.mxu0 0.0
      %1876 = vmatprep.subr.mxu0 0.0
      %1877 = vmatpush1.msra.mxu0 0.0
      %1878 = vmatprep.subr.mxu0 0.0
      %1879 = vmatpush1.msra.mxu0 0.0
      %1880 = vmatprep.subr.mxu0 0.0
      %1881 = vmatpush1.msra.mxu0 0.0
      %1882 = vmatprep.subr.mxu0 0.0
      %1883 = vmatpush1.msra.mxu0 0.0
      %1884 = vmatprep.subr.mxu0 0.0
      %1885 = vmatpush1.msra.mxu0 0.0
      %1886 = vmatprep.subr.mxu0 0.0
      %1887 = vmatpush1.msra.mxu0 0.0
      %1888 = vmatprep.mubr.f32.mxu0 0.0
      %1889 = vmatmul.mubr.f32.gmra.mrb[0].mxu0 %v1813
      %v1890 = vpop.f32.mrb[0].mxu0
      %v1891 = vadd.f32 0.0, %v1890
      %v1892 = vpop.f32.mrb[0].mxu0
      %v1893 = vadd.f32 0.0, %v1892
      %1894 = vmatprep.mubr.f32.mxu0 0.0
      %1895 = vmatmul.mubr.f32.gmra.mrb[0].mxu0 %v1816
      %v1896 = vpop.f32.mrb[0].mxu0
      %v1897 = vadd.f32 0.0, %v1896
      %v1898 = vpop.f32.mrb[0].mxu0
      %v1899 = vadd.f32 0.0, %v1898
      %1900 = vmatprep.mubr.f32.mxu0 0.0
      %1901 = vmatmul.mubr.f32.gmra.mrb[0].mxu0 %v1819
      %v1902 = vpop.f32.mrb[0].mxu0
      %v1903 = vadd.f32 0.0, %v1902
      %v1904 = vpop.f32.mrb[0].mxu0
      %v1905 = vadd.f32 0.0, %v1904
      %1906 = vmatprep.mubr.f32.mxu0 0.0
      %1907 = vmatmul.mubr.f32.gmra.mrb[0].mxu0 %v1822
      %v1908 = vpop.f32.mrb[0].mxu0
      %v1909 = vadd.f32 0.0, %v1908
      %v1910 = vpop.f32.mrb[0].mxu0
      %v1911 = vadd.f32 0.0, %v1910
      %1912 = vdwg.mxu0
      %v1913 = vadd.f32 %v1804, %v1891
      %v1914 = vadd.f32 %v1805, %v1893
      %v1915 = vadd.f32 %v1806, %v1897
      %v1916 = vadd.f32 %v1807, %v1899
      %v1917 = vadd.f32 %v1808, %v1903
      %v1918 = vadd.f32 %v1809, %v1905
      %v1919 = vadd.f32 %v1810, %v1909
      %v1920 = vadd.f32 %v1811, %v1911
      %v1922 = vsel %vm1018, %v928, 0
      %v1925 = vsel %vm1018, %v929, 0
      %v1928 = vsel %vm1018, %v930, 0
      %v1931 = vsel %vm1018, %v931, 0
      %1933 = vmatprep.subr.mxu0 %v1702
      %1934 = vmatpush1.msra.mxu0 %v1701
      %1935 = vmatprep.subr.mxu0 0.0
      %1936 = vmatpush1.msra.mxu0 0.0
      %1937 = vmatprep.subr.mxu0 0.0
      %1938 = vmatpush1.msra.mxu0 0.0
      %1939 = vmatprep.subr.mxu0 0.0
      %1940 = vmatpush1.msra.mxu0 0.0
      %1941 = vmatprep.subr.mxu0 0.0
      %1942 = vmatpush1.msra.mxu0 0.0
      %1943 = vmatprep.subr.mxu0 0.0
      %1944 = vmatpush1.msra.mxu0 0.0
      %1945 = vmatprep.subr.mxu0 0.0
      %1946 = vmatpush1.msra.mxu0 0.0
      %1947 = vmatprep.subr.mxu0 0.0
      %1948 = vmatpush1.msra.mxu0 0.0
      %1949 = vmatprep.subr.mxu0 0.0
      %1950 = vmatpush1.msra.mxu0 0.0
      %1951 = vmatprep.subr.mxu0 0.0
      %1952 = vmatpush1.msra.mxu0 0.0
      %1953 = vmatprep.subr.mxu0 0.0
      %1954 = vmatpush1.msra.mxu0 0.0
      %1955 = vmatprep.subr.mxu0 0.0
      %1956 = vmatpush1.msra.mxu0 0.0
      %1957 = vmatprep.subr.mxu0 0.0
      %1958 = vmatpush1.msra.mxu0 0.0
      %1959 = vmatprep.subr.mxu0 0.0
      %1960 = vmatpush1.msra.mxu0 0.0
      %1961 = vmatprep.subr.mxu0 0.0
      %1962 = vmatpush1.msra.mxu0 0.0
      %1963 = vmatprep.subr.mxu0 0.0
      %1964 = vmatpush1.msra.mxu0 0.0
      %1965 = vmatprep.subr.mxu0 0.0
      %1966 = vmatpush1.msra.mxu0 0.0
      %1967 = vmatprep.subr.mxu0 0.0
      %1968 = vmatpush1.msra.mxu0 0.0
      %1969 = vmatprep.subr.mxu0 0.0
      %1970 = vmatpush1.msra.mxu0 0.0
      %1971 = vmatprep.subr.mxu0 0.0
      %1972 = vmatpush1.msra.mxu0 0.0
      %1973 = vmatprep.subr.mxu0 0.0
      %1974 = vmatpush1.msra.mxu0 0.0
      %1975 = vmatprep.subr.mxu0 0.0
      %1976 = vmatpush1.msra.mxu0 0.0
      %1977 = vmatprep.subr.mxu0 0.0
      %1978 = vmatpush1.msra.mxu0 0.0
      %1979 = vmatprep.subr.mxu0 0.0
      %1980 = vmatpush1.msra.mxu0 0.0
      %1981 = vmatprep.subr.mxu0 0.0
      %1982 = vmatpush1.msra.mxu0 0.0
      %1983 = vmatprep.subr.mxu0 0.0
      %1984 = vmatpush1.msra.mxu0 0.0
      %1985 = vmatprep.subr.mxu0 0.0
      %1986 = vmatpush1.msra.mxu0 0.0
      %1987 = vmatprep.subr.mxu0 0.0
      %1988 = vmatpush1.msra.mxu0 0.0
      %1989 = vmatprep.subr.mxu0 0.0
      %1990 = vmatpush1.msra.mxu0 0.0
      %1991 = vmatprep.subr.mxu0 0.0
      %1992 = vmatpush1.msra.mxu0 0.0
      %1993 = vmatprep.subr.mxu0 0.0
      %1994 = vmatpush1.msra.mxu0 0.0
      %1995 = vmatprep.subr.mxu0 0.0
      %1996 = vmatpush1.msra.mxu0 0.0
      %1997 = vmatprep.mubr.f32.mxu0 0.0
      %1998 = vmatmul.mubr.f32.gmra.mrb[0].mxu0 %v1922
      %v1999 = vpop.f32.mrb[0].mxu0
      %v2000 = vadd.f32 0.0, %v1999
      %v2001 = vpop.f32.mrb[0].mxu0
      %v2002 = vadd.f32 0.0, %v2001
      %2003 = vmatprep.mubr.f32.mxu0 0.0
      %2004 = vmatmul.mubr.f32.gmra.mrb[0].mxu0 %v1925
      %v2005 = vpop.f32.mrb[0].mxu0
      %v2006 = vadd.f32 0.0, %v2005
      %v2007 = vpop.f32.mrb[0].mxu0
      %v2008 = vadd.f32 0.0, %v2007
      %2009 = vmatprep.mubr.f32.mxu0 0.0
      %2010 = vmatmul.mubr.f32.gmra.mrb[0].mxu0 %v1928
      %v2011 = vpop.f32.mrb[0].mxu0
      %v2012 = vadd.f32 0.0, %v2011
      %v2013 = vpop.f32.mrb[0].mxu0
      %v2014 = vadd.f32 0.0, %v2013
      %2015 = vmatprep.mubr.f32.mxu0 0.0
      %2016 = vmatmul.mubr.f32.gmra.mrb[0].mxu0 %v1931
      %v2017 = vpop.f32.mrb[0].mxu0
      %v2018 = vadd.f32 0.0, %v2017
      %v2019 = vpop.f32.mrb[0].mxu0
      %v2020 = vadd.f32 0.0, %v2019
      %2021 = vdwg.mxu0
      %v2022 = vadd.f32 %v1913, %v2000
      %v2023 = vadd.f32 %v1914, %v2002
      %v2024 = vadd.f32 %v1915, %v2006
      %v2025 = vadd.f32 %v1916, %v2008
      %v2026 = vadd.f32 %v1917, %v2012
      %v2027 = vadd.f32 %v1918, %v2014
      %v2028 = vadd.f32 %v1919, %v2018
      %v2029 = vadd.f32 %v1920, %v2020
      %2031 = vset.pattern.permute.xlu0 0
      %2032 = vperm.xlu0 %2031, %v932
      %v2033 = vpop.permute.xlu0 %2032
      %2036 = vset.pattern.permute.xlu0 0
      %2037 = vperm.xlu0 %2036, %v933
      %v2038 = vpop.permute.xlu0 %2037
      %2041 = vset.pattern.permute.xlu0 0
      %2042 = vperm.xlu0 %2041, %v934
      %v2043 = vpop.permute.xlu0 %2042
      %2046 = vset.pattern.permute.xlu0 0
      %2047 = vperm.xlu0 %2046, %v935
      %v2048 = vpop.permute.xlu0 %2047
      %v2050 = vadd.f32 %v2022, %v2033
      %v2051 = vadd.f32 %v2023, %v2033
      %v2052 = vadd.f32 %v2024, %v2038
      %v2053 = vadd.f32 %v2025, %v2038
      %v2054 = vadd.f32 %v2026, %v2043
      %v2055 = vadd.f32 %v2027, %v2043
      %v2056 = vadd.f32 %v2028, %v2048
      %v2057 = vadd.f32 %v2029, %v2048
      %v2058 = vmax.f32 %v2050, 0.0
      %v2059 = vmax.f32 %v2051, 0.0
      %v2060 = vmax.f32 %v2052, 0.0
      %v2061 = vmax.f32 %v2053, 0.0
      %v2062 = vmax.f32 %v2054, 0.0
      %v2063 = vmax.f32 %v2055, 0.0
      %v2064 = vmax.f32 %v2056, 0.0
      %v2065 = vmax.f32 %v2057, 0.0
      %v2066 = vld [vmem:[%s490] sm:$0xff]
      %v2067 = vld [vmem:[%s490 + $0x8] sm:$0xff]
      %v2068 = vld [vmem:[%s490 + $0x10] sm:$0xff]
      %v2069 = vld [vmem:[%s490 + $0x18] sm:$0xff]
      %v2070 = vld [vmem:[%s490 + $0x20] sm:$0xff]
      %v2071 = vld [vmem:[%s490 + $0x28] sm:$0xff]
      %v2072 = vld [vmem:[%s490 + $0x30] sm:$0xff]
      %v2073 = vld [vmem:[%s490 + $0x38] sm:$0xff]
      %v2074 = vld [vmem:[%s490 + $0x40] sm:$0xff]
      %v2075 = vld [vmem:[%s494] sm:$0xff]
      %2080 = vrot.lane.b32.xlu0 %v2059, 16
      %v2081 = vpop.permute.xlu0 %2080
      %2082 = vrot.lane.b32.xlu0 %v2061, 16
      %v2083 = vpop.permute.xlu0 %2082
      %2084 = vrot.lane.b32.xlu0 %v2063, 16
      %v2085 = vpop.permute.xlu0 %2084
      %2086 = vrot.lane.b32.xlu0 %v2065, 16
      %v2087 = vpop.permute.xlu0 %2086
      %2096 = vrot.lane.b32.xlu0 %v2058, 16
      %v2097 = vpop.permute.xlu0 %2096
      %2098 = vrot.lane.b32.xlu0 %v2060, 16
      %v2099 = vpop.permute.xlu0 %2098
      %2100 = vrot.lane.b32.xlu0 %v2062, 16
      %v2101 = vpop.permute.xlu0 %2100
      %2102 = vrot.lane.b32.xlu0 %v2064, 16
      %v2103 = vpop.permute.xlu0 %2102
      %v2104 = vsel %vm943, %v2097, %v2081
      %v2105 = vsel %vm943, %v2099, %v2083
      %v2106 = vsel %vm943, %v2101, %v2085
      %v2107 = vsel %vm943, %v2103, %v2087
      %v2116 = vsel %vm943, %v2081, %v2097
      %v2117 = vsel %vm943, %v2083, %v2099
      %v2118 = vsel %vm943, %v2085, %v2101
      %v2119 = vsel %vm943, %v2087, %v2103
      %v2120 = vsel %vm950, %v2116, 0.0
      %v2121 = vsel %vm951, %v2104, 0.0
      %v2122 = vsel %vm950, %v2117, 0.0
      %v2123 = vsel %vm951, %v2105, 0.0
      %v2124 = vsel %vm950, %v2118, 0.0
      %v2125 = vsel %vm951, %v2106, 0.0
      %v2126 = vsel %vm950, %v2119, 0.0
      %v2127 = vsel %vm951, %v2107, 0.0
      %2128 = vrot.lane.b32.xlu0 %v2058, 112
      %v2129 = vpop.permute.xlu0 %2128
      %2130 = vrot.lane.b32.xlu0 %v2059, 112
      %v2131 = vpop.permute.xlu0 %2130
      %2132 = vrot.lane.b32.xlu0 %v2060, 112
      %v2133 = vpop.permute.xlu0 %2132
      %2134 = vrot.lane.b32.xlu0 %v2061, 112
      %v2135 = vpop.permute.xlu0 %2134
      %2136 = vrot.lane.b32.xlu0 %v2062, 112
      %v2137 = vpop.permute.xlu0 %2136
      %2138 = vrot.lane.b32.xlu0 %v2063, 112
      %v2139 = vpop.permute.xlu0 %2138
      %2140 = vrot.lane.b32.xlu0 %v2064, 112
      %v2141 = vpop.permute.xlu0 %2140
      %2142 = vrot.lane.b32.xlu0 %v2065, 112
      %v2143 = vpop.permute.xlu0 %2142
      %v2144 = vsel %vm958, %v2129, %v2131
      %v2145 = vsel %vm958, %v2133, %v2135
      %v2146 = vsel %vm958, %v2137, %v2139
      %v2147 = vsel %vm958, %v2141, %v2143
      %v2160 = vsel %vm958, %v2131, %v2129
      %v2161 = vsel %vm958, %v2135, %v2133
      %v2162 = vsel %vm958, %v2139, %v2137
      %v2163 = vsel %vm958, %v2143, %v2141
      %v2164 = vsel %vm966, %v2144, 0.0
      %v2165 = vsel %vm967, %v2160, 0.0
      %v2166 = vsel %vm966, %v2145, 0.0
      %v2167 = vsel %vm967, %v2161, 0.0
      %v2168 = vsel %vm966, %v2146, 0.0
      %v2169 = vsel %vm967, %v2162, 0.0
      %v2170 = vsel %vm966, %v2147, 0.0
      %v2171 = vsel %vm967, %v2163, 0.0
      %2176 = vrot.lane.b32.xlu0 %v2121, 1
      %v2177 = vpop.permute.xlu0 %2176
      %2178 = vrot.lane.b32.xlu0 %v2123, 1
      %v2179 = vpop.permute.xlu0 %2178
      %2180 = vrot.lane.b32.xlu0 %v2125, 1
      %v2181 = vpop.permute.xlu0 %2180
      %2182 = vrot.lane.b32.xlu0 %v2127, 1
      %v2183 = vpop.permute.xlu0 %2182
      %2192 = vrot.lane.b32.xlu0 %v2120, 1
      %v2193 = vpop.permute.xlu0 %2192
      %2194 = vrot.lane.b32.xlu0 %v2122, 1
      %v2195 = vpop.permute.xlu0 %2194
      %2196 = vrot.lane.b32.xlu0 %v2124, 1
      %v2197 = vpop.permute.xlu0 %2196
      %2198 = vrot.lane.b32.xlu0 %v2126, 1
      %v2199 = vpop.permute.xlu0 %2198
      %v2200 = vsel %vm977, %v2193, %v2177
      %v2201 = vsel %vm977, %v2195, %v2179
      %v2202 = vsel %vm977, %v2197, %v2181
      %v2203 = vsel %vm977, %v2199, %v2183
      %v2212 = vsel %vm977, %v2177, %v2193
      %v2213 = vsel %vm977, %v2179, %v2195
      %v2214 = vsel %vm977, %v2181, %v2197
      %v2215 = vsel %vm977, %v2183, %v2199
      %v2216 = vsel %vm991, %v2212, 0.0
      %v2217 = vsel %vm992, %v2200, 0.0
      %v2218 = vsel %vm991, %v2213, 0.0
      %v2219 = vsel %vm992, %v2201, 0.0
      %v2220 = vsel %vm991, %v2214, 0.0
      %v2221 = vsel %vm992, %v2202, 0.0
      %v2222 = vsel %vm991, %v2215, 0.0
      %v2223 = vsel %vm992, %v2203, 0.0
      %2224 = vrot.lane.b32.xlu0 %v2120, 127
      %v2225 = vpop.permute.xlu0 %2224
      %2226 = vrot.lane.b32.xlu0 %v2121, 127
      %v2227 = vpop.permute.xlu0 %2226
      %2228 = vrot.lane.b32.xlu0 %v2122, 127
      %v2229 = vpop.permute.xlu0 %2228
      %2230 = vrot.lane.b32.xlu0 %v2123, 127
      %v2231 = vpop.permute.xlu0 %2230
      %2232 = vrot.lane.b32.xlu0 %v2124, 127
      %v2233 = vpop.permute.xlu0 %2232
      %2234 = vrot.lane.b32.xlu0 %v2125, 127
      %v2235 = vpop.permute.xlu0 %2234
      %2236 = vrot.lane.b32.xlu0 %v2126, 127
      %v2237 = vpop.permute.xlu0 %2236
      %2238 = vrot.lane.b32.xlu0 %v2127, 127
      %v2239 = vpop.permute.xlu0 %2238
      %v2240 = vsel %vm999, %v2225, %v2227
      %v2241 = vsel %vm999, %v2229, %v2231
      %v2242 = vsel %vm999, %v2233, %v2235
      %v2243 = vsel %vm999, %v2237, %v2239
      %v2256 = vsel %vm999, %v2227, %v2225
      %v2257 = vsel %vm999, %v2231, %v2229
      %v2258 = vsel %vm999, %v2235, %v2233
      %v2259 = vsel %vm999, %v2239, %v2237
      %v2260 = vsel %vm1014, %v2240, 0.0
      %v2261 = vsel %vm1015, %v2256, 0.0
      %v2262 = vsel %vm1014, %v2241, 0.0
      %v2263 = vsel %vm1015, %v2257, 0.0
      %v2264 = vsel %vm1014, %v2242, 0.0
      %v2265 = vsel %vm1015, %v2258, 0.0
      %v2266 = vsel %vm1014, %v2243, 0.0
      %v2267 = vsel %vm1015, %v2259, 0.0
      %vm2268 = vcmask 261120
      %v2270 = vsel %vm2268, %v2067, 0
      %2272 = vmatprep.subr.mxu0 %v2121
      %2273 = vmatpush1.msra.mxu0 %v2120
      %2274 = vmatprep.subr.mxu0 %v2123
      %2275 = vmatpush1.msra.mxu0 %v2122
      %2276 = vmatprep.subr.mxu0 %v2125
      %2277 = vmatpush1.msra.mxu0 %v2124
      %2278 = vmatprep.subr.mxu0 %v2127
      %2279 = vmatpush1.msra.mxu0 %v2126
      %2280 = vmatprep.subr.mxu0 0.0
      %2281 = vmatpush1.msra.mxu0 0.0
      %2282 = vmatprep.subr.mxu0 0.0
      %2283 = vmatpush1.msra.mxu0 0.0
      %2284 = vmatprep.subr.mxu0 0.0
      %2285 = vmatpush1.msra.mxu0 0.0
      %2286 = vmatprep.subr.mxu0 0.0
      %2287 = vmatpush1.msra.mxu0 0.0
      %2288 = vmatprep.subr.mxu0 0.0
      %2289 = vmatpush1.msra.mxu0 0.0
      %2290 = vmatprep.subr.mxu0 0.0
      %2291 = vmatpush1.msra.mxu0 0.0
      %2292 = vmatprep.subr.mxu0 0.0
      %2293 = vmatpush1.msra.mxu0 0.0
      %2294 = vmatprep.subr.mxu0 0.0
      %2295 = vmatpush1.msra.mxu0 0.0
      %2296 = vmatprep.subr.mxu0 0.0
      %2297 = vmatpush1.msra.mxu0 0.0
      %2298 = vmatprep.subr.mxu0 0.0
      %2299 = vmatpush1.msra.mxu0 0.0
      %2300 = vmatprep.subr.mxu0 0.0
      %2301 = vmatpush1.msra.mxu0 0.0
      %2302 = vmatprep.subr.mxu0 0.0
      %2303 = vmatpush1.msra.mxu0 0.0
      %2304 = vmatprep.subr.mxu0 0.0
      %2305 = vmatpush1.msra.mxu0 0.0
      %2306 = vmatprep.subr.mxu0 0.0
      %2307 = vmatpush1.msra.mxu0 0.0
      %2308 = vmatprep.subr.mxu0 0.0
      %2309 = vmatpush1.msra.mxu0 0.0
      %2310 = vmatprep.subr.mxu0 0.0
      %2311 = vmatpush1.msra.mxu0 0.0
      %2312 = vmatprep.subr.mxu0 0.0
      %2313 = vmatpush1.msra.mxu0 0.0
      %2314 = vmatprep.subr.mxu0 0.0
      %2315 = vmatpush1.msra.mxu0 0.0
      %2316 = vmatprep.subr.mxu0 0.0
      %2317 = vmatpush1.msra.mxu0 0.0
      %2318 = vmatprep.subr.mxu0 0.0
      %2319 = vmatpush1.msra.mxu0 0.0
      %2320 = vmatprep.subr.mxu0 0.0
      %2321 = vmatpush1.msra.mxu0 0.0
      %2322 = vmatprep.subr.mxu0 0.0
      %2323 = vmatpush1.msra.mxu0 0.0
      %2324 = vmatprep.subr.mxu0 0.0
      %2325 = vmatpush1.msra.mxu0 0.0
      %2326 = vmatprep.subr.mxu0 0.0
      %2327 = vmatpush1.msra.mxu0 0.0
      %2328 = vmatprep.subr.mxu0 0.0
      %2329 = vmatpush1.msra.mxu0 0.0
      %2330 = vmatprep.subr.mxu0 0.0
      %2331 = vmatpush1.msra.mxu0 0.0
      %2332 = vmatprep.subr.mxu0 0.0
      %2333 = vmatpush1.msra.mxu0 0.0
      %2334 = vmatprep.subr.mxu0 0.0
      %2335 = vmatpush1.msra.mxu0 0.0
      %2336 = vmatprep.mubr.f32.mxu0 0.0
      %2337 = vmatmul.mubr.f32.gmra.mrb[0].mxu0 %v2270
      %v2338 = vpop.f32.mrb[0].mxu0
      %v2339 = vadd.f32 0.0, %v2338
      %v2340 = vpop.f32.mrb[0].mxu0
      %v2341 = vadd.f32 0.0, %v2340
      %2342 = vdwg.mxu0
      %v2344 = vsel %vm2268, %v2066, 0
      %2346 = vmatprep.subr.mxu0 %v2217
      %2347 = vmatpush1.msra.mxu0 %v2216
      %2348 = vmatprep.subr.mxu0 %v2219
      %2349 = vmatpush1.msra.mxu0 %v2218
      %2350 = vmatprep.subr.mxu0 %v2221
      %2351 = vmatpush1.msra.mxu0 %v2220
      %2352 = vmatprep.subr.mxu0 %v2223
      %2353 = vmatpush1.msra.mxu0 %v2222
      %2354 = vmatprep.subr.mxu0 0.0
      %2355 = vmatpush1.msra.mxu0 0.0
      %2356 = vmatprep.subr.mxu0 0.0
      %2357 = vmatpush1.msra.mxu0 0.0
      %2358 = vmatprep.subr.mxu0 0.0
      %2359 = vmatpush1.msra.mxu0 0.0
      %2360 = vmatprep.subr.mxu0 0.0
      %2361 = vmatpush1.msra.mxu0 0.0
      %2362 = vmatprep.subr.mxu0 0.0
      %2363 = vmatpush1.msra.mxu0 0.0
      %2364 = vmatprep.subr.mxu0 0.0
      %2365 = vmatpush1.msra.mxu0 0.0
      %2366 = vmatprep.subr.mxu0 0.0
      %2367 = vmatpush1.msra.mxu0 0.0
      %2368 = vmatprep.subr.mxu0 0.0
      %2369 = vmatpush1.msra.mxu0 0.0
      %2370 = vmatprep.subr.mxu0 0.0
      %2371 = vmatpush1.msra.mxu0 0.0
      %2372 = vmatprep.subr.mxu0 0.0
      %2373 = vmatpush1.msra.mxu0 0.0
      %2374 = vmatprep.subr.mxu0 0.0
      %2375 = vmatpush1.msra.mxu0 0.0
      %2376 = vmatprep.subr.mxu0 0.0
      %2377 = vmatpush1.msra.mxu0 0.0
      %2378 = vmatprep.subr.mxu0 0.0
      %2379 = vmatpush1.msra.mxu0 0.0
      %2380 = vmatprep.subr.mxu0 0.0
      %2381 = vmatpush1.msra.mxu0 0.0
      %2382 = vmatprep.subr.mxu0 0.0
      %2383 = vmatpush1.msra.mxu0 0.0
      %2384 = vmatprep.subr.mxu0 0.0
      %2385 = vmatpush1.msra.mxu0 0.0
      %2386 = vmatprep.subr.mxu0 0.0
      %2387 = vmatpush1.msra.mxu0 0.0
      %2388 = vmatprep.subr.mxu0 0.0
      %2389 = vmatpush1.msra.mxu0 0.0
      %2390 = vmatprep.subr.mxu0 0.0
      %2391 = vmatpush1.msra.mxu0 0.0
      %2392 = vmatprep.subr.mxu0 0.0
      %2393 = vmatpush1.msra.mxu0 0.0
      %2394 = vmatprep.subr.mxu0 0.0
      %2395 = vmatpush1.msra.mxu0 0.0
      %2396 = vmatprep.subr.mxu0 0.0
      %2397 = vmatpush1.msra.mxu0 0.0
      %2398 = vmatprep.subr.mxu0 0.0
      %2399 = vmatpush1.msra.mxu0 0.0
      %2400 = vmatprep.subr.mxu0 0.0
      %2401 = vmatpush1.msra.mxu0 0.0
      %2402 = vmatprep.subr.mxu0 0.0
      %2403 = vmatpush1.msra.mxu0 0.0
      %2404 = vmatprep.subr.mxu0 0.0
      %2405 = vmatpush1.msra.mxu0 0.0
      %2406 = vmatprep.subr.mxu0 0.0
      %2407 = vmatpush1.msra.mxu0 0.0
      %2408 = vmatprep.subr.mxu0 0.0
      %2409 = vmatpush1.msra.mxu0 0.0
      %2410 = vmatprep.mubr.f32.mxu0 0.0
      %2411 = vmatmul.mubr.f32.gmra.mrb[0].mxu0 %v2344
      %v2412 = vpop.f32.mrb[0].mxu0
      %v2413 = vadd.f32 %v2339, %v2412
      %v2414 = vpop.f32.mrb[0].mxu0
      %v2415 = vadd.f32 %v2341, %v2414
      %2416 = vdwg.mxu0
      %v2418 = vsel %vm2268, %v2068, 0
      %2420 = vmatprep.subr.mxu0 %v2261
      %2421 = vmatpush1.msra.mxu0 %v2260
      %2422 = vmatprep.subr.mxu0 %v2263
      %2423 = vmatpush1.msra.mxu0 %v2262
      %2424 = vmatprep.subr.mxu0 %v2265
      %2425 = vmatpush1.msra.mxu0 %v2264
      %2426 = vmatprep.subr.mxu0 %v2267
      %2427 = vmatpush1.msra.mxu0 %v2266
      %2428 = vmatprep.subr.mxu0 0.0
      %2429 = vmatpush1.msra.mxu0 0.0
      %2430 = vmatprep.subr.mxu0 0.0
      %2431 = vmatpush1.msra.mxu0 0.0
      %2432 = vmatprep.subr.mxu0 0.0
      %2433 = vmatpush1.msra.mxu0 0.0
      %2434 = vmatprep.subr.mxu0 0.0
      %2435 = vmatpush1.msra.mxu0 0.0
      %2436 = vmatprep.subr.mxu0 0.0
      %2437 = vmatpush1.msra.mxu0 0.0
      %2438 = vmatprep.subr.mxu0 0.0
      %2439 = vmatpush1.msra.mxu0 0.0
      %2440 = vmatprep.subr.mxu0 0.0
      %2441 = vmatpush1.msra.mxu0 0.0
      %2442 = vmatprep.subr.mxu0 0.0
      %2443 = vmatpush1.msra.mxu0 0.0
      %2444 = vmatprep.subr.mxu0 0.0
      %2445 = vmatpush1.msra.mxu0 0.0
      %2446 = vmatprep.subr.mxu0 0.0
      %2447 = vmatpush1.msra.mxu0 0.0
      %2448 = vmatprep.subr.mxu0 0.0
      %2449 = vmatpush1.msra.mxu0 0.0
      %2450 = vmatprep.subr.mxu0 0.0
      %2451 = vmatpush1.msra.mxu0 0.0
      %2452 = vmatprep.subr.mxu0 0.0
      %2453 = vmatpush1.msra.mxu0 0.0
      %2454 = vmatprep.subr.mxu0 0.0
      %2455 = vmatpush1.msra.mxu0 0.0
      %2456 = vmatprep.subr.mxu0 0.0
      %2457 = vmatpush1.msra.mxu0 0.0
      %2458 = vmatprep.subr.mxu0 0.0
      %2459 = vmatpush1.msra.mxu0 0.0
      %2460 = vmatprep.subr.mxu0 0.0
      %2461 = vmatpush1.msra.mxu0 0.0
      %2462 = vmatprep.subr.mxu0 0.0
      %2463 = vmatpush1.msra.mxu0 0.0
      %2464 = vmatprep.subr.mxu0 0.0
      %2465 = vmatpush1.msra.mxu0 0.0
      %2466 = vmatprep.subr.mxu0 0.0
      %2467 = vmatpush1.msra.mxu0 0.0
      %2468 = vmatprep.subr.mxu0 0.0
      %2469 = vmatpush1.msra.mxu0 0.0
      %2470 = vmatprep.subr.mxu0 0.0
      %2471 = vmatpush1.msra.mxu0 0.0
      %2472 = vmatprep.subr.mxu0 0.0
      %2473 = vmatpush1.msra.mxu0 0.0
      %2474 = vmatprep.subr.mxu0 0.0
      %2475 = vmatpush1.msra.mxu0 0.0
      %2476 = vmatprep.subr.mxu0 0.0
      %2477 = vmatpush1.msra.mxu0 0.0
      %2478 = vmatprep.subr.mxu0 0.0
      %2479 = vmatpush1.msra.mxu0 0.0
      %2480 = vmatprep.subr.mxu0 0.0
      %2481 = vmatpush1.msra.mxu0 0.0
      %2482 = vmatprep.subr.mxu0 0.0
      %2483 = vmatpush1.msra.mxu0 0.0
      %2484 = vmatprep.mubr.f32.mxu0 0.0
      %2485 = vmatmul.mubr.f32.gmra.mrb[0].mxu0 %v2418
      %v2486 = vpop.f32.mrb[0].mxu0
      %v2487 = vadd.f32 0.0, %v2486
      %v2488 = vpop.f32.mrb[0].mxu0
      %v2489 = vadd.f32 0.0, %v2488
      %2490 = vdwg.mxu0
      %v2491 = vadd.f32 %v2413, %v2487
      %v2492 = vadd.f32 %v2415, %v2489
      %2493 = vrot.lane.b32.xlu0 %v2059, 1
      %v2494 = vpop.permute.xlu0 %2493
      %2495 = vrot.lane.b32.xlu0 %v2061, 1
      %v2496 = vpop.permute.xlu0 %2495
      %2497 = vrot.lane.b32.xlu0 %v2063, 1
      %v2498 = vpop.permute.xlu0 %2497
      %2499 = vrot.lane.b32.xlu0 %v2065, 1
      %v2500 = vpop.permute.xlu0 %2499
      %2505 = vrot.lane.b32.xlu0 %v2058, 1
      %v2506 = vpop.permute.xlu0 %2505
      %2507 = vrot.lane.b32.xlu0 %v2060, 1
      %v2508 = vpop.permute.xlu0 %2507
      %2509 = vrot.lane.b32.xlu0 %v2062, 1
      %v2510 = vpop.permute.xlu0 %2509
      %2511 = vrot.lane.b32.xlu0 %v2064, 1
      %v2512 = vpop.permute.xlu0 %2511
      %v2513 = vsel %vm977, %v2506, %v2494
      %v2514 = vsel %vm977, %v2508, %v2496
      %v2515 = vsel %vm977, %v2510, %v2498
      %v2516 = vsel %vm977, %v2512, %v2500
      %v2525 = vsel %vm977, %v2494, %v2506
      %v2526 = vsel %vm977, %v2496, %v2508
      %v2527 = vsel %vm977, %v2498, %v2510
      %v2528 = vsel %vm977, %v2500, %v2512
      %v2529 = vsel %vm991, %v2525, 0.0
      %v2530 = vsel %vm992, %v2513, 0.0
      %v2531 = vsel %vm991, %v2526, 0.0
      %v2532 = vsel %vm992, %v2514, 0.0
      %v2533 = vsel %vm991, %v2527, 0.0
      %v2534 = vsel %vm992, %v2515, 0.0
      %v2535 = vsel %vm991, %v2528, 0.0
      %v2536 = vsel %vm992, %v2516, 0.0
      %2537 = vrot.lane.b32.xlu0 %v2058, 127
      %v2538 = vpop.permute.xlu0 %2537
      %2539 = vrot.lane.b32.xlu0 %v2059, 127
      %v2540 = vpop.permute.xlu0 %2539
      %2541 = vrot.lane.b32.xlu0 %v2060, 127
      %v2542 = vpop.permute.xlu0 %2541
      %2543 = vrot.lane.b32.xlu0 %v2061, 127
      %v2544 = vpop.permute.xlu0 %2543
      %2545 = vrot.lane.b32.xlu0 %v2062, 127
      %v2546 = vpop.permute.xlu0 %2545
      %2547 = vrot.lane.b32.xlu0 %v2063, 127
      %v2548 = vpop.permute.xlu0 %2547
      %2549 = vrot.lane.b32.xlu0 %v2064, 127
      %v2550 = vpop.permute.xlu0 %2549
      %2551 = vrot.lane.b32.xlu0 %v2065, 127
      %v2552 = vpop.permute.xlu0 %2551
      %v2553 = vsel %vm999, %v2538, %v2540
      %v2554 = vsel %vm999, %v2542, %v2544
      %v2555 = vsel %vm999, %v2546, %v2548
      %v2556 = vsel %vm999, %v2550, %v2552
      %v2569 = vsel %vm999, %v2540, %v2538
      %v2570 = vsel %vm999, %v2544, %v2542
      %v2571 = vsel %vm999, %v2548, %v2546
      %v2572 = vsel %vm999, %v2552, %v2550
      %v2573 = vsel %vm1014, %v2553, 0.0
      %v2574 = vsel %vm1015, %v2569, 0.0
      %v2575 = vsel %vm1014, %v2554, 0.0
      %v2576 = vsel %vm1015, %v2570, 0.0
      %v2577 = vsel %vm1014, %v2555, 0.0
      %v2578 = vsel %vm1015, %v2571, 0.0
      %v2579 = vsel %vm1014, %v2556, 0.0
      %v2580 = vsel %vm1015, %v2572, 0.0
      %v2582 = vsel %vm2268, %v2069, 0
      %2584 = vmatprep.subr.mxu0 %v2530
      %2585 = vmatpush1.msra.mxu0 %v2529
      %2586 = vmatprep.subr.mxu0 %v2532
      %2587 = vmatpush1.msra.mxu0 %v2531
      %2588 = vmatprep.subr.mxu0 %v2534
      %2589 = vmatpush1.msra.mxu0 %v2533
      %2590 = vmatprep.subr.mxu0 %v2536
      %2591 = vmatpush1.msra.mxu0 %v2535
      %2592 = vmatprep.subr.mxu0 0.0
      %2593 = vmatpush1.msra.mxu0 0.0
      %2594 = vmatprep.subr.mxu0 0.0
      %2595 = vmatpush1.msra.mxu0 0.0
      %2596 = vmatprep.subr.mxu0 0.0
      %2597 = vmatpush1.msra.mxu0 0.0
      %2598 = vmatprep.subr.mxu0 0.0
      %2599 = vmatpush1.msra.mxu0 0.0
      %2600 = vmatprep.subr.mxu0 0.0
      %2601 = vmatpush1.msra.mxu0 0.0
      %2602 = vmatprep.subr.mxu0 0.0
      %2603 = vmatpush1.msra.mxu0 0.0
      %2604 = vmatprep.subr.mxu0 0.0
      %2605 = vmatpush1.msra.mxu0 0.0
      %2606 = vmatprep.subr.mxu0 0.0
      %2607 = vmatpush1.msra.mxu0 0.0
      %2608 = vmatprep.subr.mxu0 0.0
      %2609 = vmatpush1.msra.mxu0 0.0
      %2610 = vmatprep.subr.mxu0 0.0
      %2611 = vmatpush1.msra.mxu0 0.0
      %2612 = vmatprep.subr.mxu0 0.0
      %2613 = vmatpush1.msra.mxu0 0.0
      %2614 = vmatprep.subr.mxu0 0.0
      %2615 = vmatpush1.msra.mxu0 0.0
      %2616 = vmatprep.subr.mxu0 0.0
      %2617 = vmatpush1.msra.mxu0 0.0
      %2618 = vmatprep.subr.mxu0 0.0
      %2619 = vmatpush1.msra.mxu0 0.0
      %2620 = vmatprep.subr.mxu0 0.0
      %2621 = vmatpush1.msra.mxu0 0.0
      %2622 = vmatprep.subr.mxu0 0.0
      %2623 = vmatpush1.msra.mxu0 0.0
      %2624 = vmatprep.subr.mxu0 0.0
      %2625 = vmatpush1.msra.mxu0 0.0
      %2626 = vmatprep.subr.mxu0 0.0
      %2627 = vmatpush1.msra.mxu0 0.0
      %2628 = vmatprep.subr.mxu0 0.0
      %2629 = vmatpush1.msra.mxu0 0.0
      %2630 = vmatprep.subr.mxu0 0.0
      %2631 = vmatpush1.msra.mxu0 0.0
      %2632 = vmatprep.subr.mxu0 0.0
      %2633 = vmatpush1.msra.mxu0 0.0
      %2634 = vmatprep.subr.mxu0 0.0
      %2635 = vmatpush1.msra.mxu0 0.0
      %2636 = vmatprep.subr.mxu0 0.0
      %2637 = vmatpush1.msra.mxu0 0.0
      %2638 = vmatprep.subr.mxu0 0.0
      %2639 = vmatpush1.msra.mxu0 0.0
      %2640 = vmatprep.subr.mxu0 0.0
      %2641 = vmatpush1.msra.mxu0 0.0
      %2642 = vmatprep.subr.mxu0 0.0
      %2643 = vmatpush1.msra.mxu0 0.0
      %2644 = vmatprep.subr.mxu0 0.0
      %2645 = vmatpush1.msra.mxu0 0.0
      %2646 = vmatprep.subr.mxu0 0.0
      %2647 = vmatpush1.msra.mxu0 0.0
      %2648 = vmatprep.mubr.f32.mxu0 0.0
      %2649 = vmatmul.mubr.f32.gmra.mrb[0].mxu0 %v2582
      %v2650 = vpop.f32.mrb[0].mxu0
      %v2651 = vadd.f32 0.0, %v2650
      %v2652 = vpop.f32.mrb[0].mxu0
      %v2653 = vadd.f32 0.0, %v2652
      %2654 = vdwg.mxu0
      %v2655 = vadd.f32 %v2491, %v2651
      %v2656 = vadd.f32 %v2492, %v2653
      %v2658 = vsel %vm2268, %v2070, 0
      %2660 = vmatprep.subr.mxu0 %v2059
      %2661 = vmatpush1.msra.mxu0 %v2058
      %2662 = vmatprep.subr.mxu0 %v2061
      %2663 = vmatpush1.msra.mxu0 %v2060
      %2664 = vmatprep.subr.mxu0 %v2063
      %2665 = vmatpush1.msra.mxu0 %v2062
      %2666 = vmatprep.subr.mxu0 %v2065
      %2667 = vmatpush1.msra.mxu0 %v2064
      %2668 = vmatprep.subr.mxu0 0.0
      %2669 = vmatpush1.msra.mxu0 0.0
      %2670 = vmatprep.subr.mxu0 0.0
      %2671 = vmatpush1.msra.mxu0 0.0
      %2672 = vmatprep.subr.mxu0 0.0
      %2673 = vmatpush1.msra.mxu0 0.0
      %2674 = vmatprep.subr.mxu0 0.0
      %2675 = vmatpush1.msra.mxu0 0.0
      %2676 = vmatprep.subr.mxu0 0.0
      %2677 = vmatpush1.msra.mxu0 0.0
      %2678 = vmatprep.subr.mxu0 0.0
      %2679 = vmatpush1.msra.mxu0 0.0
      %2680 = vmatprep.subr.mxu0 0.0
      %2681 = vmatpush1.msra.mxu0 0.0
      %2682 = vmatprep.subr.mxu0 0.0
      %2683 = vmatpush1.msra.mxu0 0.0
      %2684 = vmatprep.subr.mxu0 0.0
      %2685 = vmatpush1.msra.mxu0 0.0
      %2686 = vmatprep.subr.mxu0 0.0
      %2687 = vmatpush1.msra.mxu0 0.0
      %2688 = vmatprep.subr.mxu0 0.0
      %2689 = vmatpush1.msra.mxu0 0.0
      %2690 = vmatprep.subr.mxu0 0.0
      %2691 = vmatpush1.msra.mxu0 0.0
      %2692 = vmatprep.subr.mxu0 0.0
      %2693 = vmatpush1.msra.mxu0 0.0
      %2694 = vmatprep.subr.mxu0 0.0
      %2695 = vmatpush1.msra.mxu0 0.0
      %2696 = vmatprep.subr.mxu0 0.0
      %2697 = vmatpush1.msra.mxu0 0.0
      %2698 = vmatprep.subr.mxu0 0.0
      %2699 = vmatpush1.msra.mxu0 0.0
      %2700 = vmatprep.subr.mxu0 0.0
      %2701 = vmatpush1.msra.mxu0 0.0
      %2702 = vmatprep.subr.mxu0 0.0
      %2703 = vmatpush1.msra.mxu0 0.0
      %2704 = vmatprep.subr.mxu0 0.0
      %2705 = vmatpush1.msra.mxu0 0.0
      %2706 = vmatprep.subr.mxu0 0.0
      %2707 = vmatpush1.msra.mxu0 0.0
      %2708 = vmatprep.subr.mxu0 0.0
      %2709 = vmatpush1.msra.mxu0 0.0
      %2710 = vmatprep.subr.mxu0 0.0
      %2711 = vmatpush1.msra.mxu0 0.0
      %2712 = vmatprep.subr.mxu0 0.0
      %2713 = vmatpush1.msra.mxu0 0.0
      %2714 = vmatprep.subr.mxu0 0.0
      %2715 = vmatpush1.msra.mxu0 0.0
      %2716 = vmatprep.subr.mxu0 0.0
      %2717 = vmatpush1.msra.mxu0 0.0
      %2718 = vmatprep.subr.mxu0 0.0
      %2719 = vmatpush1.msra.mxu0 0.0
      %2720 = vmatprep.subr.mxu0 0.0
      %2721 = vmatpush1.msra.mxu0 0.0
      %2722 = vmatprep.subr.mxu0 0.0
      %2723 = vmatpush1.msra.mxu0 0.0
      %2724 = vmatprep.mubr.f32.mxu0 0.0
      %2725 = vmatmul.mubr.f32.gmra.mrb[0].mxu0 %v2658
      %v2726 = vpop.f32.mrb[0].mxu0
      %v2727 = vadd.f32 0.0, %v2726
      %v2728 = vpop.f32.mrb[0].mxu0
      %v2729 = vadd.f32 0.0, %v2728
      %2730 = vdwg.mxu0
      %v2731 = vadd.f32 %v2655, %v2727
      %v2732 = vadd.f32 %v2656, %v2729
      %v2734 = vsel %vm2268, %v2071, 0
      %2736 = vmatprep.subr.mxu0 %v2574
      %2737 = vmatpush1.msra.mxu0 %v2573
      %2738 = vmatprep.subr.mxu0 %v2576
      %2739 = vmatpush1.msra.mxu0 %v2575
      %2740 = vmatprep.subr.mxu0 %v2578
      %2741 = vmatpush1.msra.mxu0 %v2577
      %2742 = vmatprep.subr.mxu0 %v2580
      %2743 = vmatpush1.msra.mxu0 %v2579
      %2744 = vmatprep.subr.mxu0 0.0
      %2745 = vmatpush1.msra.mxu0 0.0
      %2746 = vmatprep.subr.mxu0 0.0
      %2747 = vmatpush1.msra.mxu0 0.0
      %2748 = vmatprep.subr.mxu0 0.0
      %2749 = vmatpush1.msra.mxu0 0.0
      %2750 = vmatprep.subr.mxu0 0.0
      %2751 = vmatpush1.msra.mxu0 0.0
      %2752 = vmatprep.subr.mxu0 0.0
      %2753 = vmatpush1.msra.mxu0 0.0
      %2754 = vmatprep.subr.mxu0 0.0
      %2755 = vmatpush1.msra.mxu0 0.0
      %2756 = vmatprep.subr.mxu0 0.0
      %2757 = vmatpush1.msra.mxu0 0.0
      %2758 = vmatprep.subr.mxu0 0.0
      %2759 = vmatpush1.msra.mxu0 0.0
      %2760 = vmatprep.subr.mxu0 0.0
      %2761 = vmatpush1.msra.mxu0 0.0
      %2762 = vmatprep.subr.mxu0 0.0
      %2763 = vmatpush1.msra.mxu0 0.0
      %2764 = vmatprep.subr.mxu0 0.0
      %2765 = vmatpush1.msra.mxu0 0.0
      %2766 = vmatprep.subr.mxu0 0.0
      %2767 = vmatpush1.msra.mxu0 0.0
      %2768 = vmatprep.subr.mxu0 0.0
      %2769 = vmatpush1.msra.mxu0 0.0
      %2770 = vmatprep.subr.mxu0 0.0
      %2771 = vmatpush1.msra.mxu0 0.0
      %2772 = vmatprep.subr.mxu0 0.0
      %2773 = vmatpush1.msra.mxu0 0.0
      %2774 = vmatprep.subr.mxu0 0.0
      %2775 = vmatpush1.msra.mxu0 0.0
      %2776 = vmatprep.subr.mxu0 0.0
      %2777 = vmatpush1.msra.mxu0 0.0
      %2778 = vmatprep.subr.mxu0 0.0
      %2779 = vmatpush1.msra.mxu0 0.0
      %2780 = vmatprep.subr.mxu0 0.0
      %2781 = vmatpush1.msra.mxu0 0.0
      %2782 = vmatprep.subr.mxu0 0.0
      %2783 = vmatpush1.msra.mxu0 0.0
      %2784 = vmatprep.subr.mxu0 0.0
      %2785 = vmatpush1.msra.mxu0 0.0
      %2786 = vmatprep.subr.mxu0 0.0
      %2787 = vmatpush1.msra.mxu0 0.0
      %2788 = vmatprep.subr.mxu0 0.0
      %2789 = vmatpush1.msra.mxu0 0.0
      %2790 = vmatprep.subr.mxu0 0.0
      %2791 = vmatpush1.msra.mxu0 0.0
      %2792 = vmatprep.subr.mxu0 0.0
      %2793 = vmatpush1.msra.mxu0 0.0
      %2794 = vmatprep.subr.mxu0 0.0
      %2795 = vmatpush1.msra.mxu0 0.0
      %2796 = vmatprep.subr.mxu0 0.0
      %2797 = vmatpush1.msra.mxu0 0.0
      %2798 = vmatprep.subr.mxu0 0.0
      %2799 = vmatpush1.msra.mxu0 0.0
      %2800 = vmatprep.mubr.f32.mxu0 0.0
      %2801 = vmatmul.mubr.f32.gmra.mrb[0].mxu0 %v2734
      %v2802 = vpop.f32.mrb[0].mxu0
      %v2803 = vadd.f32 0.0, %v2802
      %v2804 = vpop.f32.mrb[0].mxu0
      %v2805 = vadd.f32 0.0, %v2804
      %2806 = vdwg.mxu0
      %v2807 = vadd.f32 %v2731, %v2803
      %v2808 = vadd.f32 %v2732, %v2805
      %2813 = vrot.lane.b32.xlu0 %v2165, 1
      %v2814 = vpop.permute.xlu0 %2813
      %2815 = vrot.lane.b32.xlu0 %v2167, 1
      %v2816 = vpop.permute.xlu0 %2815
      %2817 = vrot.lane.b32.xlu0 %v2169, 1
      %v2818 = vpop.permute.xlu0 %2817
      %2819 = vrot.lane.b32.xlu0 %v2171, 1
      %v2820 = vpop.permute.xlu0 %2819
      %2829 = vrot.lane.b32.xlu0 %v2164, 1
      %v2830 = vpop.permute.xlu0 %2829
      %2831 = vrot.lane.b32.xlu0 %v2166, 1
      %v2832 = vpop.permute.xlu0 %2831
      %2833 = vrot.lane.b32.xlu0 %v2168, 1
      %v2834 = vpop.permute.xlu0 %2833
      %2835 = vrot.lane.b32.xlu0 %v2170, 1
      %v2836 = vpop.permute.xlu0 %2835
      %v2837 = vsel %vm977, %v2830, %v2814
      %v2838 = vsel %vm977, %v2832, %v2816
      %v2839 = vsel %vm977, %v2834, %v2818
      %v2840 = vsel %vm977, %v2836, %v2820
      %v2849 = vsel %vm977, %v2814, %v2830
      %v2850 = vsel %vm977, %v2816, %v2832
      %v2851 = vsel %vm977, %v2818, %v2834
      %v2852 = vsel %vm977, %v2820, %v2836
      %v2853 = vsel %vm991, %v2849, 0.0
      %v2854 = vsel %vm992, %v2837, 0.0
      %v2855 = vsel %vm991, %v2850, 0.0
      %v2856 = vsel %vm992, %v2838, 0.0
      %v2857 = vsel %vm991, %v2851, 0.0
      %v2858 = vsel %vm992, %v2839, 0.0
      %v2859 = vsel %vm991, %v2852, 0.0
      %v2860 = vsel %vm992, %v2840, 0.0
      %2861 = vrot.lane.b32.xlu0 %v2164, 127
      %v2862 = vpop.permute.xlu0 %2861
      %2863 = vrot.lane.b32.xlu0 %v2165, 127
      %v2864 = vpop.permute.xlu0 %2863
      %2865 = vrot.lane.b32.xlu0 %v2166, 127
      %v2866 = vpop.permute.xlu0 %2865
      %2867 = vrot.lane.b32.xlu0 %v2167, 127
      %v2868 = vpop.permute.xlu0 %2867
      %2869 = vrot.lane.b32.xlu0 %v2168, 127
      %v2870 = vpop.permute.xlu0 %2869
      %2871 = vrot.lane.b32.xlu0 %v2169, 127
      %v2872 = vpop.permute.xlu0 %2871
      %2873 = vrot.lane.b32.xlu0 %v2170, 127
      %v2874 = vpop.permute.xlu0 %2873
      %2875 = vrot.lane.b32.xlu0 %v2171, 127
      %v2876 = vpop.permute.xlu0 %2875
      %v2877 = vsel %vm999, %v2862, %v2864
      %v2878 = vsel %vm999, %v2866, %v2868
      %v2879 = vsel %vm999, %v2870, %v2872
      %v2880 = vsel %vm999, %v2874, %v2876
      %v2893 = vsel %vm999, %v2864, %v2862
      %v2894 = vsel %vm999, %v2868, %v2866
      %v2895 = vsel %vm999, %v2872, %v2870
      %v2896 = vsel %vm999, %v2876, %v2874
      %v2897 = vsel %vm1014, %v2877, 0.0
      %v2898 = vsel %vm1015, %v2893, 0.0
      %v2899 = vsel %vm1014, %v2878, 0.0
      %v2900 = vsel %vm1015, %v2894, 0.0
      %v2901 = vsel %vm1014, %v2879, 0.0
      %v2902 = vsel %vm1015, %v2895, 0.0
      %v2903 = vsel %vm1014, %v2880, 0.0
      %v2904 = vsel %vm1015, %v2896, 0.0
      %v2906 = vsel %vm2268, %v2072, 0
      %2908 = vmatprep.subr.mxu0 %v2854
      %2909 = vmatpush1.msra.mxu0 %v2853
      %2910 = vmatprep.subr.mxu0 %v2856
      %2911 = vmatpush1.msra.mxu0 %v2855
      %2912 = vmatprep.subr.mxu0 %v2858
      %2913 = vmatpush1.msra.mxu0 %v2857
      %2914 = vmatprep.subr.mxu0 %v2860
      %2915 = vmatpush1.msra.mxu0 %v2859
      %2916 = vmatprep.subr.mxu0 0.0
      %2917 = vmatpush1.msra.mxu0 0.0
      %2918 = vmatprep.subr.mxu0 0.0
      %2919 = vmatpush1.msra.mxu0 0.0
      %2920 = vmatprep.subr.mxu0 0.0
      %2921 = vmatpush1.msra.mxu0 0.0
      %2922 = vmatprep.subr.mxu0 0.0
      %2923 = vmatpush1.msra.mxu0 0.0
      %2924 = vmatprep.subr.mxu0 0.0
      %2925 = vmatpush1.msra.mxu0 0.0
      %2926 = vmatprep.subr.mxu0 0.0
      %2927 = vmatpush1.msra.mxu0 0.0
      %2928 = vmatprep.subr.mxu0 0.0
      %2929 = vmatpush1.msra.mxu0 0.0
      %2930 = vmatprep.subr.mxu0 0.0
      %2931 = vmatpush1.msra.mxu0 0.0
      %2932 = vmatprep.subr.mxu0 0.0
      %2933 = vmatpush1.msra.mxu0 0.0
      %2934 = vmatprep.subr.mxu0 0.0
      %2935 = vmatpush1.msra.mxu0 0.0
      %2936 = vmatprep.subr.mxu0 0.0
      %2937 = vmatpush1.msra.mxu0 0.0
      %2938 = vmatprep.subr.mxu0 0.0
      %2939 = vmatpush1.msra.mxu0 0.0
      %2940 = vmatprep.subr.mxu0 0.0
      %2941 = vmatpush1.msra.mxu0 0.0
      %2942 = vmatprep.subr.mxu0 0.0
      %2943 = vmatpush1.msra.mxu0 0.0
      %2944 = vmatprep.subr.mxu0 0.0
      %2945 = vmatpush1.msra.mxu0 0.0
      %2946 = vmatprep.subr.mxu0 0.0
      %2947 = vmatpush1.msra.mxu0 0.0
      %2948 = vmatprep.subr.mxu0 0.0
      %2949 = vmatpush1.msra.mxu0 0.0
      %2950 = vmatprep.subr.mxu0 0.0
      %2951 = vmatpush1.msra.mxu0 0.0
      %2952 = vmatprep.subr.mxu0 0.0
      %2953 = vmatpush1.msra.mxu0 0.0
      %2954 = vmatprep.subr.mxu0 0.0
      %2955 = vmatpush1.msra.mxu0 0.0
      %2956 = vmatprep.subr.mxu0 0.0
      %2957 = vmatpush1.msra.mxu0 0.0
      %2958 = vmatprep.subr.mxu0 0.0
      %2959 = vmatpush1.msra.mxu0 0.0
      %2960 = vmatprep.subr.mxu0 0.0
      %2961 = vmatpush1.msra.mxu0 0.0
      %2962 = vmatprep.subr.mxu0 0.0
      %2963 = vmatpush1.msra.mxu0 0.0
      %2964 = vmatprep.subr.mxu0 0.0
      %2965 = vmatpush1.msra.mxu0 0.0
      %2966 = vmatprep.subr.mxu0 0.0
      %2967 = vmatpush1.msra.mxu0 0.0
      %2968 = vmatprep.subr.mxu0 0.0
      %2969 = vmatpush1.msra.mxu0 0.0
      %2970 = vmatprep.subr.mxu0 0.0
      %2971 = vmatpush1.msra.mxu0 0.0
      %2972 = vmatprep.mubr.f32.mxu0 0.0
      %2973 = vmatmul.mubr.f32.gmra.mrb[0].mxu0 %v2906
      %v2974 = vpop.f32.mrb[0].mxu0
      %v2975 = vadd.f32 0.0, %v2974
      %v2976 = vpop.f32.mrb[0].mxu0
      %v2977 = vadd.f32 0.0, %v2976
      %2978 = vdwg.mxu0
      %v2979 = vadd.f32 %v2807, %v2975
      %v2980 = vadd.f32 %v2808, %v2977
      %v2982 = vsel %vm2268, %v2073, 0
      %2984 = vmatprep.subr.mxu0 %v2165
      %2985 = vmatpush1.msra.mxu0 %v2164
      %2986 = vmatprep.subr.mxu0 %v2167
      %2987 = vmatpush1.msra.mxu0 %v2166
      %2988 = vmatprep.subr.mxu0 %v2169
      %2989 = vmatpush1.msra.mxu0 %v2168
      %2990 = vmatprep.subr.mxu0 %v2171
      %2991 = vmatpush1.msra.mxu0 %v2170
      %2992 = vmatprep.subr.mxu0 0.0
      %2993 = vmatpush1.msra.mxu0 0.0
      %2994 = vmatprep.subr.mxu0 0.0
      %2995 = vmatpush1.msra.mxu0 0.0
      %2996 = vmatprep.subr.mxu0 0.0
      %2997 = vmatpush1.msra.mxu0 0.0
      %2998 = vmatprep.subr.mxu0 0.0
      %2999 = vmatpush1.msra.mxu0 0.0
      %3000 = vmatprep.subr.mxu0 0.0
      %3001 = vmatpush1.msra.mxu0 0.0
      %3002 = vmatprep.subr.mxu0 0.0
      %3003 = vmatpush1.msra.mxu0 0.0
      %3004 = vmatprep.subr.mxu0 0.0
      %3005 = vmatpush1.msra.mxu0 0.0
      %3006 = vmatprep.subr.mxu0 0.0
      %3007 = vmatpush1.msra.mxu0 0.0
      %3008 = vmatprep.subr.mxu0 0.0
      %3009 = vmatpush1.msra.mxu0 0.0
      %3010 = vmatprep.subr.mxu0 0.0
      %3011 = vmatpush1.msra.mxu0 0.0
      %3012 = vmatprep.subr.mxu0 0.0
      %3013 = vmatpush1.msra.mxu0 0.0
      %3014 = vmatprep.subr.mxu0 0.0
      %3015 = vmatpush1.msra.mxu0 0.0
      %3016 = vmatprep.subr.mxu0 0.0
      %3017 = vmatpush1.msra.mxu0 0.0
      %3018 = vmatprep.subr.mxu0 0.0
      %3019 = vmatpush1.msra.mxu0 0.0
      %3020 = vmatprep.subr.mxu0 0.0
      %3021 = vmatpush1.msra.mxu0 0.0
      %3022 = vmatprep.subr.mxu0 0.0
      %3023 = vmatpush1.msra.mxu0 0.0
      %3024 = vmatprep.subr.mxu0 0.0
      %3025 = vmatpush1.msra.mxu0 0.0
      %3026 = vmatprep.subr.mxu0 0.0
      %3027 = vmatpush1.msra.mxu0 0.0
      %3028 = vmatprep.subr.mxu0 0.0
      %3029 = vmatpush1.msra.mxu0 0.0
      %3030 = vmatprep.subr.mxu0 0.0
      %3031 = vmatpush1.msra.mxu0 0.0
      %3032 = vmatprep.subr.mxu0 0.0
      %3033 = vmatpush1.msra.mxu0 0.0
      %3034 = vmatprep.subr.mxu0 0.0
      %3035 = vmatpush1.msra.mxu0 0.0
      %3036 = vmatprep.subr.mxu0 0.0
      %3037 = vmatpush1.msra.mxu0 0.0
      %3038 = vmatprep.subr.mxu0 0.0
      %3039 = vmatpush1.msra.mxu0 0.0
      %3040 = vmatprep.subr.mxu0 0.0
      %3041 = vmatpush1.msra.mxu0 0.0
      %3042 = vmatprep.subr.mxu0 0.0
      %3043 = vmatpush1.msra.mxu0 0.0
      %3044 = vmatprep.subr.mxu0 0.0
      %3045 = vmatpush1.msra.mxu0 0.0
      %3046 = vmatprep.subr.mxu0 0.0
      %3047 = vmatpush1.msra.mxu0 0.0
      %3048 = vmatprep.mubr.f32.mxu0 0.0
      %3049 = vmatmul.mubr.f32.gmra.mrb[0].mxu0 %v2982
      %v3050 = vpop.f32.mrb[0].mxu0
      %v3051 = vadd.f32 0.0, %v3050
      %v3052 = vpop.f32.mrb[0].mxu0
      %v3053 = vadd.f32 0.0, %v3052
      %3054 = vdwg.mxu0
      %v3055 = vadd.f32 %v2979, %v3051
      %v3056 = vadd.f32 %v2980, %v3053
      %v3058 = vsel %vm2268, %v2074, 0
      %3060 = vmatprep.subr.mxu0 %v2898
      %3061 = vmatpush1.msra.mxu0 %v2897
      %3062 = vmatprep.subr.mxu0 %v2900
      %3063 = vmatpush1.msra.mxu0 %v2899
      %3064 = vmatprep.subr.mxu0 %v2902
      %3065 = vmatpush1.msra.mxu0 %v2901
      %3066 = vmatprep.subr.mxu0 %v2904
      %3067 = vmatpush1.msra.mxu0 %v2903
      %3068 = vmatprep.subr.mxu0 0.0
      %3069 = vmatpush1.msra.mxu0 0.0
      %3070 = vmatprep.subr.mxu0 0.0
      %3071 = vmatpush1.msra.mxu0 0.0
      %3072 = vmatprep.subr.mxu0 0.0
      %3073 = vmatpush1.msra.mxu0 0.0
      %3074 = vmatprep.subr.mxu0 0.0
      %3075 = vmatpush1.msra.mxu0 0.0
      %3076 = vmatprep.subr.mxu0 0.0
      %3077 = vmatpush1.msra.mxu0 0.0
      %3078 = vmatprep.subr.mxu0 0.0
      %3079 = vmatpush1.msra.mxu0 0.0
      %3080 = vmatprep.subr.mxu0 0.0
      %3081 = vmatpush1.msra.mxu0 0.0
      %3082 = vmatprep.subr.mxu0 0.0
      %3083 = vmatpush1.msra.mxu0 0.0
      %3084 = vmatprep.subr.mxu0 0.0
      %3085 = vmatpush1.msra.mxu0 0.0
      %3086 = vmatprep.subr.mxu0 0.0
      %3087 = vmatpush1.msra.mxu0 0.0
      %3088 = vmatprep.subr.mxu0 0.0
      %3089 = vmatpush1.msra.mxu0 0.0
      %3090 = vmatprep.subr.mxu0 0.0
      %3091 = vmatpush1.msra.mxu0 0.0
      %3092 = vmatprep.subr.mxu0 0.0
      %3093 = vmatpush1.msra.mxu0 0.0
      %3094 = vmatprep.subr.mxu0 0.0
      %3095 = vmatpush1.msra.mxu0 0.0
      %3096 = vmatprep.subr.mxu0 0.0
      %3097 = vmatpush1.msra.mxu0 0.0
      %3098 = vmatprep.subr.mxu0 0.0
      %3099 = vmatpush1.msra.mxu0 0.0
      %3100 = vmatprep.subr.mxu0 0.0
      %3101 = vmatpush1.msra.mxu0 0.0
      %3102 = vmatprep.subr.mxu0 0.0
      %3103 = vmatpush1.msra.mxu0 0.0
      %3104 = vmatprep.subr.mxu0 0.0
      %3105 = vmatpush1.msra.mxu0 0.0
      %3106 = vmatprep.subr.mxu0 0.0
      %3107 = vmatpush1.msra.mxu0 0.0
      %3108 = vmatprep.subr.mxu0 0.0
      %3109 = vmatpush1.msra.mxu0 0.0
      %3110 = vmatprep.subr.mxu0 0.0
      %3111 = vmatpush1.msra.mxu0 0.0
      %3112 = vmatprep.subr.mxu0 0.0
      %3113 = vmatpush1.msra.mxu0 0.0
      %3114 = vmatprep.subr.mxu0 0.0
      %3115 = vmatpush1.msra.mxu0 0.0
      %3116 = vmatprep.subr.mxu0 0.0
      %3117 = vmatpush1.msra.mxu0 0.0
      %3118 = vmatprep.subr.mxu0 0.0
      %3119 = vmatpush1.msra.mxu0 0.0
      %3120 = vmatprep.subr.mxu0 0.0
      %3121 = vmatpush1.msra.mxu0 0.0
      %3122 = vmatprep.subr.mxu0 0.0
      %3123 = vmatpush1.msra.mxu0 0.0
      %3124 = vmatprep.mubr.f32.mxu0 0.0
      %3125 = vmatmul.mubr.f32.gmra.mrb[0].mxu0 %v3058
      %v3126 = vpop.f32.mrb[0].mxu0
      %v3127 = vadd.f32 0.0, %v3126
      %v3128 = vpop.f32.mrb[0].mxu0
      %v3129 = vadd.f32 0.0, %v3128
      %3130 = vdwg.mxu0
      %v3131 = vadd.f32 %v3055, %v3127
      %v3132 = vadd.f32 %v3056, %v3129
      %3134 = vset.pattern.permute.xlu0 0
      %3135 = vperm.xlu0 %3134, %v2075
      %v3136 = vpop.permute.xlu0 %3135
      %v3138 = vadd.f32 %v3131, %v3136
      %v3139 = vadd.f32 %v3132, %v3136
      %v3140 = vadd.f32 %v3138, %v894
      %v3141 = vadd.f32 %v3139, %v895
      %3142 = vst [vmem:[#allocation2] sm:$0xff] %v3140
      %3143 = vst [vmem:[#allocation2 + $0x8] sm:$0xff] %v3141
      %p3144 = scmp.eq.s32.totalorder %s28, 1
      // Predicated region
      $region73: #{wdsr_forward.1} parent=67 // pred_check
        %p3145 = pneg %p3144
      $region74: #{wdsr_forward.1} parent=67 // pred_check_branch
        %3147 = sbr.rel (%p3145) target = $region76
      $region75: #{wdsr_forward.1} parent=67 // pred_region
        %v3148 = vld [vmem:[#allocation3] sm:$0xff]
        %v3149 = vld [vmem:[#allocation3 + $0x8] sm:$0xff]
        %v3150 = vadd.f32 %v3140, %v3148
        %v3151 = vadd.f32 %v3141, %v3149
        %v3152 = vld [vmem:[%s8] sm:$0xff]
        %v3153 = vld [vmem:[%s8 + $0x8] sm:$0xff]
        %v3154 = vld [vmem:[%s8 + $0x10] sm:$0xff]
        %v3155 = vld [vmem:[%s8 + $0x18] sm:$0xff]
        %v3156 = vld [vmem:[%s8 + $0x20] sm:$0xff]
        %v3157 = vld [vmem:[%s8 + $0x28] sm:$0xff]
        %v3158 = vld [vmem:[%s8 + $0x30] sm:$0xff]
        %v3159 = vld [vmem:[%s8 + $0x38] sm:$0xff]
        %v3160 = vld [vmem:[%s8 + $0x40] sm:$0xff]
        %v3161 = vld [vmem:[%s8 + $0x48] sm:$0xff]
        %v3162 = vld [vmem:[%s8 + $0x50] sm:$0xff]
        %v3163 = vld [vmem:[%s8 + $0x58] sm:$0xff]
        %v3164 = vld [vmem:[%s8 + $0x60] sm:$0xff]
        %v3165 = vld [vmem:[%s8 + $0x68] sm:$0xff]
        %v3166 = vld [vmem:[%s8 + $0x70] sm:$0xff]
        %v3167 = vld [vmem:[%s8 + $0x78] sm:$0xff]
        %v3168 = vld [vmem:[%s8 + $0x80] sm:$0xff]
        %v3169 = vld [vmem:[%s8 + $0x88] sm:$0xff]
        %v3170 = vld [vmem:[%s8 + $0x90] sm:$0xff]
        %v3171 = vld [vmem:[%s8 + $0x98] sm:$0xff]
        %v3172 = vld [vmem:[%s8 + $0xa0] sm:$0xff]
        %v3173 = vld [vmem:[%s8 + $0xa8] sm:$0xff]
        %v3174 = vld [vmem:[%s8 + $0xb0] sm:$0xff]
        %v3175 = vld [vmem:[%s8 + $0xb8] sm:$0xff]
        %v3176 = vld [vmem:[%s8 + $0xc0] sm:$0xff]
        %v3177 = vld [vmem:[%s8 + $0xc8] sm:$0xff]
        %v3178 = vld [vmem:[%s8 + $0xd0] sm:$0xff]
        %v3179 = vld [vmem:[%s8 + $0xd8] sm:$0xff]
        %v3180 = vld [vmem:[%s8 + $0xe0] sm:$0xff]
        %v3181 = vld [vmem:[%s8 + $0xe8] sm:$0xff]
        %v3182 = vld [vmem:[%s8 + $0xf0] sm:$0xff]
        %v3183 = vld [vmem:[%s8 + $0xf8] sm:$0xff]
        %v3184 = vld [vmem:[%s8 + $0x100] sm:$0xff]
        %v3185 = vld [vmem:[%s8 + $0x108] sm:$0xff]
        %v3186 = vld [vmem:[%s8 + $0x110] sm:$0xff]
        %v3187 = vld [vmem:[%s8 + $0x118] sm:$0xff]
        %v3188 = vld [vmem:[%s9] sm:$0xff]
        %v3189 = vld [vmem:[%s9 + $0x8] sm:$0xff]
        %v3190 = vld [vmem:[%s9 + $0x10] sm:$0xff]
        %v3191 = vld [vmem:[%s9 + $0x18] sm:$0xff]
        %3193 = vrot.lane.b32.xlu0 %v3151, 16
        %v3194 = vpop.permute.xlu0 %3193
        %3197 = vrot.lane.b32.xlu0 %v3150, 16
        %v3198 = vpop.permute.xlu0 %3197
        %v3199 = vsel %vm943, %v3198, %v3194
        %v3202 = vsel %vm943, %v3194, %v3198
        %v3203 = vsel %vm950, %v3202, 0.0
        %v3204 = vsel %vm951, %v3199, 0.0
        %3205 = vrot.lane.b32.xlu0 %v3150, 112
        %v3206 = vpop.permute.xlu0 %3205
        %3207 = vrot.lane.b32.xlu0 %v3151, 112
        %v3208 = vpop.permute.xlu0 %3207
        %v3209 = vsel %vm958, %v3206, %v3208
        %v3213 = vsel %vm958, %v3208, %v3206
        %v3214 = vsel %vm966, %v3209, 0.0
        %v3215 = vsel %vm967, %v3213, 0.0
        %3217 = vrot.lane.b32.xlu0 %v3204, 1
        %v3218 = vpop.permute.xlu0 %3217
        %3221 = vrot.lane.b32.xlu0 %v3203, 1
        %v3222 = vpop.permute.xlu0 %3221
        %v3223 = vsel %vm977, %v3222, %v3218
        %v3226 = vsel %vm977, %v3218, %v3222
        %v3227 = vsel %vm991, %v3226, 0.0
        %v3228 = vsel %vm992, %v3223, 0.0
        %3229 = vrot.lane.b32.xlu0 %v3203, 127
        %v3230 = vpop.permute.xlu0 %3229
        %3231 = vrot.lane.b32.xlu0 %v3204, 127
        %v3232 = vpop.permute.xlu0 %3231
        %v3233 = vsel %vm999, %v3230, %v3232
        %v3237 = vsel %vm999, %v3232, %v3230
        %v3238 = vsel %vm1014, %v3233, 0.0
        %v3239 = vsel %vm1015, %v3237, 0.0
        %v3241 = vsel %vm1018, %v3156, 0
        %v3244 = vsel %vm1018, %v3157, 0
        %v3247 = vsel %vm1018, %v3158, 0
        %v3250 = vsel %vm1018, %v3159, 0
        %3252 = vmatprep.subr.mxu0 %v3204
        %3253 = vmatpush1.msra.mxu0 %v3203
        %3254 = vmatprep.subr.mxu0 0.0
        %3255 = vmatpush1.msra.mxu0 0.0
        %3256 = vmatprep.subr.mxu0 0.0
        %3257 = vmatpush1.msra.mxu0 0.0
        %3258 = vmatprep.subr.mxu0 0.0
        %3259 = vmatpush1.msra.mxu0 0.0
        %3260 = vmatprep.subr.mxu0 0.0
        %3261 = vmatpush1.msra.mxu0 0.0
        %3262 = vmatprep.subr.mxu0 0.0
        %3263 = vmatpush1.msra.mxu0 0.0
        %3264 = vmatprep.subr.mxu0 0.0
        %3265 = vmatpush1.msra.mxu0 0.0
        %3266 = vmatprep.subr.mxu0 0.0
        %3267 = vmatpush1.msra.mxu0 0.0
        %3268 = vmatprep.subr.mxu0 0.0
        %3269 = vmatpush1.msra.mxu0 0.0
        %3270 = vmatprep.subr.mxu0 0.0
        %3271 = vmatpush1.msra.mxu0 0.0
        %3272 = vmatprep.subr.mxu0 0.0
        %3273 = vmatpush1.msra.mxu0 0.0
        %3274 = vmatprep.subr.mxu0 0.0
        %3275 = vmatpush1.msra.mxu0 0.0
        %3276 = vmatprep.subr.mxu0 0.0
        %3277 = vmatpush1.msra.mxu0 0.0
        %3278 = vmatprep.subr.mxu0 0.0
        %3279 = vmatpush1.msra.mxu0 0.0
        %3280 = vmatprep.subr.mxu0 0.0
        %3281 = vmatpush1.msra.mxu0 0.0
        %3282 = vmatprep.subr.mxu0 0.0
        %3283 = vmatpush1.msra.mxu0 0.0
        %3284 = vmatprep.subr.mxu0 0.0
        %3285 = vmatpush1.msra.mxu0 0.0
        %3286 = vmatprep.subr.mxu0 0.0
        %3287 = vmatpush1.msra.mxu0 0.0
        %3288 = vmatprep.subr.mxu0 0.0
        %3289 = vmatpush1.msra.mxu0 0.0
        %3290 = vmatprep.subr.mxu0 0.0
        %3291 = vmatpush1.msra.mxu0 0.0
        %3292 = vmatprep.subr.mxu0 0.0
        %3293 = vmatpush1.msra.mxu0 0.0
        %3294 = vmatprep.subr.mxu0 0.0
        %3295 = vmatpush1.msra.mxu0 0.0
        %3296 = vmatprep.subr.mxu0 0.0
        %3297 = vmatpush1.msra.mxu0 0.0
        %3298 = vmatprep.subr.mxu0 0.0
        %3299 = vmatpush1.msra.mxu0 0.0
        %3300 = vmatprep.subr.mxu0 0.0
        %3301 = vmatpush1.msra.mxu0 0.0
        %3302 = vmatprep.subr.mxu0 0.0
        %3303 = vmatpush1.msra.mxu0 0.0
        %3304 = vmatprep.subr.mxu0 0.0
        %3305 = vmatpush1.msra.mxu0 0.0
        %3306 = vmatprep.subr.mxu0 0.0
        %3307 = vmatpush1.msra.mxu0 0.0
        %3308 = vmatprep.subr.mxu0 0.0
        %3309 = vmatpush1.msra.mxu0 0.0
        %3310 = vmatprep.subr.mxu0 0.0
        %3311 = vmatpush1.msra.mxu0 0.0
        %3312 = vmatprep.subr.mxu0 0.0
        %3313 = vmatpush1.msra.mxu0 0.0
        %3314 = vmatprep.subr.mxu0 0.0
        %3315 = vmatpush1.msra.mxu0 0.0
        %3316 = vmatprep.mubr.f32.mxu0 0.0
        %3317 = vmatmul.mubr.f32.gmra.mrb[0].mxu0 %v3241
        %v3318 = vpop.f32.mrb[0].mxu0
        %v3319 = vadd.f32 0.0, %v3318
        %v3320 = vpop.f32.mrb[0].mxu0
        %v3321 = vadd.f32 0.0, %v3320
        %3322 = vmatprep.mubr.f32.mxu0 0.0
        %3323 = vmatmul.mubr.f32.gmra.mrb[0].mxu0 %v3244
        %v3324 = vpop.f32.mrb[0].mxu0
        %v3325 = vadd.f32 0.0, %v3324
        %v3326 = vpop.f32.mrb[0].mxu0
        %v3327 = vadd.f32 0.0, %v3326
        %3328 = vmatprep.mubr.f32.mxu0 0.0
        %3329 = vmatmul.mubr.f32.gmra.mrb[0].mxu0 %v3247
        %v3330 = vpop.f32.mrb[0].mxu0
        %v3331 = vadd.f32 0.0, %v3330
        %v3332 = vpop.f32.mrb[0].mxu0
        %v3333 = vadd.f32 0.0, %v3332
        %3334 = vmatprep.mubr.f32.mxu0 0.0
        %3335 = vmatmul.mubr.f32.gmra.mrb[0].mxu0 %v3250
        %v3336 = vpop.f32.mrb[0].mxu0
        %v3337 = vadd.f32 0.0, %v3336
        %v3338 = vpop.f32.mrb[0].mxu0
        %v3339 = vadd.f32 0.0, %v3338
        %3340 = vdwg.mxu0
        %v3342 = vsel %vm1018, %v3152, 0
        %v3345 = vsel %vm1018, %v3153, 0
        %v3348 = vsel %vm1018, %v3154, 0
        %v3351 = vsel %vm1018, %v3155, 0
        %3353 = vmatprep.subr.mxu0 %v3228
        %3354 = vmatpush1.msra.mxu0 %v3227
        %3355 = vmatprep.subr.mxu0 0.0
        %3356 = vmatpush1.msra.mxu0 0.0
        %3357 = vmatprep.subr.mxu0 0.0
        %3358 = vmatpush1.msra.mxu0 0.0
        %3359 = vmatprep.subr.mxu0 0.0
        %3360 = vmatpush1.msra.mxu0 0.0
        %3361 = vmatprep.subr.mxu0 0.0
        %3362 = vmatpush1.msra.mxu0 0.0
        %3363 = vmatprep.subr.mxu0 0.0
        %3364 = vmatpush1.msra.mxu0 0.0
        %3365 = vmatprep.subr.mxu0 0.0
        %3366 = vmatpush1.msra.mxu0 0.0
        %3367 = vmatprep.subr.mxu0 0.0
        %3368 = vmatpush1.msra.mxu0 0.0
        %3369 = vmatprep.subr.mxu0 0.0
        %3370 = vmatpush1.msra.mxu0 0.0
        %3371 = vmatprep.subr.mxu0 0.0
        %3372 = vmatpush1.msra.mxu0 0.0
        %3373 = vmatprep.subr.mxu0 0.0
        %3374 = vmatpush1.msra.mxu0 0.0
        %3375 = vmatprep.subr.mxu0 0.0
        %3376 = vmatpush1.msra.mxu0 0.0
        %3377 = vmatprep.subr.mxu0 0.0
        %3378 = vmatpush1.msra.mxu0 0.0
        %3379 = vmatprep.subr.mxu0 0.0
        %3380 = vmatpush1.msra.mxu0 0.0
        %3381 = vmatprep.subr.mxu0 0.0
        %3382 = vmatpush1.msra.mxu0 0.0
        %3383 = vmatprep.subr.mxu0 0.0
        %3384 = vmatpush1.msra.mxu0 0.0
        %3385 = vmatprep.subr.mxu0 0.0
        %3386 = vmatpush1.msra.mxu0 0.0
        %3387 = vmatprep.subr.mxu0 0.0
        %3388 = vmatpush1.msra.mxu0 0.0
        %3389 = vmatprep.subr.mxu0 0.0
        %3390 = vmatpush1.msra.mxu0 0.0
        %3391 = vmatprep.subr.mxu0 0.0
        %3392 = vmatpush1.msra.mxu0 0.0
        %3393 = vmatprep.subr.mxu0 0.0
        %3394 = vmatpush1.msra.mxu0 0.0
        %3395 = vmatprep.subr.mxu0 0.0
        %3396 = vmatpush1.msra.mxu0 0.0
        %3397 = vmatprep.subr.mxu0 0.0
        %3398 = vmatpush1.msra.mxu0 0.0
        %3399 = vmatprep.subr.mxu0 0.0
        %3400 = vmatpush1.msra.mxu0 0.0
        %3401 = vmatprep.subr.mxu0 0.0
        %3402 = vmatpush1.msra.mxu0 0.0
        %3403 = vmatprep.subr.mxu0 0.0
        %3404 = vmatpush1.msra.mxu0 0.0
        %3405 = vmatprep.subr.mxu0 0.0
        %3406 = vmatpush1.msra.mxu0 0.0
        %3407 = vmatprep.subr.mxu0 0.0
        %3408 = vmatpush1.msra.mxu0 0.0
        %3409 = vmatprep.subr.mxu0 0.0
        %3410 = vmatpush1.msra.mxu0 0.0
        %3411 = vmatprep.subr.mxu0 0.0
        %3412 = vmatpush1.msra.mxu0 0.0
        %3413 = vmatprep.subr.mxu0 0.0
        %3414 = vmatpush1.msra.mxu0 0.0
        %3415 = vmatprep.subr.mxu0 0.0
        %3416 = vmatpush1.msra.mxu0 0.0
        %3417 = vmatprep.mubr.f32.mxu0 0.0
        %3418 = vmatmul.mubr.f32.gmra.mrb[0].mxu0 %v3342
        %v3419 = vpop.f32.mrb[0].mxu0
        %v3420 = vadd.f32 %v3319, %v3419
        %v3421 = vpop.f32.mrb[0].mxu0
        %v3422 = vadd.f32 %v3321, %v3421
        %3423 = vmatprep.mubr.f32.mxu0 0.0
        %3424 = vmatmul.mubr.f32.gmra.mrb[0].mxu0 %v3345
        %v3425 = vpop.f32.mrb[0].mxu0
        %v3426 = vadd.f32 %v3325, %v3425
        %v3427 = vpop.f32.mrb[0].mxu0
        %v3428 = vadd.f32 %v3327, %v3427
        %3429 = vmatprep.mubr.f32.mxu0 0.0
        %3430 = vmatmul.mubr.f32.gmra.mrb[0].mxu0 %v3348
        %v3431 = vpop.f32.mrb[0].mxu0
        %v3432 = vadd.f32 %v3331, %v3431
        %v3433 = vpop.f32.mrb[0].mxu0
        %v3434 = vadd.f32 %v3333, %v3433
        %3435 = vmatprep.mubr.f32.mxu0 0.0
        %3436 = vmatmul.mubr.f32.gmra.mrb[0].mxu0 %v3351
        %v3437 = vpop.f32.mrb[0].mxu0
        %v3438 = vadd.f32 %v3337, %v3437
        %v3439 = vpop.f32.mrb[0].mxu0
        %v3440 = vadd.f32 %v3339, %v3439
        %3441 = vdwg.mxu0
        %v3443 = vsel %vm1018, %v3160, 0
        %v3446 = vsel %vm1018, %v3161, 0
        %v3449 = vsel %vm1018, %v3162, 0
        %v3452 = vsel %vm1018, %v3163, 0
        %3454 = vmatprep.subr.mxu0 %v3239
        %3455 = vmatpush1.msra.mxu0 %v3238
        %3456 = vmatprep.subr.mxu0 0.0
        %3457 = vmatpush1.msra.mxu0 0.0
        %3458 = vmatprep.subr.mxu0 0.0
        %3459 = vmatpush1.msra.mxu0 0.0
        %3460 = vmatprep.subr.mxu0 0.0
        %3461 = vmatpush1.msra.mxu0 0.0
        %3462 = vmatprep.subr.mxu0 0.0
        %3463 = vmatpush1.msra.mxu0 0.0
        %3464 = vmatprep.subr.mxu0 0.0
        %3465 = vmatpush1.msra.mxu0 0.0
        %3466 = vmatprep.subr.mxu0 0.0
        %3467 = vmatpush1.msra.mxu0 0.0
        %3468 = vmatprep.subr.mxu0 0.0
        %3469 = vmatpush1.msra.mxu0 0.0
        %3470 = vmatprep.subr.mxu0 0.0
        %3471 = vmatpush1.msra.mxu0 0.0
        %3472 = vmatprep.subr.mxu0 0.0
        %3473 = vmatpush1.msra.mxu0 0.0
        %3474 = vmatprep.subr.mxu0 0.0
        %3475 = vmatpush1.msra.mxu0 0.0
        %3476 = vmatprep.subr.mxu0 0.0
        %3477 = vmatpush1.msra.mxu0 0.0
        %3478 = vmatprep.subr.mxu0 0.0
        %3479 = vmatpush1.msra.mxu0 0.0
        %3480 = vmatprep.subr.mxu0 0.0
        %3481 = vmatpush1.msra.mxu0 0.0
        %3482 = vmatprep.subr.mxu0 0.0
        %3483 = vmatpush1.msra.mxu0 0.0
        %3484 = vmatprep.subr.mxu0 0.0
        %3485 = vmatpush1.msra.mxu0 0.0
        %3486 = vmatprep.subr.mxu0 0.0
        %3487 = vmatpush1.msra.mxu0 0.0
        %3488 = vmatprep.subr.mxu0 0.0
        %3489 = vmatpush1.msra.mxu0 0.0
        %3490 = vmatprep.subr.mxu0 0.0
        %3491 = vmatpush1.msra.mxu0 0.0
        %3492 = vmatprep.subr.mxu0 0.0
        %3493 = vmatpush1.msra.mxu0 0.0
        %3494 = vmatprep.subr.mxu0 0.0
        %3495 = vmatpush1.msra.mxu0 0.0
        %3496 = vmatprep.subr.mxu0 0.0
        %3497 = vmatpush1.msra.mxu0 0.0
        %3498 = vmatprep.subr.mxu0 0.0
        %3499 = vmatpush1.msra.mxu0 0.0
        %3500 = vmatprep.subr.mxu0 0.0
        %3501 = vmatpush1.msra.mxu0 0.0
        %3502 = vmatprep.subr.mxu0 0.0
        %3503 = vmatpush1.msra.mxu0 0.0
        %3504 = vmatprep.subr.mxu0 0.0
        %3505 = vmatpush1.msra.mxu0 0.0
        %3506 = vmatprep.subr.mxu0 0.0
        %3507 = vmatpush1.msra.mxu0 0.0
        %3508 = vmatprep.subr.mxu0 0.0
        %3509 = vmatpush1.msra.mxu0 0.0
        %3510 = vmatprep.subr.mxu0 0.0
        %3511 = vmatpush1.msra.mxu0 0.0
        %3512 = vmatprep.subr.mxu0 0.0
        %3513 = vmatpush1.msra.mxu0 0.0
        %3514 = vmatprep.subr.mxu0 0.0
        %3515 = vmatpush1.msra.mxu0 0.0
        %3516 = vmatprep.subr.mxu0 0.0
        %3517 = vmatpush1.msra.mxu0 0.0
        %3518 = vmatprep.mubr.f32.mxu0 0.0
        %3519 = vmatmul.mubr.f32.gmra.mrb[0].mxu0 %v3443
        %v3520 = vpop.f32.mrb[0].mxu0
        %v3521 = vadd.f32 0.0, %v3520
        %v3522 = vpop.f32.mrb[0].mxu0
        %v3523 = vadd.f32 0.0, %v3522
        %3524 = vmatprep.mubr.f32.mxu0 0.0
        %3525 = vmatmul.mubr.f32.gmra.mrb[0].mxu0 %v3446
        %v3526 = vpop.f32.mrb[0].mxu0
        %v3527 = vadd.f32 0.0, %v3526
        %v3528 = vpop.f32.mrb[0].mxu0
        %v3529 = vadd.f32 0.0, %v3528
        %3530 = vmatprep.mubr.f32.mxu0 0.0
        %3531 = vmatmul.mubr.f32.gmra.mrb[0].mxu0 %v3449
        %v3532 = vpop.f32.mrb[0].mxu0
        %v3533 = vadd.f32 0.0, %v3532
        %v3534 = vpop.f32.mrb[0].mxu0
        %v3535 = vadd.f32 0.0, %v3534
        %3536 = vmatprep.mubr.f32.mxu0 0.0
        %3537 = vmatmul.mubr.f32.gmra.mrb[0].mxu0 %v3452
        %v3538 = vpop.f32.mrb[0].mxu0
        %v3539 = vadd.f32 0.0, %v3538
        %v3540 = vpop.f32.mrb[0].mxu0
        %v3541 = vadd.f32 0.0, %v3540
        %3542 = vdwg.mxu0
        %v3543 = vadd.f32 %v3420, %v3521
        %v3544 = vadd.f32 %v3422, %v3523
        %v3545 = vadd.f32 %v3426, %v3527
        %v3546 = vadd.f32 %v3428, %v3529
        %v3547 = vadd.f32 %v3432, %v3533
        %v3548 = vadd.f32 %v3434, %v3535
        %v3549 = vadd.f32 %v3438, %v3539
        %v3550 = vadd.f32 %v3440, %v3541
        %3551 = vrot.lane.b32.xlu0 %v3151, 1
        %v3552 = vpop.permute.xlu0 %3551
        %3554 = vrot.lane.b32.xlu0 %v3150, 1
        %v3555 = vpop.permute.xlu0 %3554
        %v3556 = vsel %vm977, %v3555, %v3552
        %v3559 = vsel %vm977, %v3552, %v3555
        %v3560 = vsel %vm991, %v3559, 0.0
        %v3561 = vsel %vm992, %v3556, 0.0
        %3562 = vrot.lane.b32.xlu0 %v3150, 127
        %v3563 = vpop.permute.xlu0 %3562
        %3564 = vrot.lane.b32.xlu0 %v3151, 127
        %v3565 = vpop.permute.xlu0 %3564
        %v3566 = vsel %vm999, %v3563, %v3565
        %v3570 = vsel %vm999, %v3565, %v3563
        %v3571 = vsel %vm1014, %v3566, 0.0
        %v3572 = vsel %vm1015, %v3570, 0.0
        %v3574 = vsel %vm1018, %v3164, 0
        %v3577 = vsel %vm1018, %v3165, 0
        %v3580 = vsel %vm1018, %v3166, 0
        %v3583 = vsel %vm1018, %v3167, 0
        %3585 = vmatprep.subr.mxu0 %v3561
        %3586 = vmatpush1.msra.mxu0 %v3560
        %3587 = vmatprep.subr.mxu0 0.0
        %3588 = vmatpush1.msra.mxu0 0.0
        %3589 = vmatprep.subr.mxu0 0.0
        %3590 = vmatpush1.msra.mxu0 0.0
        %3591 = vmatprep.subr.mxu0 0.0
        %3592 = vmatpush1.msra.mxu0 0.0
        %3593 = vmatprep.subr.mxu0 0.0
        %3594 = vmatpush1.msra.mxu0 0.0
        %3595 = vmatprep.subr.mxu0 0.0
        %3596 = vmatpush1.msra.mxu0 0.0
        %3597 = vmatprep.subr.mxu0 0.0
        %3598 = vmatpush1.msra.mxu0 0.0
        %3599 = vmatprep.subr.mxu0 0.0
        %3600 = vmatpush1.msra.mxu0 0.0
        %3601 = vmatprep.subr.mxu0 0.0
        %3602 = vmatpush1.msra.mxu0 0.0
        %3603 = vmatprep.subr.mxu0 0.0
        %3604 = vmatpush1.msra.mxu0 0.0
        %3605 = vmatprep.subr.mxu0 0.0
        %3606 = vmatpush1.msra.mxu0 0.0
        %3607 = vmatprep.subr.mxu0 0.0
        %3608 = vmatpush1.msra.mxu0 0.0
        %3609 = vmatprep.subr.mxu0 0.0
        %3610 = vmatpush1.msra.mxu0 0.0
        %3611 = vmatprep.subr.mxu0 0.0
        %3612 = vmatpush1.msra.mxu0 0.0
        %3613 = vmatprep.subr.mxu0 0.0
        %3614 = vmatpush1.msra.mxu0 0.0
        %3615 = vmatprep.subr.mxu0 0.0
        %3616 = vmatpush1.msra.mxu0 0.0
        %3617 = vmatprep.subr.mxu0 0.0
        %3618 = vmatpush1.msra.mxu0 0.0
        %3619 = vmatprep.subr.mxu0 0.0
        %3620 = vmatpush1.msra.mxu0 0.0
        %3621 = vmatprep.subr.mxu0 0.0
        %3622 = vmatpush1.msra.mxu0 0.0
        %3623 = vmatprep.subr.mxu0 0.0
        %3624 = vmatpush1.msra.mxu0 0.0
        %3625 = vmatprep.subr.mxu0 0.0
        %3626 = vmatpush1.msra.mxu0 0.0
        %3627 = vmatprep.subr.mxu0 0.0
        %3628 = vmatpush1.msra.mxu0 0.0
        %3629 = vmatprep.subr.mxu0 0.0
        %3630 = vmatpush1.msra.mxu0 0.0
        %3631 = vmatprep.subr.mxu0 0.0
        %3632 = vmatpush1.msra.mxu0 0.0
        %3633 = vmatprep.subr.mxu0 0.0
        %3634 = vmatpush1.msra.mxu0 0.0
        %3635 = vmatprep.subr.mxu0 0.0
        %3636 = vmatpush1.msra.mxu0 0.0
        %3637 = vmatprep.subr.mxu0 0.0
        %3638 = vmatpush1.msra.mxu0 0.0
        %3639 = vmatprep.subr.mxu0 0.0
        %3640 = vmatpush1.msra.mxu0 0.0
        %3641 = vmatprep.subr.mxu0 0.0
        %3642 = vmatpush1.msra.mxu0 0.0
        %3643 = vmatprep.subr.mxu0 0.0
        %3644 = vmatpush1.msra.mxu0 0.0
        %3645 = vmatprep.subr.mxu0 0.0
        %3646 = vmatpush1.msra.mxu0 0.0
        %3647 = vmatprep.subr.mxu0 0.0
        %3648 = vmatpush1.msra.mxu0 0.0
        %3649 = vmatprep.mubr.f32.mxu0 0.0
        %3650 = vmatmul.mubr.f32.gmra.mrb[0].mxu0 %v3574
        %v3651 = vpop.f32.mrb[0].mxu0
        %v3652 = vadd.f32 0.0, %v3651
        %v3653 = vpop.f32.mrb[0].mxu0
        %v3654 = vadd.f32 0.0, %v3653
        %3655 = vmatprep.mubr.f32.mxu0 0.0
        %3656 = vmatmul.mubr.f32.gmra.mrb[0].mxu0 %v3577
        %v3657 = vpop.f32.mrb[0].mxu0
        %v3658 = vadd.f32 0.0, %v3657
        %v3659 = vpop.f32.mrb[0].mxu0
        %v3660 = vadd.f32 0.0, %v3659
        %3661 = vmatprep.mubr.f32.mxu0 0.0
        %3662 = vmatmul.mubr.f32.gmra.mrb[0].mxu0 %v3580
        %v3663 = vpop.f32.mrb[0].mxu0
        %v3664 = vadd.f32 0.0, %v3663
        %v3665 = vpop.f32.mrb[0].mxu0
        %v3666 = vadd.f32 0.0, %v3665
        %3667 = vmatprep.mubr.f32.mxu0 0.0
        %3668 = vmatmul.mubr.f32.gmra.mrb[0].mxu0 %v3583
        %v3669 = vpop.f32.mrb[0].mxu0
        %v3670 = vadd.f32 0.0, %v3669
        %v3671 = vpop.f32.mrb[0].mxu0
        %v3672 = vadd.f32 0.0, %v3671
        %3673 = vdwg.mxu0
        %v3674 = vadd.f32 %v3543, %v3652
        %v3675 = vadd.f32 %v3544, %v3654
        %v3676 = vadd.f32 %v3545, %v3658
        %v3677 = vadd.f32 %v3546, %v3660
        %v3678 = vadd.f32 %v3547, %v3664
        %v3679 = vadd.f32 %v3548, %v3666
        %v3680 = vadd.f32 %v3549, %v3670
        %v3681 = vadd.f32 %v3550, %v3672
        %v3683 = vsel %vm1018, %v3168, 0
        %v3686 = vsel %vm1018, %v3169, 0
        %v3689 = vsel %vm1018, %v3170, 0
        %v3692 = vsel %vm1018, %v3171, 0
        %3694 = vmatprep.subr.mxu0 %v3151
        %3695 = vmatpush1.msra.mxu0 %v3150
        %3696 = vmatprep.subr.mxu0 0.0
        %3697 = vmatpush1.msra.mxu0 0.0
        %3698 = vmatprep.subr.mxu0 0.0
        %3699 = vmatpush1.msra.mxu0 0.0
        %3700 = vmatprep.subr.mxu0 0.0
        %3701 = vmatpush1.msra.mxu0 0.0
        %3702 = vmatprep.subr.mxu0 0.0
        %3703 = vmatpush1.msra.mxu0 0.0
        %3704 = vmatprep.subr.mxu0 0.0
        %3705 = vmatpush1.msra.mxu0 0.0
        %3706 = vmatprep.subr.mxu0 0.0
        %3707 = vmatpush1.msra.mxu0 0.0
        %3708 = vmatprep.subr.mxu0 0.0
        %3709 = vmatpush1.msra.mxu0 0.0
        %3710 = vmatprep.subr.mxu0 0.0
        %3711 = vmatpush1.msra.mxu0 0.0
        %3712 = vmatprep.subr.mxu0 0.0
        %3713 = vmatpush1.msra.mxu0 0.0
        %3714 = vmatprep.subr.mxu0 0.0
        %3715 = vmatpush1.msra.mxu0 0.0
        %3716 = vmatprep.subr.mxu0 0.0
        %3717 = vmatpush1.msra.mxu0 0.0
        %3718 = vmatprep.subr.mxu0 0.0
        %3719 = vmatpush1.msra.mxu0 0.0
        %3720 = vmatprep.subr.mxu0 0.0
        %3721 = vmatpush1.msra.mxu0 0.0
        %3722 = vmatprep.subr.mxu0 0.0
        %3723 = vmatpush1.msra.mxu0 0.0
        %3724 = vmatprep.subr.mxu0 0.0
        %3725 = vmatpush1.msra.mxu0 0.0
        %3726 = vmatprep.subr.mxu0 0.0
        %3727 = vmatpush1.msra.mxu0 0.0
        %3728 = vmatprep.subr.mxu0 0.0
        %3729 = vmatpush1.msra.mxu0 0.0
        %3730 = vmatprep.subr.mxu0 0.0
        %3731 = vmatpush1.msra.mxu0 0.0
        %3732 = vmatprep.subr.mxu0 0.0
        %3733 = vmatpush1.msra.mxu0 0.0
        %3734 = vmatprep.subr.mxu0 0.0
        %3735 = vmatpush1.msra.mxu0 0.0
        %3736 = vmatprep.subr.mxu0 0.0
        %3737 = vmatpush1.msra.mxu0 0.0
        %3738 = vmatprep.subr.mxu0 0.0
        %3739 = vmatpush1.msra.mxu0 0.0
        %3740 = vmatprep.subr.mxu0 0.0
        %3741 = vmatpush1.msra.mxu0 0.0
        %3742 = vmatprep.subr.mxu0 0.0
        %3743 = vmatpush1.msra.mxu0 0.0
        %3744 = vmatprep.subr.mxu0 0.0
        %3745 = vmatpush1.msra.mxu0 0.0
        %3746 = vmatprep.subr.mxu0 0.0
        %3747 = vmatpush1.msra.mxu0 0.0
        %3748 = vmatprep.subr.mxu0 0.0
        %3749 = vmatpush1.msra.mxu0 0.0
        %3750 = vmatprep.subr.mxu0 0.0
        %3751 = vmatpush1.msra.mxu0 0.0
        %3752 = vmatprep.subr.mxu0 0.0
        %3753 = vmatpush1.msra.mxu0 0.0
        %3754 = vmatprep.subr.mxu0 0.0
        %3755 = vmatpush1.msra.mxu0 0.0
        %3756 = vmatprep.subr.mxu0 0.0
        %3757 = vmatpush1.msra.mxu0 0.0
        %3758 = vmatprep.mubr.f32.mxu0 0.0
        %3759 = vmatmul.mubr.f32.gmra.mrb[0].mxu0 %v3683
        %v3760 = vpop.f32.mrb[0].mxu0
        %v3761 = vadd.f32 0.0, %v3760
        %v3762 = vpop.f32.mrb[0].mxu0
        %v3763 = vadd.f32 0.0, %v3762
        %3764 = vmatprep.mubr.f32.mxu0 0.0
        %3765 = vmatmul.mubr.f32.gmra.mrb[0].mxu0 %v3686
        %v3766 = vpop.f32.mrb[0].mxu0
        %v3767 = vadd.f32 0.0, %v3766
        %v3768 = vpop.f32.mrb[0].mxu0
        %v3769 = vadd.f32 0.0, %v3768
        %3770 = vmatprep.mubr.f32.mxu0 0.0
        %3771 = vmatmul.mubr.f32.gmra.mrb[0].mxu0 %v3689
        %v3772 = vpop.f32.mrb[0].mxu0
        %v3773 = vadd.f32 0.0, %v3772
        %v3774 = vpop.f32.mrb[0].mxu0
        %v3775 = vadd.f32 0.0, %v3774
        %3776 = vmatprep.mubr.f32.mxu0 0.0
        %3777 = vmatmul.mubr.f32.gmra.mrb[0].mxu0 %v3692
        %v3778 = vpop.f32.mrb[0].mxu0
        %v3779 = vadd.f32 0.0, %v3778
        %v3780 = vpop.f32.mrb[0].mxu0
        %v3781 = vadd.f32 0.0, %v3780
        %3782 = vdwg.mxu0
        %v3783 = vadd.f32 %v3674, %v3761
        %v3784 = vadd.f32 %v3675, %v3763
        %v3785 = vadd.f32 %v3676, %v3767
        %v3786 = vadd.f32 %v3677, %v3769
        %v3787 = vadd.f32 %v3678, %v3773
        %v3788 = vadd.f32 %v3679, %v3775
        %v3789 = vadd.f32 %v3680, %v3779
        %v3790 = vadd.f32 %v3681, %v3781
        %v3792 = vsel %vm1018, %v3172, 0
        %v3795 = vsel %vm1018, %v3173, 0
        %v3798 = vsel %vm1018, %v3174, 0
        %v3801 = vsel %vm1018, %v3175, 0
        %3803 = vmatprep.subr.mxu0 %v3572
        %3804 = vmatpush1.msra.mxu0 %v3571
        %3805 = vmatprep.subr.mxu0 0.0
        %3806 = vmatpush1.msra.mxu0 0.0
        %3807 = vmatprep.subr.mxu0 0.0
        %3808 = vmatpush1.msra.mxu0 0.0
        %3809 = vmatprep.subr.mxu0 0.0
        %3810 = vmatpush1.msra.mxu0 0.0
        %3811 = vmatprep.subr.mxu0 0.0
        %3812 = vmatpush1.msra.mxu0 0.0
        %3813 = vmatprep.subr.mxu0 0.0
        %3814 = vmatpush1.msra.mxu0 0.0
        %3815 = vmatprep.subr.mxu0 0.0
        %3816 = vmatpush1.msra.mxu0 0.0
        %3817 = vmatprep.subr.mxu0 0.0
        %3818 = vmatpush1.msra.mxu0 0.0
        %3819 = vmatprep.subr.mxu0 0.0
        %3820 = vmatpush1.msra.mxu0 0.0
        %3821 = vmatprep.subr.mxu0 0.0
        %3822 = vmatpush1.msra.mxu0 0.0
        %3823 = vmatprep.subr.mxu0 0.0
        %3824 = vmatpush1.msra.mxu0 0.0
        %3825 = vmatprep.subr.mxu0 0.0
        %3826 = vmatpush1.msra.mxu0 0.0
        %3827 = vmatprep.subr.mxu0 0.0
        %3828 = vmatpush1.msra.mxu0 0.0
        %3829 = vmatprep.subr.mxu0 0.0
        %3830 = vmatpush1.msra.mxu0 0.0
        %3831 = vmatprep.subr.mxu0 0.0
        %3832 = vmatpush1.msra.mxu0 0.0
        %3833 = vmatprep.subr.mxu0 0.0
        %3834 = vmatpush1.msra.mxu0 0.0
        %3835 = vmatprep.subr.mxu0 0.0
        %3836 = vmatpush1.msra.mxu0 0.0
        %3837 = vmatprep.subr.mxu0 0.0
        %3838 = vmatpush1.msra.mxu0 0.0
        %3839 = vmatprep.subr.mxu0 0.0
        %3840 = vmatpush1.msra.mxu0 0.0
        %3841 = vmatprep.subr.mxu0 0.0
        %3842 = vmatpush1.msra.mxu0 0.0
        %3843 = vmatprep.subr.mxu0 0.0
        %3844 = vmatpush1.msra.mxu0 0.0
        %3845 = vmatprep.subr.mxu0 0.0
        %3846 = vmatpush1.msra.mxu0 0.0
        %3847 = vmatprep.subr.mxu0 0.0
        %3848 = vmatpush1.msra.mxu0 0.0
        %3849 = vmatprep.subr.mxu0 0.0
        %3850 = vmatpush1.msra.mxu0 0.0
        %3851 = vmatprep.subr.mxu0 0.0
        %3852 = vmatpush1.msra.mxu0 0.0
        %3853 = vmatprep.subr.mxu0 0.0
        %3854 = vmatpush1.msra.mxu0 0.0
        %3855 = vmatprep.subr.mxu0 0.0
        %3856 = vmatpush1.msra.mxu0 0.0
        %3857 = vmatprep.subr.mxu0 0.0
        %3858 = vmatpush1.msra.mxu0 0.0
        %3859 = vmatprep.subr.mxu0 0.0
        %3860 = vmatpush1.msra.mxu0 0.0
        %3861 = vmatprep.subr.mxu0 0.0
        %3862 = vmatpush1.msra.mxu0 0.0
        %3863 = vmatprep.subr.mxu0 0.0
        %3864 = vmatpush1.msra.mxu0 0.0
        %3865 = vmatprep.subr.mxu0 0.0
        %3866 = vmatpush1.msra.mxu0 0.0
        %3867 = vmatprep.mubr.f32.mxu0 0.0
        %3868 = vmatmul.mubr.f32.gmra.mrb[0].mxu0 %v3792
        %v3869 = vpop.f32.mrb[0].mxu0
        %v3870 = vadd.f32 0.0, %v3869
        %v3871 = vpop.f32.mrb[0].mxu0
        %v3872 = vadd.f32 0.0, %v3871
        %3873 = vmatprep.mubr.f32.mxu0 0.0
        %3874 = vmatmul.mubr.f32.gmra.mrb[0].mxu0 %v3795
        %v3875 = vpop.f32.mrb[0].mxu0
        %v3876 = vadd.f32 0.0, %v3875
        %v3877 = vpop.f32.mrb[0].mxu0
        %v3878 = vadd.f32 0.0, %v3877
        %3879 = vmatprep.mubr.f32.mxu0 0.0
        %3880 = vmatmul.mubr.f32.gmra.mrb[0].mxu0 %v3798
        %v3881 = vpop.f32.mrb[0].mxu0
        %v3882 = vadd.f32 0.0, %v3881
        %v3883 = vpop.f32.mrb[0].mxu0
        %v3884 = vadd.f32 0.0, %v3883
        %3885 = vmatprep.mubr.f32.mxu0 0.0
        %3886 = vmatmul.mubr.f32.gmra.mrb[0].mxu0 %v3801
        %v3887 = vpop.f32.mrb[0].mxu0
        %v3888 = vadd.f32 0.0, %v3887
        %v3889 = vpop.f32.mrb[0].mxu0
        %v3890 = vadd.f32 0.0, %v3889
        %3891 = vdwg.mxu0
        %v3892 = vadd.f32 %v3783, %v3870
        %v3893 = vadd.f32 %v3784, %v3872
        %v3894 = vadd.f32 %v3785, %v3876
        %v3895 = vadd.f32 %v3786, %v3878
        %v3896 = vadd.f32 %v3787, %v3882
        %v3897 = vadd.f32 %v3788, %v3884
        %v3898 = vadd.f32 %v3789, %v3888
        %v3899 = vadd.f32 %v3790, %v3890
        %3901 = vrot.lane.b32.xlu0 %v3215, 1
        %v3902 = vpop.permute.xlu0 %3901
        %3905 = vrot.lane.b32.xlu0 %v3214, 1
        %v3906 = vpop.permute.xlu0 %3905
        %v3907 = vsel %vm977, %v3906, %v3902
        %v3910 = vsel %vm977, %v3902, %v3906
        %v3911 = vsel %vm991, %v3910, 0.0
        %v3912 = vsel %vm992, %v3907, 0.0
        %3913 = vrot.lane.b32.xlu0 %v3214, 127
        %v3914 = vpop.permute.xlu0 %3913
        %3915 = vrot.lane.b32.xlu0 %v3215, 127
        %v3916 = vpop.permute.xlu0 %3915
        %v3917 = vsel %vm999, %v3914, %v3916
        %v3921 = vsel %vm999, %v3916, %v3914
        %v3922 = vsel %vm1014, %v3917, 0.0
        %v3923 = vsel %vm1015, %v3921, 0.0
        %v3925 = vsel %vm1018, %v3176, 0
        %v3928 = vsel %vm1018, %v3177, 0
        %v3931 = vsel %vm1018, %v3178, 0
        %v3934 = vsel %vm1018, %v3179, 0
        %3936 = vmatprep.subr.mxu0 %v3912
        %3937 = vmatpush1.msra.mxu0 %v3911
        %3938 = vmatprep.subr.mxu0 0.0
        %3939 = vmatpush1.msra.mxu0 0.0
        %3940 = vmatprep.subr.mxu0 0.0
        %3941 = vmatpush1.msra.mxu0 0.0
        %3942 = vmatprep.subr.mxu0 0.0
        %3943 = vmatpush1.msra.mxu0 0.0
        %3944 = vmatprep.subr.mxu0 0.0
        %3945 = vmatpush1.msra.mxu0 0.0
        %3946 = vmatprep.subr.mxu0 0.0
        %3947 = vmatpush1.msra.mxu0 0.0
        %3948 = vmatprep.subr.mxu0 0.0
        %3949 = vmatpush1.msra.mxu0 0.0
        %3950 = vmatprep.subr.mxu0 0.0
        %3951 = vmatpush1.msra.mxu0 0.0
        %3952 = vmatprep.subr.mxu0 0.0
        %3953 = vmatpush1.msra.mxu0 0.0
        %3954 = vmatprep.subr.mxu0 0.0
        %3955 = vmatpush1.msra.mxu0 0.0
        %3956 = vmatprep.subr.mxu0 0.0
        %3957 = vmatpush1.msra.mxu0 0.0
        %3958 = vmatprep.subr.mxu0 0.0
        %3959 = vmatpush1.msra.mxu0 0.0
        %3960 = vmatprep.subr.mxu0 0.0
        %3961 = vmatpush1.msra.mxu0 0.0
        %3962 = vmatprep.subr.mxu0 0.0
        %3963 = vmatpush1.msra.mxu0 0.0
        %3964 = vmatprep.subr.mxu0 0.0
        %3965 = vmatpush1.msra.mxu0 0.0
        %3966 = vmatprep.subr.mxu0 0.0
        %3967 = vmatpush1.msra.mxu0 0.0
        %3968 = vmatprep.subr.mxu0 0.0
        %3969 = vmatpush1.msra.mxu0 0.0
        %3970 = vmatprep.subr.mxu0 0.0
        %3971 = vmatpush1.msra.mxu0 0.0
        %3972 = vmatprep.subr.mxu0 0.0
        %3973 = vmatpush1.msra.mxu0 0.0
        %3974 = vmatprep.subr.mxu0 0.0
        %3975 = vmatpush1.msra.mxu0 0.0
        %3976 = vmatprep.subr.mxu0 0.0
        %3977 = vmatpush1.msra.mxu0 0.0
        %3978 = vmatprep.subr.mxu0 0.0
        %3979 = vmatpush1.msra.mxu0 0.0
        %3980 = vmatprep.subr.mxu0 0.0
        %3981 = vmatpush1.msra.mxu0 0.0
        %3982 = vmatprep.subr.mxu0 0.0
        %3983 = vmatpush1.msra.mxu0 0.0
        %3984 = vmatprep.subr.mxu0 0.0
        %3985 = vmatpush1.msra.mxu0 0.0
        %3986 = vmatprep.subr.mxu0 0.0
        %3987 = vmatpush1.msra.mxu0 0.0
        %3988 = vmatprep.subr.mxu0 0.0
        %3989 = vmatpush1.msra.mxu0 0.0
        %3990 = vmatprep.subr.mxu0 0.0
        %3991 = vmatpush1.msra.mxu0 0.0
        %3992 = vmatprep.subr.mxu0 0.0
        %3993 = vmatpush1.msra.mxu0 0.0
        %3994 = vmatprep.subr.mxu0 0.0
        %3995 = vmatpush1.msra.mxu0 0.0
        %3996 = vmatprep.subr.mxu0 0.0
        %3997 = vmatpush1.msra.mxu0 0.0
        %3998 = vmatprep.subr.mxu0 0.0
        %3999 = vmatpush1.msra.mxu0 0.0
        %4000 = vmatprep.mubr.f32.mxu0 0.0
        %4001 = vmatmul.mubr.f32.gmra.mrb[0].mxu0 %v3925
        %v4002 = vpop.f32.mrb[0].mxu0
        %v4003 = vadd.f32 0.0, %v4002
        %v4004 = vpop.f32.mrb[0].mxu0
        %v4005 = vadd.f32 0.0, %v4004
        %4006 = vmatprep.mubr.f32.mxu0 0.0
        %4007 = vmatmul.mubr.f32.gmra.mrb[0].mxu0 %v3928
        %v4008 = vpop.f32.mrb[0].mxu0
        %v4009 = vadd.f32 0.0, %v4008
        %v4010 = vpop.f32.mrb[0].mxu0
        %v4011 = vadd.f32 0.0, %v4010
        %4012 = vmatprep.mubr.f32.mxu0 0.0
        %4013 = vmatmul.mubr.f32.gmra.mrb[0].mxu0 %v3931
        %v4014 = vpop.f32.mrb[0].mxu0
        %v4015 = vadd.f32 0.0, %v4014
        %v4016 = vpop.f32.mrb[0].mxu0
        %v4017 = vadd.f32 0.0, %v4016
        %4018 = vmatprep.mubr.f32.mxu0 0.0
        %4019 = vmatmul.mubr.f32.gmra.mrb[0].mxu0 %v3934
        %v4020 = vpop.f32.mrb[0].mxu0
        %v4021 = vadd.f32 0.0, %v4020
        %v4022 = vpop.f32.mrb[0].mxu0
        %v4023 = vadd.f32 0.0, %v4022
        %4024 = vdwg.mxu0
        %v4025 = vadd.f32 %v3892, %v4003
        %v4026 = vadd.f32 %v3893, %v4005
        %v4027 = vadd.f32 %v3894, %v4009
        %v4028 = vadd.f32 %v3895, %v4011
        %v4029 = vadd.f32 %v3896, %v4015
        %v4030 = vadd.f32 %v3897, %v4017
        %v4031 = vadd.f32 %v3898, %v4021
        %v4032 = vadd.f32 %v3899, %v4023
        %v4034 = vsel %vm1018, %v3180, 0
        %v4037 = vsel %vm1018, %v3181, 0
        %v4040 = vsel %vm1018, %v3182, 0
        %v4043 = vsel %vm1018, %v3183, 0
        %4045 = vmatprep.subr.mxu0 %v3215
        %4046 = vmatpush1.msra.mxu0 %v3214
        %4047 = vmatprep.subr.mxu0 0.0
        %4048 = vmatpush1.msra.mxu0 0.0
        %4049 = vmatprep.subr.mxu0 0.0
        %4050 = vmatpush1.msra.mxu0 0.0
        %4051 = vmatprep.subr.mxu0 0.0
        %4052 = vmatpush1.msra.mxu0 0.0
        %4053 = vmatprep.subr.mxu0 0.0
        %4054 = vmatpush1.msra.mxu0 0.0
        %4055 = vmatprep.subr.mxu0 0.0
        %4056 = vmatpush1.msra.mxu0 0.0
        %4057 = vmatprep.subr.mxu0 0.0
        %4058 = vmatpush1.msra.mxu0 0.0
        %4059 = vmatprep.subr.mxu0 0.0
        %4060 = vmatpush1.msra.mxu0 0.0
        %4061 = vmatprep.subr.mxu0 0.0
        %4062 = vmatpush1.msra.mxu0 0.0
        %4063 = vmatprep.subr.mxu0 0.0
        %4064 = vmatpush1.msra.mxu0 0.0
        %4065 = vmatprep.subr.mxu0 0.0
        %4066 = vmatpush1.msra.mxu0 0.0
        %4067 = vmatprep.subr.mxu0 0.0
        %4068 = vmatpush1.msra.mxu0 0.0
        %4069 = vmatprep.subr.mxu0 0.0
        %4070 = vmatpush1.msra.mxu0 0.0
        %4071 = vmatprep.subr.mxu0 0.0
        %4072 = vmatpush1.msra.mxu0 0.0
        %4073 = vmatprep.subr.mxu0 0.0
        %4074 = vmatpush1.msra.mxu0 0.0
        %4075 = vmatprep.subr.mxu0 0.0
        %4076 = vmatpush1.msra.mxu0 0.0
        %4077 = vmatprep.subr.mxu0 0.0
        %4078 = vmatpush1.msra.mxu0 0.0
        %4079 = vmatprep.subr.mxu0 0.0
        %4080 = vmatpush1.msra.mxu0 0.0
        %4081 = vmatprep.subr.mxu0 0.0
        %4082 = vmatpush1.msra.mxu0 0.0
        %4083 = vmatprep.subr.mxu0 0.0
        %4084 = vmatpush1.msra.mxu0 0.0
        %4085 = vmatprep.subr.mxu0 0.0
        %4086 = vmatpush1.msra.mxu0 0.0
        %4087 = vmatprep.subr.mxu0 0.0
        %4088 = vmatpush1.msra.mxu0 0.0
        %4089 = vmatprep.subr.mxu0 0.0
        %4090 = vmatpush1.msra.mxu0 0.0
        %4091 = vmatprep.subr.mxu0 0.0
        %4092 = vmatpush1.msra.mxu0 0.0
        %4093 = vmatprep.subr.mxu0 0.0
        %4094 = vmatpush1.msra.mxu0 0.0
        %4095 = vmatprep.subr.mxu0 0.0
        %4096 = vmatpush1.msra.mxu0 0.0
        %4097 = vmatprep.subr.mxu0 0.0
        %4098 = vmatpush1.msra.mxu0 0.0
        %4099 = vmatprep.subr.mxu0 0.0
        %4100 = vmatpush1.msra.mxu0 0.0
        %4101 = vmatprep.subr.mxu0 0.0
        %4102 = vmatpush1.msra.mxu0 0.0
        %4103 = vmatprep.subr.mxu0 0.0
        %4104 = vmatpush1.msra.mxu0 0.0
        %4105 = vmatprep.subr.mxu0 0.0
        %4106 = vmatpush1.msra.mxu0 0.0
        %4107 = vmatprep.subr.mxu0 0.0
        %4108 = vmatpush1.msra.mxu0 0.0
        %4109 = vmatprep.mubr.f32.mxu0 0.0
        %4110 = vmatmul.mubr.f32.gmra.mrb[0].mxu0 %v4034
        %v4111 = vpop.f32.mrb[0].mxu0
        %v4112 = vadd.f32 0.0, %v4111
        %v4113 = vpop.f32.mrb[0].mxu0
        %v4114 = vadd.f32 0.0, %v4113
        %4115 = vmatprep.mubr.f32.mxu0 0.0
        %4116 = vmatmul.mubr.f32.gmra.mrb[0].mxu0 %v4037
        %v4117 = vpop.f32.mrb[0].mxu0
        %v4118 = vadd.f32 0.0, %v4117
        %v4119 = vpop.f32.mrb[0].mxu0
        %v4120 = vadd.f32 0.0, %v4119
        %4121 = vmatprep.mubr.f32.mxu0 0.0
        %4122 = vmatmul.mubr.f32.gmra.mrb[0].mxu0 %v4040
        %v4123 = vpop.f32.mrb[0].mxu0
        %v4124 = vadd.f32 0.0, %v4123
        %v4125 = vpop.f32.mrb[0].mxu0
        %v4126 = vadd.f32 0.0, %v4125
        %4127 = vmatprep.mubr.f32.mxu0 0.0
        %4128 = vmatmul.mubr.f32.gmra.mrb[0].mxu0 %v4043
        %v4129 = vpop.f32.mrb[0].mxu0
        %v4130 = vadd.f32 0.0, %v4129
        %v4131 = vpop.f32.mrb[0].mxu0
        %v4132 = vadd.f32 0.0, %v4131
        %4133 = vdwg.mxu0
        %v4134 = vadd.f32 %v4025, %v4112
        %v4135 = vadd.f32 %v4026, %v4114
        %v4136 = vadd.f32 %v4027, %v4118
        %v4137 = vadd.f32 %v4028, %v4120
        %v4138 = vadd.f32 %v4029, %v4124
        %v4139 = vadd.f32 %v4030, %v4126
        %v4140 = vadd.f32 %v4031, %v4130
        %v4141 = vadd.f32 %v4032, %v4132
        %v4143 = vsel %vm1018, %v3184, 0
        %v4146 = vsel %vm1018, %v3185, 0
        %v4149 = vsel %vm1018, %v3186, 0
        %v4152 = vsel %vm1018, %v3187, 0
        %4154 = vmatprep.subr.mxu0 %v3923
        %4155 = vmatpush1.msra.mxu0 %v3922
        %4156 = vmatprep.subr.mxu0 0.0
        %4157 = vmatpush1.msra.mxu0 0.0
        %4158 = vmatprep.subr.mxu0 0.0
        %4159 = vmatpush1.msra.mxu0 0.0
        %4160 = vmatprep.subr.mxu0 0.0
        %4161 = vmatpush1.msra.mxu0 0.0
        %4162 = vmatprep.subr.mxu0 0.0
        %4163 = vmatpush1.msra.mxu0 0.0
        %4164 = vmatprep.subr.mxu0 0.0
        %4165 = vmatpush1.msra.mxu0 0.0
        %4166 = vmatprep.subr.mxu0 0.0
        %4167 = vmatpush1.msra.mxu0 0.0
        %4168 = vmatprep.subr.mxu0 0.0
        %4169 = vmatpush1.msra.mxu0 0.0
        %4170 = vmatprep.subr.mxu0 0.0
        %4171 = vmatpush1.msra.mxu0 0.0
        %4172 = vmatprep.subr.mxu0 0.0
        %4173 = vmatpush1.msra.mxu0 0.0
        %4174 = vmatprep.subr.mxu0 0.0
        %4175 = vmatpush1.msra.mxu0 0.0
        %4176 = vmatprep.subr.mxu0 0.0
        %4177 = vmatpush1.msra.mxu0 0.0
        %4178 = vmatprep.subr.mxu0 0.0
        %4179 = vmatpush1.msra.mxu0 0.0
        %4180 = vmatprep.subr.mxu0 0.0
        %4181 = vmatpush1.msra.mxu0 0.0
        %4182 = vmatprep.subr.mxu0 0.0
        %4183 = vmatpush1.msra.mxu0 0.0
        %4184 = vmatprep.subr.mxu0 0.0
        %4185 = vmatpush1.msra.mxu0 0.0
        %4186 = vmatprep.subr.mxu0 0.0
        %4187 = vmatpush1.msra.mxu0 0.0
        %4188 = vmatprep.subr.mxu0 0.0
        %4189 = vmatpush1.msra.mxu0 0.0
        %4190 = vmatprep.subr.mxu0 0.0
        %4191 = vmatpush1.msra.mxu0 0.0
        %4192 = vmatprep.subr.mxu0 0.0
        %4193 = vmatpush1.msra.mxu0 0.0
        %4194 = vmatprep.subr.mxu0 0.0
        %4195 = vmatpush1.msra.mxu0 0.0
        %4196 = vmatprep.subr.mxu0 0.0
        %4197 = vmatpush1.msra.mxu0 0.0
        %4198 = vmatprep.subr.mxu0 0.0
        %4199 = vmatpush1.msra.mxu0 0.0
        %4200 = vmatprep.subr.mxu0 0.0
        %4201 = vmatpush1.msra.mxu0 0.0
        %4202 = vmatprep.subr.mxu0 0.0
        %4203 = vmatpush1.msra.mxu0 0.0
        %4204 = vmatprep.subr.mxu0 0.0
        %4205 = vmatpush1.msra.mxu0 0.0
        %4206 = vmatprep.subr.mxu0 0.0
        %4207 = vmatpush1.msra.mxu0 0.0
        %4208 = vmatprep.subr.mxu0 0.0
        %4209 = vmatpush1.msra.mxu0 0.0
        %4210 = vmatprep.subr.mxu0 0.0
        %4211 = vmatpush1.msra.mxu0 0.0
        %4212 = vmatprep.subr.mxu0 0.0
        %4213 = vmatpush1.msra.mxu0 0.0
        %4214 = vmatprep.subr.mxu0 0.0
        %4215 = vmatpush1.msra.mxu0 0.0
        %4216 = vmatprep.subr.mxu0 0.0
        %4217 = vmatpush1.msra.mxu0 0.0
        %4218 = vmatprep.mubr.f32.mxu0 0.0
        %4219 = vmatmul.mubr.f32.gmra.mrb[0].mxu0 %v4143
        %v4220 = vpop.f32.mrb[0].mxu0
        %v4221 = vadd.f32 0.0, %v4220
        %v4222 = vpop.f32.mrb[0].mxu0
        %v4223 = vadd.f32 0.0, %v4222
        %4224 = vmatprep.mubr.f32.mxu0 0.0
        %4225 = vmatmul.mubr.f32.gmra.mrb[0].mxu0 %v4146
        %v4226 = vpop.f32.mrb[0].mxu0
        %v4227 = vadd.f32 0.0, %v4226
        %v4228 = vpop.f32.mrb[0].mxu0
        %v4229 = vadd.f32 0.0, %v4228
        %4230 = vmatprep.mubr.f32.mxu0 0.0
        %4231 = vmatmul.mubr.f32.gmra.mrb[0].mxu0 %v4149
        %v4232 = vpop.f32.mrb[0].mxu0
        %v4233 = vadd.f32 0.0, %v4232
        %v4234 = vpop.f32.mrb[0].mxu0
        %v4235 = vadd.f32 0.0, %v4234
        %4236 = vmatprep.mubr.f32.mxu0 0.0
        %4237 = vmatmul.mubr.f32.gmra.mrb[0].mxu0 %v4152
        %v4238 = vpop.f32.mrb[0].mxu0
        %v4239 = vadd.f32 0.0, %v4238
        %v4240 = vpop.f32.mrb[0].mxu0
        %v4241 = vadd.f32 0.0, %v4240
        %4242 = vdwg.mxu0
        %v4243 = vadd.f32 %v4134, %v4221
        %v4244 = vadd.f32 %v4135, %v4223
        %v4245 = vadd.f32 %v4136, %v4227
        %v4246 = vadd.f32 %v4137, %v4229
        %v4247 = vadd.f32 %v4138, %v4233
        %v4248 = vadd.f32 %v4139, %v4235
        %v4249 = vadd.f32 %v4140, %v4239
        %v4250 = vadd.f32 %v4141, %v4241
        %4252 = vset.pattern.permute.xlu0 0
        %4253 = vperm.xlu0 %4252, %v3188
        %v4254 = vpop.permute.xlu0 %4253
        %4257 = vset.pattern.permute.xlu0 0
        %4258 = vperm.xlu0 %4257, %v3189
        %v4259 = vpop.permute.xlu0 %4258
        %4262 = vset.pattern.permute.xlu0 0
        %4263 = vperm.xlu0 %4262, %v3190
        %v4264 = vpop.permute.xlu0 %4263
        %4267 = vset.pattern.permute.xlu0 0
        %4268 = vperm.xlu0 %4267, %v3191
        %v4269 = vpop.permute.xlu0 %4268
        %v4271 = vadd.f32 %v4243, %v4254
        %v4272 = vadd.f32 %v4244, %v4254
        %v4273 = vadd.f32 %v4245, %v4259
        %v4274 = vadd.f32 %v4246, %v4259
        %v4275 = vadd.f32 %v4247, %v4264
        %v4276 = vadd.f32 %v4248, %v4264
        %v4277 = vadd.f32 %v4249, %v4269
        %v4278 = vadd.f32 %v4250, %v4269
        %v4279 = vld [vmem:[%s10] sm:$0xf]
        %v4280 = vld [vmem:[%s10 + $0x4] sm:$0xf]
        %v4281 = vld [vmem:[%s10 + $0x8] sm:$0xf]
        %v4282 = vld [vmem:[%s10 + $0xc] sm:$0xf]
        %v4283 = vld [vmem:[%s10 + $0x10] sm:$0xf]
        %v4284 = vld [vmem:[%s10 + $0x14] sm:$0xf]
        %v4285 = vld [vmem:[%s10 + $0x18] sm:$0xf]
        %v4286 = vld [vmem:[%s10 + $0x1c] sm:$0xf]
        %v4287 = vld [vmem:[%s10 + $0x20] sm:$0xf]
        %v4288 = vld [vmem:[%s11] sm:$0xf]
        %4293 = vrot.lane.b32.xlu0 %v4272, 16
        %v4294 = vpop.permute.xlu0 %4293
        %4295 = vrot.lane.b32.xlu0 %v4274, 16
        %v4296 = vpop.permute.xlu0 %4295
        %4297 = vrot.lane.b32.xlu0 %v4276, 16
        %v4298 = vpop.permute.xlu0 %4297
        %4299 = vrot.lane.b32.xlu0 %v4278, 16
        %v4300 = vpop.permute.xlu0 %4299
        %4309 = vrot.lane.b32.xlu0 %v4271, 16
        %v4310 = vpop.permute.xlu0 %4309
        %4311 = vrot.lane.b32.xlu0 %v4273, 16
        %v4312 = vpop.permute.xlu0 %4311
        %4313 = vrot.lane.b32.xlu0 %v4275, 16
        %v4314 = vpop.permute.xlu0 %4313
        %4315 = vrot.lane.b32.xlu0 %v4277, 16
        %v4316 = vpop.permute.xlu0 %4315
        %v4317 = vsel %vm943, %v4310, %v4294
        %v4318 = vsel %vm943, %v4312, %v4296
        %v4319 = vsel %vm943, %v4314, %v4298
        %v4320 = vsel %vm943, %v4316, %v4300
        %v4329 = vsel %vm943, %v4294, %v4310
        %v4330 = vsel %vm943, %v4296, %v4312
        %v4331 = vsel %vm943, %v4298, %v4314
        %v4332 = vsel %vm943, %v4300, %v4316
        %v4333 = vsel %vm950, %v4329, 0.0
        %v4334 = vsel %vm951, %v4317, 0.0
        %v4335 = vsel %vm950, %v4330, 0.0
        %v4336 = vsel %vm951, %v4318, 0.0
        %v4337 = vsel %vm950, %v4331, 0.0
        %v4338 = vsel %vm951, %v4319, 0.0
        %v4339 = vsel %vm950, %v4332, 0.0
        %v4340 = vsel %vm951, %v4320, 0.0
        %4341 = vrot.lane.b32.xlu0 %v4271, 112
        %v4342 = vpop.permute.xlu0 %4341
        %4343 = vrot.lane.b32.xlu0 %v4272, 112
        %v4344 = vpop.permute.xlu0 %4343
        %4345 = vrot.lane.b32.xlu0 %v4273, 112
        %v4346 = vpop.permute.xlu0 %4345
        %4347 = vrot.lane.b32.xlu0 %v4274, 112
        %v4348 = vpop.permute.xlu0 %4347
        %4349 = vrot.lane.b32.xlu0 %v4275, 112
        %v4350 = vpop.permute.xlu0 %4349
        %4351 = vrot.lane.b32.xlu0 %v4276, 112
        %v4352 = vpop.permute.xlu0 %4351
        %4353 = vrot.lane.b32.xlu0 %v4277, 112
        %v4354 = vpop.permute.xlu0 %4353
        %4355 = vrot.lane.b32.xlu0 %v4278, 112
        %v4356 = vpop.permute.xlu0 %4355
        %v4357 = vsel %vm958, %v4342, %v4344
        %v4358 = vsel %vm958, %v4346, %v4348
        %v4359 = vsel %vm958, %v4350, %v4352
        %v4360 = vsel %vm958, %v4354, %v4356
        %v4373 = vsel %vm958, %v4344, %v4342
        %v4374 = vsel %vm958, %v4348, %v4346
        %v4375 = vsel %vm958, %v4352, %v4350
        %v4376 = vsel %vm958, %v4356, %v4354
        %v4377 = vsel %vm966, %v4357, 0.0
        %v4378 = vsel %vm967, %v4373, 0.0
        %v4379 = vsel %vm966, %v4358, 0.0
        %v4380 = vsel %vm967, %v4374, 0.0
        %v4381 = vsel %vm966, %v4359, 0.0
        %v4382 = vsel %vm967, %v4375, 0.0
        %v4383 = vsel %vm966, %v4360, 0.0
        %v4384 = vsel %vm967, %v4376, 0.0
        %4389 = vrot.lane.b32.xlu0 %v4334, 1
        %v4390 = vpop.permute.xlu0 %4389
        %4391 = vrot.lane.b32.xlu0 %v4336, 1
        %v4392 = vpop.permute.xlu0 %4391
        %4393 = vrot.lane.b32.xlu0 %v4338, 1
        %v4394 = vpop.permute.xlu0 %4393
        %4395 = vrot.lane.b32.xlu0 %v4340, 1
        %v4396 = vpop.permute.xlu0 %4395
        %4405 = vrot.lane.b32.xlu0 %v4333, 1
        %v4406 = vpop.permute.xlu0 %4405
        %4407 = vrot.lane.b32.xlu0 %v4335, 1
        %v4408 = vpop.permute.xlu0 %4407
        %4409 = vrot.lane.b32.xlu0 %v4337, 1
        %v4410 = vpop.permute.xlu0 %4409
        %4411 = vrot.lane.b32.xlu0 %v4339, 1
        %v4412 = vpop.permute.xlu0 %4411
        %v4413 = vsel %vm977, %v4406, %v4390
        %v4414 = vsel %vm977, %v4408, %v4392
        %v4415 = vsel %vm977, %v4410, %v4394
        %v4416 = vsel %vm977, %v4412, %v4396
        %v4425 = vsel %vm977, %v4390, %v4406
        %v4426 = vsel %vm977, %v4392, %v4408
        %v4427 = vsel %vm977, %v4394, %v4410
        %v4428 = vsel %vm977, %v4396, %v4412
        %v4429 = vsel %vm991, %v4425, 0.0
        %v4430 = vsel %vm992, %v4413, 0.0
        %v4431 = vsel %vm991, %v4426, 0.0
        %v4432 = vsel %vm992, %v4414, 0.0
        %v4433 = vsel %vm991, %v4427, 0.0
        %v4434 = vsel %vm992, %v4415, 0.0
        %v4435 = vsel %vm991, %v4428, 0.0
        %v4436 = vsel %vm992, %v4416, 0.0
        %4437 = vrot.lane.b32.xlu0 %v4333, 127
        %v4438 = vpop.permute.xlu0 %4437
        %4439 = vrot.lane.b32.xlu0 %v4334, 127
        %v4440 = vpop.permute.xlu0 %4439
        %4441 = vrot.lane.b32.xlu0 %v4335, 127
        %v4442 = vpop.permute.xlu0 %4441
        %4443 = vrot.lane.b32.xlu0 %v4336, 127
        %v4444 = vpop.permute.xlu0 %4443
        %4445 = vrot.lane.b32.xlu0 %v4337, 127
        %v4446 = vpop.permute.xlu0 %4445
        %4447 = vrot.lane.b32.xlu0 %v4338, 127
        %v4448 = vpop.permute.xlu0 %4447
        %4449 = vrot.lane.b32.xlu0 %v4339, 127
        %v4450 = vpop.permute.xlu0 %4449
        %4451 = vrot.lane.b32.xlu0 %v4340, 127
        %v4452 = vpop.permute.xlu0 %4451
        %v4453 = vsel %vm999, %v4438, %v4440
        %v4454 = vsel %vm999, %v4442, %v4444
        %v4455 = vsel %vm999, %v4446, %v4448
        %v4456 = vsel %vm999, %v4450, %v4452
        %v4469 = vsel %vm999, %v4440, %v4438
        %v4470 = vsel %vm999, %v4444, %v4442
        %v4471 = vsel %vm999, %v4448, %v4446
        %v4472 = vsel %vm999, %v4452, %v4450
        %v4473 = vsel %vm1014, %v4453, 0.0
        %v4474 = vsel %vm1015, %v4469, 0.0
        %v4475 = vsel %vm1014, %v4454, 0.0
        %v4476 = vsel %vm1015, %v4470, 0.0
        %v4477 = vsel %vm1014, %v4455, 0.0
        %v4478 = vsel %vm1015, %v4471, 0.0
        %v4479 = vsel %vm1014, %v4456, 0.0
        %v4480 = vsel %vm1015, %v4472, 0.0
        %v4482 = vsel %vm2268, %v4280, 0
        %4484 = vmatprep.subr.mxu0 %v4334
        %4485 = vmatpush1.msra.mxu0 %v4333
        %4486 = vmatprep.subr.mxu0 %v4336
        %4487 = vmatpush1.msra.mxu0 %v4335
        %4488 = vmatprep.subr.mxu0 %v4338
        %4489 = vmatpush1.msra.mxu0 %v4337
        %4490 = vmatprep.subr.mxu0 %v4340
        %4491 = vmatpush1.msra.mxu0 %v4339
        %4492 = vmatprep.subr.mxu0 0.0
        %4493 = vmatpush1.msra.mxu0 0.0
        %4494 = vmatprep.subr.mxu0 0.0
        %4495 = vmatpush1.msra.mxu0 0.0
        %4496 = vmatprep.subr.mxu0 0.0
        %4497 = vmatpush1.msra.mxu0 0.0
        %4498 = vmatprep.subr.mxu0 0.0
        %4499 = vmatpush1.msra.mxu0 0.0
        %4500 = vmatprep.subr.mxu0 0.0
        %4501 = vmatpush1.msra.mxu0 0.0
        %4502 = vmatprep.subr.mxu0 0.0
        %4503 = vmatpush1.msra.mxu0 0.0
        %4504 = vmatprep.subr.mxu0 0.0
        %4505 = vmatpush1.msra.mxu0 0.0
        %4506 = vmatprep.subr.mxu0 0.0
        %4507 = vmatpush1.msra.mxu0 0.0
        %4508 = vmatprep.subr.mxu0 0.0
        %4509 = vmatpush1.msra.mxu0 0.0
        %4510 = vmatprep.subr.mxu0 0.0
        %4511 = vmatpush1.msra.mxu0 0.0
        %4512 = vmatprep.subr.mxu0 0.0
        %4513 = vmatpush1.msra.mxu0 0.0
        %4514 = vmatprep.subr.mxu0 0.0
        %4515 = vmatpush1.msra.mxu0 0.0
        %4516 = vmatprep.subr.mxu0 0.0
        %4517 = vmatpush1.msra.mxu0 0.0
        %4518 = vmatprep.subr.mxu0 0.0
        %4519 = vmatpush1.msra.mxu0 0.0
        %4520 = vmatprep.subr.mxu0 0.0
        %4521 = vmatpush1.msra.mxu0 0.0
        %4522 = vmatprep.subr.mxu0 0.0
        %4523 = vmatpush1.msra.mxu0 0.0
        %4524 = vmatprep.subr.mxu0 0.0
        %4525 = vmatpush1.msra.mxu0 0.0
        %4526 = vmatprep.subr.mxu0 0.0
        %4527 = vmatpush1.msra.mxu0 0.0
        %4528 = vmatprep.subr.mxu0 0.0
        %4529 = vmatpush1.msra.mxu0 0.0
        %4530 = vmatprep.subr.mxu0 0.0
        %4531 = vmatpush1.msra.mxu0 0.0
        %4532 = vmatprep.subr.mxu0 0.0
        %4533 = vmatpush1.msra.mxu0 0.0
        %4534 = vmatprep.subr.mxu0 0.0
        %4535 = vmatpush1.msra.mxu0 0.0
        %4536 = vmatprep.subr.mxu0 0.0
        %4537 = vmatpush1.msra.mxu0 0.0
        %4538 = vmatprep.subr.mxu0 0.0
        %4539 = vmatpush1.msra.mxu0 0.0
        %4540 = vmatprep.subr.mxu0 0.0
        %4541 = vmatpush1.msra.mxu0 0.0
        %4542 = vmatprep.subr.mxu0 0.0
        %4543 = vmatpush1.msra.mxu0 0.0
        %4544 = vmatprep.subr.mxu0 0.0
        %4545 = vmatpush1.msra.mxu0 0.0
        %4546 = vmatprep.subr.mxu0 0.0
        %4547 = vmatpush1.msra.mxu0 0.0
        %4548 = vmatprep.mubr.f32.mxu0 0.0
        %4549 = vmatmul.mubr.f32.gmra.mrb[0].mxu0 %v4482
        %v4550 = vpop.f32.mrb[0].mxu0
        %v4551 = vadd.f32 0.0, %v4550
        %v4552 = vpop.f32.mrb[0].mxu0
        %v4553 = vadd.f32 0.0, %v4552
        %4554 = vdwg.mxu0
        %v4556 = vsel %vm2268, %v4279, 0
        %4558 = vmatprep.subr.mxu0 %v4430
        %4559 = vmatpush1.msra.mxu0 %v4429
        %4560 = vmatprep.subr.mxu0 %v4432
        %4561 = vmatpush1.msra.mxu0 %v4431
        %4562 = vmatprep.subr.mxu0 %v4434
        %4563 = vmatpush1.msra.mxu0 %v4433
        %4564 = vmatprep.subr.mxu0 %v4436
        %4565 = vmatpush1.msra.mxu0 %v4435
        %4566 = vmatprep.subr.mxu0 0.0
        %4567 = vmatpush1.msra.mxu0 0.0
        %4568 = vmatprep.subr.mxu0 0.0
        %4569 = vmatpush1.msra.mxu0 0.0
        %4570 = vmatprep.subr.mxu0 0.0
        %4571 = vmatpush1.msra.mxu0 0.0
        %4572 = vmatprep.subr.mxu0 0.0
        %4573 = vmatpush1.msra.mxu0 0.0
        %4574 = vmatprep.subr.mxu0 0.0
        %4575 = vmatpush1.msra.mxu0 0.0
        %4576 = vmatprep.subr.mxu0 0.0
        %4577 = vmatpush1.msra.mxu0 0.0
        %4578 = vmatprep.subr.mxu0 0.0
        %4579 = vmatpush1.msra.mxu0 0.0
        %4580 = vmatprep.subr.mxu0 0.0
        %4581 = vmatpush1.msra.mxu0 0.0
        %4582 = vmatprep.subr.mxu0 0.0
        %4583 = vmatpush1.msra.mxu0 0.0
        %4584 = vmatprep.subr.mxu0 0.0
        %4585 = vmatpush1.msra.mxu0 0.0
        %4586 = vmatprep.subr.mxu0 0.0
        %4587 = vmatpush1.msra.mxu0 0.0
        %4588 = vmatprep.subr.mxu0 0.0
        %4589 = vmatpush1.msra.mxu0 0.0
        %4590 = vmatprep.subr.mxu0 0.0
        %4591 = vmatpush1.msra.mxu0 0.0
        %4592 = vmatprep.subr.mxu0 0.0
        %4593 = vmatpush1.msra.mxu0 0.0
        %4594 = vmatprep.subr.mxu0 0.0
        %4595 = vmatpush1.msra.mxu0 0.0
        %4596 = vmatprep.subr.mxu0 0.0
        %4597 = vmatpush1.msra.mxu0 0.0
        %4598 = vmatprep.subr.mxu0 0.0
        %4599 = vmatpush1.msra.mxu0 0.0
        %4600 = vmatprep.subr.mxu0 0.0
        %4601 = vmatpush1.msra.mxu0 0.0
        %4602 = vmatprep.subr.mxu0 0.0
        %4603 = vmatpush1.msra.mxu0 0.0
        %4604 = vmatprep.subr.mxu0 0.0
        %4605 = vmatpush1.msra.mxu0 0.0
        %4606 = vmatprep.subr.mxu0 0.0
        %4607 = vmatpush1.msra.mxu0 0.0
        %4608 = vmatprep.subr.mxu0 0.0
        %4609 = vmatpush1.msra.mxu0 0.0
        %4610 = vmatprep.subr.mxu0 0.0
        %4611 = vmatpush1.msra.mxu0 0.0
        %4612 = vmatprep.subr.mxu0 0.0
        %4613 = vmatpush1.msra.mxu0 0.0
        %4614 = vmatprep.subr.mxu0 0.0
        %4615 = vmatpush1.msra.mxu0 0.0
        %4616 = vmatprep.subr.mxu0 0.0
        %4617 = vmatpush1.msra.mxu0 0.0
        %4618 = vmatprep.subr.mxu0 0.0
        %4619 = vmatpush1.msra.mxu0 0.0
        %4620 = vmatprep.subr.mxu0 0.0
        %4621 = vmatpush1.msra.mxu0 0.0
        %4622 = vmatprep.mubr.f32.mxu0 0.0
        %4623 = vmatmul.mubr.f32.gmra.mrb[0].mxu0 %v4556
        %v4624 = vpop.f32.mrb[0].mxu0
        %v4625 = vadd.f32 %v4551, %v4624
        %v4626 = vpop.f32.mrb[0].mxu0
        %v4627 = vadd.f32 %v4553, %v4626
        %4628 = vdwg.mxu0
        %v4630 = vsel %vm2268, %v4281, 0
        %4632 = vmatprep.subr.mxu0 %v4474
        %4633 = vmatpush1.msra.mxu0 %v4473
        %4634 = vmatprep.subr.mxu0 %v4476
        %4635 = vmatpush1.msra.mxu0 %v4475
        %4636 = vmatprep.subr.mxu0 %v4478
        %4637 = vmatpush1.msra.mxu0 %v4477
        %4638 = vmatprep.subr.mxu0 %v4480
        %4639 = vmatpush1.msra.mxu0 %v4479
        %4640 = vmatprep.subr.mxu0 0.0
        %4641 = vmatpush1.msra.mxu0 0.0
        %4642 = vmatprep.subr.mxu0 0.0
        %4643 = vmatpush1.msra.mxu0 0.0
        %4644 = vmatprep.subr.mxu0 0.0
        %4645 = vmatpush1.msra.mxu0 0.0
        %4646 = vmatprep.subr.mxu0 0.0
        %4647 = vmatpush1.msra.mxu0 0.0
        %4648 = vmatprep.subr.mxu0 0.0
        %4649 = vmatpush1.msra.mxu0 0.0
        %4650 = vmatprep.subr.mxu0 0.0
        %4651 = vmatpush1.msra.mxu0 0.0
        %4652 = vmatprep.subr.mxu0 0.0
        %4653 = vmatpush1.msra.mxu0 0.0
        %4654 = vmatprep.subr.mxu0 0.0
        %4655 = vmatpush1.msra.mxu0 0.0
        %4656 = vmatprep.subr.mxu0 0.0
        %4657 = vmatpush1.msra.mxu0 0.0
        %4658 = vmatprep.subr.mxu0 0.0
        %4659 = vmatpush1.msra.mxu0 0.0
        %4660 = vmatprep.subr.mxu0 0.0
        %4661 = vmatpush1.msra.mxu0 0.0
        %4662 = vmatprep.subr.mxu0 0.0
        %4663 = vmatpush1.msra.mxu0 0.0
        %4664 = vmatprep.subr.mxu0 0.0
        %4665 = vmatpush1.msra.mxu0 0.0
        %4666 = vmatprep.subr.mxu0 0.0
        %4667 = vmatpush1.msra.mxu0 0.0
        %4668 = vmatprep.subr.mxu0 0.0
        %4669 = vmatpush1.msra.mxu0 0.0
        %4670 = vmatprep.subr.mxu0 0.0
        %4671 = vmatpush1.msra.mxu0 0.0
        %4672 = vmatprep.subr.mxu0 0.0
        %4673 = vmatpush1.msra.mxu0 0.0
        %4674 = vmatprep.subr.mxu0 0.0
        %4675 = vmatpush1.msra.mxu0 0.0
        %4676 = vmatprep.subr.mxu0 0.0
        %4677 = vmatpush1.msra.mxu0 0.0
        %4678 = vmatprep.subr.mxu0 0.0
        %4679 = vmatpush1.msra.mxu0 0.0
        %4680 = vmatprep.subr.mxu0 0.0
        %4681 = vmatpush1.msra.mxu0 0.0
        %4682 = vmatprep.subr.mxu0 0.0
        %4683 = vmatpush1.msra.mxu0 0.0
        %4684 = vmatprep.subr.mxu0 0.0
        %4685 = vmatpush1.msra.mxu0 0.0
        %4686 = vmatprep.subr.mxu0 0.0
        %4687 = vmatpush1.msra.mxu0 0.0
        %4688 = vmatprep.subr.mxu0 0.0
        %4689 = vmatpush1.msra.mxu0 0.0
        %4690 = vmatprep.subr.mxu0 0.0
        %4691 = vmatpush1.msra.mxu0 0.0
        %4692 = vmatprep.subr.mxu0 0.0
        %4693 = vmatpush1.msra.mxu0 0.0
        %4694 = vmatprep.subr.mxu0 0.0
        %4695 = vmatpush1.msra.mxu0 0.0
        %4696 = vmatprep.mubr.f32.mxu0 0.0
        %4697 = vmatmul.mubr.f32.gmra.mrb[0].mxu0 %v4630
        %v4698 = vpop.f32.mrb[0].mxu0
        %v4699 = vadd.f32 0.0, %v4698
        %v4700 = vpop.f32.mrb[0].mxu0
        %v4701 = vadd.f32 0.0, %v4700
        %4702 = vdwg.mxu0
        %v4703 = vadd.f32 %v4625, %v4699
        %v4704 = vadd.f32 %v4627, %v4701
        %4705 = vrot.lane.b32.xlu0 %v4272, 1
        %v4706 = vpop.permute.xlu0 %4705
        %4707 = vrot.lane.b32.xlu0 %v4274, 1
        %v4708 = vpop.permute.xlu0 %4707
        %4709 = vrot.lane.b32.xlu0 %v4276, 1
        %v4710 = vpop.permute.xlu0 %4709
        %4711 = vrot.lane.b32.xlu0 %v4278, 1
        %v4712 = vpop.permute.xlu0 %4711
        %4717 = vrot.lane.b32.xlu0 %v4271, 1
        %v4718 = vpop.permute.xlu0 %4717
        %4719 = vrot.lane.b32.xlu0 %v4273, 1
        %v4720 = vpop.permute.xlu0 %4719
        %4721 = vrot.lane.b32.xlu0 %v4275, 1
        %v4722 = vpop.permute.xlu0 %4721
        %4723 = vrot.lane.b32.xlu0 %v4277, 1
        %v4724 = vpop.permute.xlu0 %4723
        %v4725 = vsel %vm977, %v4718, %v4706
        %v4726 = vsel %vm977, %v4720, %v4708
        %v4727 = vsel %vm977, %v4722, %v4710
        %v4728 = vsel %vm977, %v4724, %v4712
        %v4737 = vsel %vm977, %v4706, %v4718
        %v4738 = vsel %vm977, %v4708, %v4720
        %v4739 = vsel %vm977, %v4710, %v4722
        %v4740 = vsel %vm977, %v4712, %v4724
        %v4741 = vsel %vm991, %v4737, 0.0
        %v4742 = vsel %vm992, %v4725, 0.0
        %v4743 = vsel %vm991, %v4738, 0.0
        %v4744 = vsel %vm992, %v4726, 0.0
        %v4745 = vsel %vm991, %v4739, 0.0
        %v4746 = vsel %vm992, %v4727, 0.0
        %v4747 = vsel %vm991, %v4740, 0.0
        %v4748 = vsel %vm992, %v4728, 0.0
        %4749 = vrot.lane.b32.xlu0 %v4271, 127
        %v4750 = vpop.permute.xlu0 %4749
        %4751 = vrot.lane.b32.xlu0 %v4272, 127
        %v4752 = vpop.permute.xlu0 %4751
        %4753 = vrot.lane.b32.xlu0 %v4273, 127
        %v4754 = vpop.permute.xlu0 %4753
        %4755 = vrot.lane.b32.xlu0 %v4274, 127
        %v4756 = vpop.permute.xlu0 %4755
        %4757 = vrot.lane.b32.xlu0 %v4275, 127
        %v4758 = vpop.permute.xlu0 %4757
        %4759 = vrot.lane.b32.xlu0 %v4276, 127
        %v4760 = vpop.permute.xlu0 %4759
        %4761 = vrot.lane.b32.xlu0 %v4277, 127
        %v4762 = vpop.permute.xlu0 %4761
        %4763 = vrot.lane.b32.xlu0 %v4278, 127
        %v4764 = vpop.permute.xlu0 %4763
        %v4765 = vsel %vm999, %v4750, %v4752
        %v4766 = vsel %vm999, %v4754, %v4756
        %v4767 = vsel %vm999, %v4758, %v4760
        %v4768 = vsel %vm999, %v4762, %v4764
        %v4781 = vsel %vm999, %v4752, %v4750
        %v4782 = vsel %vm999, %v4756, %v4754
        %v4783 = vsel %vm999, %v4760, %v4758
        %v4784 = vsel %vm999, %v4764, %v4762
        %v4785 = vsel %vm1014, %v4765, 0.0
        %v4786 = vsel %vm1015, %v4781, 0.0
        %v4787 = vsel %vm1014, %v4766, 0.0
        %v4788 = vsel %vm1015, %v4782, 0.0
        %v4789 = vsel %vm1014, %v4767, 0.0
        %v4790 = vsel %vm1015, %v4783, 0.0
        %v4791 = vsel %vm1014, %v4768, 0.0
        %v4792 = vsel %vm1015, %v4784, 0.0
        %v4794 = vsel %vm2268, %v4282, 0
        %4796 = vmatprep.subr.mxu0 %v4742
        %4797 = vmatpush1.msra.mxu0 %v4741
        %4798 = vmatprep.subr.mxu0 %v4744
        %4799 = vmatpush1.msra.mxu0 %v4743
        %4800 = vmatprep.subr.mxu0 %v4746
        %4801 = vmatpush1.msra.mxu0 %v4745
        %4802 = vmatprep.subr.mxu0 %v4748
        %4803 = vmatpush1.msra.mxu0 %v4747
        %4804 = vmatprep.subr.mxu0 0.0
        %4805 = vmatpush1.msra.mxu0 0.0
        %4806 = vmatprep.subr.mxu0 0.0
        %4807 = vmatpush1.msra.mxu0 0.0
        %4808 = vmatprep.subr.mxu0 0.0
        %4809 = vmatpush1.msra.mxu0 0.0
        %4810 = vmatprep.subr.mxu0 0.0
        %4811 = vmatpush1.msra.mxu0 0.0
        %4812 = vmatprep.subr.mxu0 0.0
        %4813 = vmatpush1.msra.mxu0 0.0
        %4814 = vmatprep.subr.mxu0 0.0
        %4815 = vmatpush1.msra.mxu0 0.0
        %4816 = vmatprep.subr.mxu0 0.0
        %4817 = vmatpush1.msra.mxu0 0.0
        %4818 = vmatprep.subr.mxu0 0.0
        %4819 = vmatpush1.msra.mxu0 0.0
        %4820 = vmatprep.subr.mxu0 0.0
        %4821 = vmatpush1.msra.mxu0 0.0
        %4822 = vmatprep.subr.mxu0 0.0
        %4823 = vmatpush1.msra.mxu0 0.0
        %4824 = vmatprep.subr.mxu0 0.0
        %4825 = vmatpush1.msra.mxu0 0.0
        %4826 = vmatprep.subr.mxu0 0.0
        %4827 = vmatpush1.msra.mxu0 0.0
        %4828 = vmatprep.subr.mxu0 0.0
        %4829 = vmatpush1.msra.mxu0 0.0
        %4830 = vmatprep.subr.mxu0 0.0
        %4831 = vmatpush1.msra.mxu0 0.0
        %4832 = vmatprep.subr.mxu0 0.0
        %4833 = vmatpush1.msra.mxu0 0.0
        %4834 = vmatprep.subr.mxu0 0.0
        %4835 = vmatpush1.msra.mxu0 0.0
        %4836 = vmatprep.subr.mxu0 0.0
        %4837 = vmatpush1.msra.mxu0 0.0
        %4838 = vmatprep.subr.mxu0 0.0
        %4839 = vmatpush1.msra.mxu0 0.0
        %4840 = vmatprep.subr.mxu0 0.0
        %4841 = vmatpush1.msra.mxu0 0.0
        %4842 = vmatprep.subr.mxu0 0.0
        %4843 = vmatpush1.msra.mxu0 0.0
        %4844 = vmatprep.subr.mxu0 0.0
        %4845 = vmatpush1.msra.mxu0 0.0
        %4846 = vmatprep.subr.mxu0 0.0
        %4847 = vmatpush1.msra.mxu0 0.0
        %4848 = vmatprep.subr.mxu0 0.0
        %4849 = vmatpush1.msra.mxu0 0.0
        %4850 = vmatprep.subr.mxu0 0.0
        %4851 = vmatpush1.msra.mxu0 0.0
        %4852 = vmatprep.subr.mxu0 0.0
        %4853 = vmatpush1.msra.mxu0 0.0
        %4854 = vmatprep.subr.mxu0 0.0
        %4855 = vmatpush1.msra.mxu0 0.0
        %4856 = vmatprep.subr.mxu0 0.0
        %4857 = vmatpush1.msra.mxu0 0.0
        %4858 = vmatprep.subr.mxu0 0.0
        %4859 = vmatpush1.msra.mxu0 0.0
        %4860 = vmatprep.mubr.f32.mxu0 0.0
        %4861 = vmatmul.mubr.f32.gmra.mrb[0].mxu0 %v4794
        %v4862 = vpop.f32.mrb[0].mxu0
        %v4863 = vadd.f32 0.0, %v4862
        %v4864 = vpop.f32.mrb[0].mxu0
        %v4865 = vadd.f32 0.0, %v4864
        %4866 = vdwg.mxu0
        %v4867 = vadd.f32 %v4703, %v4863
        %v4868 = vadd.f32 %v4704, %v4865
        %v4870 = vsel %vm2268, %v4283, 0
        %4872 = vmatprep.subr.mxu0 %v4272
        %4873 = vmatpush1.msra.mxu0 %v4271
        %4874 = vmatprep.subr.mxu0 %v4274
        %4875 = vmatpush1.msra.mxu0 %v4273
        %4876 = vmatprep.subr.mxu0 %v4276
        %4877 = vmatpush1.msra.mxu0 %v4275
        %4878 = vmatprep.subr.mxu0 %v4278
        %4879 = vmatpush1.msra.mxu0 %v4277
        %4880 = vmatprep.subr.mxu0 0.0
        %4881 = vmatpush1.msra.mxu0 0.0
        %4882 = vmatprep.subr.mxu0 0.0
        %4883 = vmatpush1.msra.mxu0 0.0
        %4884 = vmatprep.subr.mxu0 0.0
        %4885 = vmatpush1.msra.mxu0 0.0
        %4886 = vmatprep.subr.mxu0 0.0
        %4887 = vmatpush1.msra.mxu0 0.0
        %4888 = vmatprep.subr.mxu0 0.0
        %4889 = vmatpush1.msra.mxu0 0.0
        %4890 = vmatprep.subr.mxu0 0.0
        %4891 = vmatpush1.msra.mxu0 0.0
        %4892 = vmatprep.subr.mxu0 0.0
        %4893 = vmatpush1.msra.mxu0 0.0
        %4894 = vmatprep.subr.mxu0 0.0
        %4895 = vmatpush1.msra.mxu0 0.0
        %4896 = vmatprep.subr.mxu0 0.0
        %4897 = vmatpush1.msra.mxu0 0.0
        %4898 = vmatprep.subr.mxu0 0.0
        %4899 = vmatpush1.msra.mxu0 0.0
        %4900 = vmatprep.subr.mxu0 0.0
        %4901 = vmatpush1.msra.mxu0 0.0
        %4902 = vmatprep.subr.mxu0 0.0
        %4903 = vmatpush1.msra.mxu0 0.0
        %4904 = vmatprep.subr.mxu0 0.0
        %4905 = vmatpush1.msra.mxu0 0.0
        %4906 = vmatprep.subr.mxu0 0.0
        %4907 = vmatpush1.msra.mxu0 0.0
        %4908 = vmatprep.subr.mxu0 0.0
        %4909 = vmatpush1.msra.mxu0 0.0
        %4910 = vmatprep.subr.mxu0 0.0
        %4911 = vmatpush1.msra.mxu0 0.0
        %4912 = vmatprep.subr.mxu0 0.0
        %4913 = vmatpush1.msra.mxu0 0.0
        %4914 = vmatprep.subr.mxu0 0.0
        %4915 = vmatpush1.msra.mxu0 0.0
        %4916 = vmatprep.subr.mxu0 0.0
        %4917 = vmatpush1.msra.mxu0 0.0
        %4918 = vmatprep.subr.mxu0 0.0
        %4919 = vmatpush1.msra.mxu0 0.0
        %4920 = vmatprep.subr.mxu0 0.0
        %4921 = vmatpush1.msra.mxu0 0.0
        %4922 = vmatprep.subr.mxu0 0.0
        %4923 = vmatpush1.msra.mxu0 0.0
        %4924 = vmatprep.subr.mxu0 0.0
        %4925 = vmatpush1.msra.mxu0 0.0
        %4926 = vmatprep.subr.mxu0 0.0
        %4927 = vmatpush1.msra.mxu0 0.0
        %4928 = vmatprep.subr.mxu0 0.0
        %4929 = vmatpush1.msra.mxu0 0.0
        %4930 = vmatprep.subr.mxu0 0.0
        %4931 = vmatpush1.msra.mxu0 0.0
        %4932 = vmatprep.subr.mxu0 0.0
        %4933 = vmatpush1.msra.mxu0 0.0
        %4934 = vmatprep.subr.mxu0 0.0
        %4935 = vmatpush1.msra.mxu0 0.0
        %4936 = vmatprep.mubr.f32.mxu0 0.0
        %4937 = vmatmul.mubr.f32.gmra.mrb[0].mxu0 %v4870
        %v4938 = vpop.f32.mrb[0].mxu0
        %v4939 = vadd.f32 0.0, %v4938
        %v4940 = vpop.f32.mrb[0].mxu0
        %v4941 = vadd.f32 0.0, %v4940
        %4942 = vdwg.mxu0
        %v4943 = vadd.f32 %v4867, %v4939
        %v4944 = vadd.f32 %v4868, %v4941
        %v4946 = vsel %vm2268, %v4284, 0
        %4948 = vmatprep.subr.mxu0 %v4786
        %4949 = vmatpush1.msra.mxu0 %v4785
        %4950 = vmatprep.subr.mxu0 %v4788
        %4951 = vmatpush1.msra.mxu0 %v4787
        %4952 = vmatprep.subr.mxu0 %v4790
        %4953 = vmatpush1.msra.mxu0 %v4789
        %4954 = vmatprep.subr.mxu0 %v4792
        %4955 = vmatpush1.msra.mxu0 %v4791
        %4956 = vmatprep.subr.mxu0 0.0
        %4957 = vmatpush1.msra.mxu0 0.0
        %4958 = vmatprep.subr.mxu0 0.0
        %4959 = vmatpush1.msra.mxu0 0.0
        %4960 = vmatprep.subr.mxu0 0.0
        %4961 = vmatpush1.msra.mxu0 0.0
        %4962 = vmatprep.subr.mxu0 0.0
        %4963 = vmatpush1.msra.mxu0 0.0
        %4964 = vmatprep.subr.mxu0 0.0
        %4965 = vmatpush1.msra.mxu0 0.0
        %4966 = vmatprep.subr.mxu0 0.0
        %4967 = vmatpush1.msra.mxu0 0.0
        %4968 = vmatprep.subr.mxu0 0.0
        %4969 = vmatpush1.msra.mxu0 0.0
        %4970 = vmatprep.subr.mxu0 0.0
        %4971 = vmatpush1.msra.mxu0 0.0
        %4972 = vmatprep.subr.mxu0 0.0
        %4973 = vmatpush1.msra.mxu0 0.0
        %4974 = vmatprep.subr.mxu0 0.0
        %4975 = vmatpush1.msra.mxu0 0.0
        %4976 = vmatprep.subr.mxu0 0.0
        %4977 = vmatpush1.msra.mxu0 0.0
        %4978 = vmatprep.subr.mxu0 0.0
        %4979 = vmatpush1.msra.mxu0 0.0
        %4980 = vmatprep.subr.mxu0 0.0
        %4981 = vmatpush1.msra.mxu0 0.0
        %4982 = vmatprep.subr.mxu0 0.0
        %4983 = vmatpush1.msra.mxu0 0.0
        %4984 = vmatprep.subr.mxu0 0.0
        %4985 = vmatpush1.msra.mxu0 0.0
        %4986 = vmatprep.subr.mxu0 0.0
        %4987 = vmatpush1.msra.mxu0 0.0
        %4988 = vmatprep.subr.mxu0 0.0
        %4989 = vmatpush1.msra.mxu0 0.0
        %4990 = vmatprep.subr.mxu0 0.0
        %4991 = vmatpush1.msra.mxu0 0.0
        %4992 = vmatprep.subr.mxu0 0.0
        %4993 = vmatpush1.msra.mxu0 0.0
        %4994 = vmatprep.subr.mxu0 0.0
        %4995 = vmatpush1.msra.mxu0 0.0
        %4996 = vmatprep.subr.mxu0 0.0
        %4997 = vmatpush1.msra.mxu0 0.0
        %4998 = vmatprep.subr.mxu0 0.0
        %4999 = vmatpush1.msra.mxu0 0.0
        %5000 = vmatprep.subr.mxu0 0.0
        %5001 = vmatpush1.msra.mxu0 0.0
        %5002 = vmatprep.subr.mxu0 0.0
        %5003 = vmatpush1.msra.mxu0 0.0
        %5004 = vmatprep.subr.mxu0 0.0
        %5005 = vmatpush1.msra.mxu0 0.0
        %5006 = vmatprep.subr.mxu0 0.0
        %5007 = vmatpush1.msra.mxu0 0.0
        %5008 = vmatprep.subr.mxu0 0.0
        %5009 = vmatpush1.msra.mxu0 0.0
        %5010 = vmatprep.subr.mxu0 0.0
        %5011 = vmatpush1.msra.mxu0 0.0
        %5012 = vmatprep.mubr.f32.mxu0 0.0
        %5013 = vmatmul.mubr.f32.gmra.mrb[0].mxu0 %v4946
        %v5014 = vpop.f32.mrb[0].mxu0
        %v5015 = vadd.f32 0.0, %v5014
        %v5016 = vpop.f32.mrb[0].mxu0
        %v5017 = vadd.f32 0.0, %v5016
        %5018 = vdwg.mxu0
        %v5019 = vadd.f32 %v4943, %v5015
        %v5020 = vadd.f32 %v4944, %v5017
        %5025 = vrot.lane.b32.xlu0 %v4378, 1
        %v5026 = vpop.permute.xlu0 %5025
        %5027 = vrot.lane.b32.xlu0 %v4380, 1
        %v5028 = vpop.permute.xlu0 %5027
        %5029 = vrot.lane.b32.xlu0 %v4382, 1
        %v5030 = vpop.permute.xlu0 %5029
        %5031 = vrot.lane.b32.xlu0 %v4384, 1
        %v5032 = vpop.permute.xlu0 %5031
        %5041 = vrot.lane.b32.xlu0 %v4377, 1
        %v5042 = vpop.permute.xlu0 %5041
        %5043 = vrot.lane.b32.xlu0 %v4379, 1
        %v5044 = vpop.permute.xlu0 %5043
        %5045 = vrot.lane.b32.xlu0 %v4381, 1
        %v5046 = vpop.permute.xlu0 %5045
        %5047 = vrot.lane.b32.xlu0 %v4383, 1
        %v5048 = vpop.permute.xlu0 %5047
        %v5049 = vsel %vm977, %v5042, %v5026
        %v5050 = vsel %vm977, %v5044, %v5028
        %v5051 = vsel %vm977, %v5046, %v5030
        %v5052 = vsel %vm977, %v5048, %v5032
        %v5061 = vsel %vm977, %v5026, %v5042
        %v5062 = vsel %vm977, %v5028, %v5044
        %v5063 = vsel %vm977, %v5030, %v5046
        %v5064 = vsel %vm977, %v5032, %v5048
        %v5065 = vsel %vm991, %v5061, 0.0
        %v5066 = vsel %vm992, %v5049, 0.0
        %v5067 = vsel %vm991, %v5062, 0.0
        %v5068 = vsel %vm992, %v5050, 0.0
        %v5069 = vsel %vm991, %v5063, 0.0
        %v5070 = vsel %vm992, %v5051, 0.0
        %v5071 = vsel %vm991, %v5064, 0.0
        %v5072 = vsel %vm992, %v5052, 0.0
        %5073 = vrot.lane.b32.xlu0 %v4377, 127
        %v5074 = vpop.permute.xlu0 %5073
        %5075 = vrot.lane.b32.xlu0 %v4378, 127
        %v5076 = vpop.permute.xlu0 %5075
        %5077 = vrot.lane.b32.xlu0 %v4379, 127
        %v5078 = vpop.permute.xlu0 %5077
        %5079 = vrot.lane.b32.xlu0 %v4380, 127
        %v5080 = vpop.permute.xlu0 %5079
        %5081 = vrot.lane.b32.xlu0 %v4381, 127
        %v5082 = vpop.permute.xlu0 %5081
        %5083 = vrot.lane.b32.xlu0 %v4382, 127
        %v5084 = vpop.permute.xlu0 %5083
        %5085 = vrot.lane.b32.xlu0 %v4383, 127
        %v5086 = vpop.permute.xlu0 %5085
        %5087 = vrot.lane.b32.xlu0 %v4384, 127
        %v5088 = vpop.permute.xlu0 %5087
        %v5089 = vsel %vm999, %v5074, %v5076
        %v5090 = vsel %vm999, %v5078, %v5080
        %v5091 = vsel %vm999, %v5082, %v5084
        %v5092 = vsel %vm999, %v5086, %v5088
        %v5105 = vsel %vm999, %v5076, %v5074
        %v5106 = vsel %vm999, %v5080, %v5078
        %v5107 = vsel %vm999, %v5084, %v5082
        %v5108 = vsel %vm999, %v5088, %v5086
        %v5109 = vsel %vm1014, %v5089, 0.0
        %v5110 = vsel %vm1015, %v5105, 0.0
        %v5111 = vsel %vm1014, %v5090, 0.0
        %v5112 = vsel %vm1015, %v5106, 0.0
        %v5113 = vsel %vm1014, %v5091, 0.0
        %v5114 = vsel %vm1015, %v5107, 0.0
        %v5115 = vsel %vm1014, %v5092, 0.0
        %v5116 = vsel %vm1015, %v5108, 0.0
        %v5118 = vsel %vm2268, %v4285, 0
        %5120 = vmatprep.subr.mxu0 %v5066
        %5121 = vmatpush1.msra.mxu0 %v5065
        %5122 = vmatprep.subr.mxu0 %v5068
        %5123 = vmatpush1.msra.mxu0 %v5067
        %5124 = vmatprep.subr.mxu0 %v5070
        %5125 = vmatpush1.msra.mxu0 %v5069
        %5126 = vmatprep.subr.mxu0 %v5072
        %5127 = vmatpush1.msra.mxu0 %v5071
        %5128 = vmatprep.subr.mxu0 0.0
        %5129 = vmatpush1.msra.mxu0 0.0
        %5130 = vmatprep.subr.mxu0 0.0
        %5131 = vmatpush1.msra.mxu0 0.0
        %5132 = vmatprep.subr.mxu0 0.0
        %5133 = vmatpush1.msra.mxu0 0.0
        %5134 = vmatprep.subr.mxu0 0.0
        %5135 = vmatpush1.msra.mxu0 0.0
        %5136 = vmatprep.subr.mxu0 0.0
        %5137 = vmatpush1.msra.mxu0 0.0
        %5138 = vmatprep.subr.mxu0 0.0
        %5139 = vmatpush1.msra.mxu0 0.0
        %5140 = vmatprep.subr.mxu0 0.0
        %5141 = vmatpush1.msra.mxu0 0.0
        %5142 = vmatprep.subr.mxu0 0.0
        %5143 = vmatpush1.msra.mxu0 0.0
        %5144 = vmatprep.subr.mxu0 0.0
        %5145 = vmatpush1.msra.mxu0 0.0
        %5146 = vmatprep.subr.mxu0 0.0
        %5147 = vmatpush1.msra.mxu0 0.0
        %5148 = vmatprep.subr.mxu0 0.0
        %5149 = vmatpush1.msra.mxu0 0.0
        %5150 = vmatprep.subr.mxu0 0.0
        %5151 = vmatpush1.msra.mxu0 0.0
        %5152 = vmatprep.subr.mxu0 0.0
        %5153 = vmatpush1.msra.mxu0 0.0
        %5154 = vmatprep.subr.mxu0 0.0
        %5155 = vmatpush1.msra.mxu0 0.0
        %5156 = vmatprep.subr.mxu0 0.0
        %5157 = vmatpush1.msra.mxu0 0.0
        %5158 = vmatprep.subr.mxu0 0.0
        %5159 = vmatpush1.msra.mxu0 0.0
        %5160 = vmatprep.subr.mxu0 0.0
        %5161 = vmatpush1.msra.mxu0 0.0
        %5162 = vmatprep.subr.mxu0 0.0
        %5163 = vmatpush1.msra.mxu0 0.0
        %5164 = vmatprep.subr.mxu0 0.0
        %5165 = vmatpush1.msra.mxu0 0.0
        %5166 = vmatprep.subr.mxu0 0.0
        %5167 = vmatpush1.msra.mxu0 0.0
        %5168 = vmatprep.subr.mxu0 0.0
        %5169 = vmatpush1.msra.mxu0 0.0
        %5170 = vmatprep.subr.mxu0 0.0
        %5171 = vmatpush1.msra.mxu0 0.0
        %5172 = vmatprep.subr.mxu0 0.0
        %5173 = vmatpush1.msra.mxu0 0.0
        %5174 = vmatprep.subr.mxu0 0.0
        %5175 = vmatpush1.msra.mxu0 0.0
        %5176 = vmatprep.subr.mxu0 0.0
        %5177 = vmatpush1.msra.mxu0 0.0
        %5178 = vmatprep.subr.mxu0 0.0
        %5179 = vmatpush1.msra.mxu0 0.0
        %5180 = vmatprep.subr.mxu0 0.0
        %5181 = vmatpush1.msra.mxu0 0.0
        %5182 = vmatprep.subr.mxu0 0.0
        %5183 = vmatpush1.msra.mxu0 0.0
        %5184 = vmatprep.mubr.f32.mxu0 0.0
        %5185 = vmatmul.mubr.f32.gmra.mrb[0].mxu0 %v5118
        %v5186 = vpop.f32.mrb[0].mxu0
        %v5187 = vadd.f32 0.0, %v5186
        %v5188 = vpop.f32.mrb[0].mxu0
        %v5189 = vadd.f32 0.0, %v5188
        %5190 = vdwg.mxu0
        %v5191 = vadd.f32 %v5019, %v5187
        %v5192 = vadd.f32 %v5020, %v5189
        %v5194 = vsel %vm2268, %v4286, 0
        %5196 = vmatprep.subr.mxu0 %v4378
        %5197 = vmatpush1.msra.mxu0 %v4377
        %5198 = vmatprep.subr.mxu0 %v4380
        %5199 = vmatpush1.msra.mxu0 %v4379
        %5200 = vmatprep.subr.mxu0 %v4382
        %5201 = vmatpush1.msra.mxu0 %v4381
        %5202 = vmatprep.subr.mxu0 %v4384
        %5203 = vmatpush1.msra.mxu0 %v4383
        %5204 = vmatprep.subr.mxu0 0.0
        %5205 = vmatpush1.msra.mxu0 0.0
        %5206 = vmatprep.subr.mxu0 0.0
        %5207 = vmatpush1.msra.mxu0 0.0
        %5208 = vmatprep.subr.mxu0 0.0
        %5209 = vmatpush1.msra.mxu0 0.0
        %5210 = vmatprep.subr.mxu0 0.0
        %5211 = vmatpush1.msra.mxu0 0.0
        %5212 = vmatprep.subr.mxu0 0.0
        %5213 = vmatpush1.msra.mxu0 0.0
        %5214 = vmatprep.subr.mxu0 0.0
        %5215 = vmatpush1.msra.mxu0 0.0
        %5216 = vmatprep.subr.mxu0 0.0
        %5217 = vmatpush1.msra.mxu0 0.0
        %5218 = vmatprep.subr.mxu0 0.0
        %5219 = vmatpush1.msra.mxu0 0.0
        %5220 = vmatprep.subr.mxu0 0.0
        %5221 = vmatpush1.msra.mxu0 0.0
        %5222 = vmatprep.subr.mxu0 0.0
        %5223 = vmatpush1.msra.mxu0 0.0
        %5224 = vmatprep.subr.mxu0 0.0
        %5225 = vmatpush1.msra.mxu0 0.0
        %5226 = vmatprep.subr.mxu0 0.0
        %5227 = vmatpush1.msra.mxu0 0.0
        %5228 = vmatprep.subr.mxu0 0.0
        %5229 = vmatpush1.msra.mxu0 0.0
        %5230 = vmatprep.subr.mxu0 0.0
        %5231 = vmatpush1.msra.mxu0 0.0
        %5232 = vmatprep.subr.mxu0 0.0
        %5233 = vmatpush1.msra.mxu0 0.0
        %5234 = vmatprep.subr.mxu0 0.0
        %5235 = vmatpush1.msra.mxu0 0.0
        %5236 = vmatprep.subr.mxu0 0.0
        %5237 = vmatpush1.msra.mxu0 0.0
        %5238 = vmatprep.subr.mxu0 0.0
        %5239 = vmatpush1.msra.mxu0 0.0
        %5240 = vmatprep.subr.mxu0 0.0
        %5241 = vmatpush1.msra.mxu0 0.0
        %5242 = vmatprep.subr.mxu0 0.0
        %5243 = vmatpush1.msra.mxu0 0.0
        %5244 = vmatprep.subr.mxu0 0.0
        %5245 = vmatpush1.msra.mxu0 0.0
        %5246 = vmatprep.subr.mxu0 0.0
        %5247 = vmatpush1.msra.mxu0 0.0
        %5248 = vmatprep.subr.mxu0 0.0
        %5249 = vmatpush1.msra.mxu0 0.0
        %5250 = vmatprep.subr.mxu0 0.0
        %5251 = vmatpush1.msra.mxu0 0.0
        %5252 = vmatprep.subr.mxu0 0.0
        %5253 = vmatpush1.msra.mxu0 0.0
        %5254 = vmatprep.subr.mxu0 0.0
        %5255 = vmatpush1.msra.mxu0 0.0
        %5256 = vmatprep.subr.mxu0 0.0
        %5257 = vmatpush1.msra.mxu0 0.0
        %5258 = vmatprep.subr.mxu0 0.0
        %5259 = vmatpush1.msra.mxu0 0.0
        %5260 = vmatprep.mubr.f32.mxu0 0.0
        %5261 = vmatmul.mubr.f32.gmra.mrb[0].mxu0 %v5194
        %v5262 = vpop.f32.mrb[0].mxu0
        %v5263 = vadd.f32 0.0, %v5262
        %v5264 = vpop.f32.mrb[0].mxu0
        %v5265 = vadd.f32 0.0, %v5264
        %5266 = vdwg.mxu0
        %v5267 = vadd.f32 %v5191, %v5263
        %v5268 = vadd.f32 %v5192, %v5265
        %v5270 = vsel %vm2268, %v4287, 0
        %5272 = vmatprep.subr.mxu0 %v5110
        %5273 = vmatpush1.msra.mxu0 %v5109
        %5274 = vmatprep.subr.mxu0 %v5112
        %5275 = vmatpush1.msra.mxu0 %v5111
        %5276 = vmatprep.subr.mxu0 %v5114
        %5277 = vmatpush1.msra.mxu0 %v5113
        %5278 = vmatprep.subr.mxu0 %v5116
        %5279 = vmatpush1.msra.mxu0 %v5115
        %5280 = vmatprep.subr.mxu0 0.0
        %5281 = vmatpush1.msra.mxu0 0.0
        %5282 = vmatprep.subr.mxu0 0.0
        %5283 = vmatpush1.msra.mxu0 0.0
        %5284 = vmatprep.subr.mxu0 0.0
        %5285 = vmatpush1.msra.mxu0 0.0
        %5286 = vmatprep.subr.mxu0 0.0
        %5287 = vmatpush1.msra.mxu0 0.0
        %5288 = vmatprep.subr.mxu0 0.0
        %5289 = vmatpush1.msra.mxu0 0.0
        %5290 = vmatprep.subr.mxu0 0.0
        %5291 = vmatpush1.msra.mxu0 0.0
        %5292 = vmatprep.subr.mxu0 0.0
        %5293 = vmatpush1.msra.mxu0 0.0
        %5294 = vmatprep.subr.mxu0 0.0
        %5295 = vmatpush1.msra.mxu0 0.0
        %5296 = vmatprep.subr.mxu0 0.0
        %5297 = vmatpush1.msra.mxu0 0.0
        %5298 = vmatprep.subr.mxu0 0.0
        %5299 = vmatpush1.msra.mxu0 0.0
        %5300 = vmatprep.subr.mxu0 0.0
        %5301 = vmatpush1.msra.mxu0 0.0
        %5302 = vmatprep.subr.mxu0 0.0
        %5303 = vmatpush1.msra.mxu0 0.0
        %5304 = vmatprep.subr.mxu0 0.0
        %5305 = vmatpush1.msra.mxu0 0.0
        %5306 = vmatprep.subr.mxu0 0.0
        %5307 = vmatpush1.msra.mxu0 0.0
        %5308 = vmatprep.subr.mxu0 0.0
        %5309 = vmatpush1.msra.mxu0 0.0
        %5310 = vmatprep.subr.mxu0 0.0
        %5311 = vmatpush1.msra.mxu0 0.0
        %5312 = vmatprep.subr.mxu0 0.0
        %5313 = vmatpush1.msra.mxu0 0.0
        %5314 = vmatprep.subr.mxu0 0.0
        %5315 = vmatpush1.msra.mxu0 0.0
        %5316 = vmatprep.subr.mxu0 0.0
        %5317 = vmatpush1.msra.mxu0 0.0
        %5318 = vmatprep.subr.mxu0 0.0
        %5319 = vmatpush1.msra.mxu0 0.0
        %5320 = vmatprep.subr.mxu0 0.0
        %5321 = vmatpush1.msra.mxu0 0.0
        %5322 = vmatprep.subr.mxu0 0.0
        %5323 = vmatpush1.msra.mxu0 0.0
        %5324 = vmatprep.subr.mxu0 0.0
        %5325 = vmatpush1.msra.mxu0 0.0
        %5326 = vmatprep.subr.mxu0 0.0
        %5327 = vmatpush1.msra.mxu0 0.0
        %5328 = vmatprep.subr.mxu0 0.0
        %5329 = vmatpush1.msra.mxu0 0.0
        %5330 = vmatprep.subr.mxu0 0.0
        %5331 = vmatpush1.msra.mxu0 0.0
        %5332 = vmatprep.subr.mxu0 0.0
        %5333 = vmatpush1.msra.mxu0 0.0
        %5334 = vmatprep.subr.mxu0 0.0
        %5335 = vmatpush1.msra.mxu0 0.0
        %5336 = vmatprep.mubr.f32.mxu0 0.0
        %5337 = vmatmul.mubr.f32.gmra.mrb[0].mxu0 %v5270
        %v5338 = vpop.f32.mrb[0].mxu0
        %v5339 = vadd.f32 0.0, %v5338
        %v5340 = vpop.f32.mrb[0].mxu0
        %v5341 = vadd.f32 0.0, %v5340
        %5342 = vdwg.mxu0
        %v5343 = vadd.f32 %v5267, %v5339
        %v5344 = vadd.f32 %v5268, %v5341
        %5346 = vset.pattern.permute.xlu0 0
        %5347 = vperm.xlu0 %5346, %v4288
        %v5348 = vpop.permute.xlu0 %5347
        %v5350 = vadd.f32 %v5343, %v5348
        %v5351 = vadd.f32 %v5344, %v5348
        %v5354 = vcombine.low %v5350, %v5351
        %5356 = vst [vmem:[%s499] sm:$0xff] %v5354
      $region76: #{wdsr_forward.1} parent=67 // pred_fallthru
        _
      %p5357 = scmp.lt.s32.totalorder %s27, 1
      %s5358 = scalar_select %p5357, %s27, 1
      %s5359 = smul.addr %s5358, 2
      %s5360 = smul.addr %s5359, 4
      %s5361 = scalar_lea.vmem %s12, %s5360
      // Predicated region
      $region77: #{wdsr_forward.1} parent=67 // pred_check
        %p5362 = pneg %p330
      $region78: #{wdsr_forward.1} parent=67 // pred_check_branch
        %5364 = sbr.rel (%p5362) target = $region80
      $region79: #{wdsr_forward.1} parent=67 // pred_region
        _
      $region80: #{wdsr_forward.1} parent=67 // pred_fallthru
        _
    $region68: #{wdsr_forward.1} parent=5 // pred_fallthru
      _
    %p5365 = scmp.le.s32.totalorder 2, %s18
    // Predicated region
    $region81: #{wdsr_forward.1} parent=5 // pred_check
      %p5366 = pneg %p5365
    $region82: #{wdsr_forward.1} parent=5 // pred_check_branch
      %5368 = sbr.rel (%p5366) target = $region84
    $region83: #{wdsr_forward.1} parent=5 // pred_region
      %s5369 = ssub.s32 %s18, 2
      // Predicated region
      $region85: #{wdsr_forward.1} parent=83 // pred_check
        %p5370 = pneg %p336
      $region86: #{wdsr_forward.1} parent=83 // pred_check_branch
        %5372 = sbr.rel (%p5370) target = $region88
      $region87: #{wdsr_forward.1} parent=83 // pred_region
        %p5373 = scmp.lt.s32.totalorder %s29, 1
        %s5374 = scalar_select %p5373, %s29, 1
        %s5375 = smul.addr %s5374, 2
        %s5376 = smul.addr %s5375, 4
        %s5377 = scalar_lea.vmem %s12, %s5376
      $region88: #{wdsr_forward.1} parent=83 // pred_fallthru
        _
    $region84: #{wdsr_forward.1} parent=5 // pred_fallthru
      _
  $region6: #{wdsr_forward.1} parent=0 // loop_footer
    %s22 = sadd.s32 1, %s18
  $region7: #{wdsr_forward.1} parent=0 // loop_footer_branch
    %17 = sbr.rel target = $region3
  $region8: #{wdsr_forward.1} parent=0 // loop_exit
    _

</llo_original>
